<compile_context>
chip_gen: v7x
topology: tpu7x:2x2x1
jax: 0.10.0
libtpu: 0.0.40
codegen_flags: <defaults>
</compile_context>

<pallas_src>
import functools

import jax
import jax.numpy as jnp
import numpy as np
from jax.experimental import pallas as pl
from jax.experimental.pallas import tpu as pltpu


def _round_up(x, m):
    return ((x + m - 1) // m) * m


def _vmem_spec():
    return pl.BlockSpec(memory_space=pltpu.MemorySpace.VMEM)


# ---------------------------------------------------------------------------
# Fused kernel: embedding -> biLSTM -> classifier -> cross-entropy
# ---------------------------------------------------------------------------
def _make_fused_kernel(B, T, H, C):
    """Kernel body closed over the static sizes.

    Ref shapes (all whole-array VMEM, no grid):
      ids_ref:    (N, 1)    int32, time-major rows (row = t*B + b)
      labels_ref: (N, 1)    int32, same row order
      emb_ref:    (Vp, Ep)  bf16 embedding table (zero-padded, pad row = 0)
      wih_ref:    (Ep, 8H)  bf16 [W_ih_f^T | W_ih_b^T]
      whh_ref:    (2H, 8H)  bf16 block-diag [[W_hh_f^T, 0], [0, W_hh_b^T]]
      b_ref:      (1, 8H)   f32  [b_f | b_b]  (b_ih + b_hh per direction)
      wc_ref:     (2H, Cp)  bf16 classifier weight^T (zero-padded columns)
      bc_ref:     (1, Cp)   f32  classifier bias (zero-padded)
      logits_ref: (N, Cp)   f32  lane-dense logits slab out
      loss_ref:   (1, 1)    f32  mean CE loss out (ignore_index = -100)
    """
    N = B * T
    G = 4 * H  # per-direction gate width

    def kernel(ids_ref, labels_ref, emb_ref, wih_ref, whh_ref, b_ref,
               wc_ref, bc_ref, logits_ref, loss_ref):
        Vp = emb_ref.shape[0]

        # ---- embedding lookup as a one-hot matmul (table is VMEM-resident).
        ids = ids_ref[...]                                          # (N, 1)
        vcol = jax.lax.broadcasted_iota(jnp.int32, (N, Vp), 1)
        onehot = (vcol == ids).astype(jnp.bfloat16)                 # (N, Vp)
        x = jnp.dot(onehot, emb_ref[...],
                    preferred_element_type=jnp.float32)             # (N, Ep)

        # ---- hoisted input projections for BOTH directions, one wide matmul.
        gx = (jnp.dot(x.astype(jnp.bfloat16), wih_ref[...],
                      preferred_element_type=jnp.float32)
              + b_ref[...])                                         # (N, 8H)

        whh = whh_ref[...]                                          # (2H, 8H)

        # Recurrent state: lane-concatenated [h_f | h_b] for the single
        # block-diagonal matmul; cell state stacked along sublanes [c_f; c_b].
        h_cat = jnp.zeros((B, 2 * H), jnp.float32)
        c_st = jnp.zeros((2 * B, H), jnp.float32)
        h_f_seq = [None] * T
        h_b_seq = [None] * T

        # T is small and static: fully unrolled, fwd / bwd interleaved.
        for t in range(T):
            tb = T - 1 - t
            # one MXU matmul per step for both directions' recurrent term
            gmm = jnp.dot(h_cat.astype(jnp.bfloat16), whh,
                          preferred_element_type=jnp.float32)       # (B, 8H)
            g_f = gx[t * B:(t + 1) * B, 0:G] + gmm[:, 0:G]          # (B, 4H)
            g_b = gx[tb * B:(tb + 1) * B, G:2 * G] + gmm[:, G:2 * G]
            # stack the two directions along sublanes -> nonlinearities once
            g_st = jnp.concatenate([g_f, g_b], axis=0)              # (2B, 4H)
            i_g = jax.nn.sigmoid(g_st[:, 0 * H:1 * H])              # PyTorch
            f_g = jax.nn.sigmoid(g_st[:, 1 * H:2 * H])              # gate order
            g_g = jnp.tanh(g_st[:, 2 * H:3 * H])                    # i, f, g, o
            o_g = jax.nn.sigmoid(g_st[:, 3 * H:4 * H])
            c_st = f_g * c_st + i_g * g_g
            h_st = o_g * jnp.tanh(c_st)                             # (2B, H)
            h_f = h_st[0:B, :]
            h_b = h_st[B:2 * B, :]
            h_f_seq[t] = h_f        # forward hidden at time t
            h_b_seq[tb] = h_b       # backward hidden at time tb
            h_cat = jnp.concatenate([h_f, h_b], axis=-1)            # (B, 2H)

        # ---- assemble time-major (N, 2H) hidden states in vregs (written
        # once; no per-step masked stores) and feed the classifier directly.
        lstm_flat = jnp.concatenate(
            [jnp.concatenate([h_f_seq[t], h_b_seq[t]], axis=-1)
             for t in range(T)], axis=0)                            # (N, 2H)

        logits = (jnp.dot(lstm_flat.astype(jnp.bfloat16), wc_ref[...],
                          preferred_element_type=jnp.float32)
                  + bc_ref[...])                                    # (N, Cp)
        logits_ref[...] = logits                                    # lane-dense

        # ---- mean cross-entropy, ignore_index = -100; padded classifier
        # columns are masked out of the log-sum-exp.
        Cp = logits.shape[1]
        col = jax.lax.broadcasted_iota(jnp.int32, (N, Cp), 1)
        lmask = jnp.where(col < C, logits, jnp.float32(-1e30))
        m = jnp.max(lmask, axis=-1, keepdims=True)
        lse = m + jnp.log(jnp.sum(jnp.exp(lmask - m), axis=-1, keepdims=True))
        labels = labels_ref[...]                                    # (N, 1)
        onehot_l = (col == labels).astype(jnp.float32)
        label_logit = jnp.sum(onehot_l * logits, axis=-1, keepdims=True)
        vmask = (labels != -100).astype(jnp.float32)
        loss_sum = jnp.sum(vmask * (lse - label_logit))
        count = jnp.sum(vmask)
        # all-ignored batch gives 0/0 -> NaN, matching torch CrossEntropyLoss
        loss_ref[...] = jnp.reshape(loss_sum / count, (1, 1))

    return kernel


def fused_forward(ids_tm, labels_tm, emb, wih, whh_bd, b, wc, bc,
                  *, B, T, H, C):
    N = B * T
    Cp = wc.shape[1]
    logits_tm, loss = pl.pallas_call(
        _make_fused_kernel(B, T, H, C),
        out_shape=(jax.ShapeDtypeStruct((N, Cp), jnp.float32),
                   jax.ShapeDtypeStruct((1, 1), jnp.float32)),
        in_specs=[_vmem_spec()] * 8,
        out_specs=(_vmem_spec(), _vmem_spec()),
    )(ids_tm, labels_tm, emb, wih, whh_bd, b, wc, bc)
    return logits_tm, loss[0, 0]


# ---------------------------------------------------------------------------
# Parameters: raw (PyTorch layout, f32) + packed (padded bf16 kernel layout)
# ---------------------------------------------------------------------------
def init_raw_params(key, vocab_size, tagset_size, embedding_dim, hidden_dim,
                    pad_idx=0):
    ks = jax.random.split(key, 12)
    H = hidden_dim
    s = 1.0 / np.sqrt(H)
    sc = 1.0 / np.sqrt(2 * H)

    def u(k, shape, scale):
        return jax.random.uniform(k, shape, jnp.float32,
                                  minval=-scale, maxval=scale)

    emb = jax.random.normal(ks[0], (vocab_size, embedding_dim), jnp.float32)
    emb = emb.at[pad_idx].set(0.0)  # nn.Embedding(padding_idx=pad_idx)
    return {
        "embedding": emb,
        "wih_f": u(ks[1], (4 * H, embedding_dim), s),
        "whh_f": u(ks[2], (4 * H, H), s),
        "b_ih_f": u(ks[3], (4 * H,), s),
        "b_hh_f": u(ks[4], (4 * H,), s),
        "wih_b": u(ks[5], (4 * H, embedding_dim), s),
        "whh_b": u(ks[6], (4 * H, H), s),
        "b_ih_b": u(ks[7], (4 * H,), s),
        "b_hh_b": u(ks[8], (4 * H,), s),
        "wc": u(ks[9], (tagset_size, 2 * H), sc),
        "bc": u(ks[10], (tagset_size,), sc),
    }


def pack_params(raw, vocab_size, tagset_size, embedding_dim, hidden_dim):
    """Pad / concatenate / transpose raw params into the MXU-friendly bf16
    layouts consumed by the fused kernel."""
    H = hidden_dim
    Ep = _round_up(embedding_dim, 128)
    Vp = _round_up(vocab_size, 128)
    Cp = _round_up(tagset_size, 128)

    emb_p = jnp.zeros((Vp, Ep), jnp.float32)
    emb_p = emb_p.at[:vocab_size, :embedding_dim].set(raw["embedding"])

    wih = jnp.zeros((Ep, 8 * H), jnp.float32)
    wih = wih.at[:embedding_dim, 0:4 * H].set(raw["wih_f"].T)
    wih = wih.at[:embedding_dim, 4 * H:8 * H].set(raw["wih_b"].T)

    whh_bd = jnp.zeros((2 * H, 8 * H), jnp.float32)
    whh_bd = whh_bd.at[0:H, 0:4 * H].set(raw["whh_f"].T)
    whh_bd = whh_bd.at[H:2 * H, 4 * H:8 * H].set(raw["whh_b"].T)

    b = jnp.concatenate([raw["b_ih_f"] + raw["b_hh_f"],
                         raw["b_ih_b"] + raw["b_hh_b"]]).reshape(1, 8 * H)

    wc = jnp.zeros((2 * H, Cp), jnp.float32)
    wc = wc.at[:, :tagset_size].set(raw["wc"].T)
    bc = jnp.zeros((1, Cp), jnp.float32)
    bc = bc.at[:, :tagset_size].set(raw["bc"].reshape(1, -1))

    return {
        "emb": emb_p.astype(jnp.bfloat16),
        "wih": wih.astype(jnp.bfloat16),
        "whh_bd": whh_bd.astype(jnp.bfloat16),
        "b": b,
        "wc": wc.astype(jnp.bfloat16),
        "bc": bc,
    }


@functools.partial(jax.jit, static_argnames=("tagset_size",))
def lstm_tagger_forward(params, input_ids, labels, *, tagset_size):
    B, T = input_ids.shape
    H = params["whh_bd"].shape[0] // 2
    # time-major flattening (row = t*B + b) -> contiguous per-step gate slices
    ids_tm = jnp.transpose(input_ids).reshape(B * T, 1).astype(jnp.int32)
    labels_tm = jnp.transpose(labels).reshape(B * T, 1).astype(jnp.int32)
    logits_tm, loss = fused_forward(
        ids_tm, labels_tm, params["emb"], params["wih"], params["whh_bd"],
        params["b"], params["wc"], params["bc"], B=B, T=T, H=H, C=tagset_size)
    logits = (logits_tm[:, :tagset_size]
              .reshape(T, B, tagset_size).transpose(1, 0, 2))       # (B, T, C)
    return {"logits": logits, "loss": loss}


# ---------------------------------------------------------------------------
# Pure-JAX f32 reference (for correctness check)
# ---------------------------------------------------------------------------
def _ref_lstm_dir(x_tbe, wih, whh, b_ih, b_hh):
    H = whh.shape[1]

    def step(carry, x_t):
        h, c = carry
        g = x_t @ wih.T + h @ whh.T + b_ih + b_hh
        i = jax.nn.sigmoid(g[:, :H])
        f = jax.nn.sigmoid(g[:, H:2 * H])
        gg = jnp.tanh(g[:, 2 * H:3 * H])
        o = jax.nn.sigmoid(g[:, 3 * H:4 * H])
        c = f * c + i * gg
        h = o * jnp.tanh(c)
        return (h, c), h

    B = x_tbe.shape[1]
    init = (jnp.zeros((B, H), jnp.float32), jnp.zeros((B, H), jnp.float32))
    _, hs = jax.lax.scan(step, init, x_tbe)
    return hs


def _ref_forward(raw, input_ids, labels):
    emb = jnp.take(raw["embedding"], input_ids, axis=0)              # (B,T,E)
    x_tbe = jnp.transpose(emb, (1, 0, 2))
    h_f = _ref_lstm_dir(x_tbe, raw["wih_f"], raw["whh_f"],
                        raw["b_ih_f"], raw["b_hh_f"])
    h_b = _ref_lstm_dir(x_tbe[::-1], raw["wih_b"], raw["whh_b"],
                        raw["b_ih_b"], raw["b_hh_b"])[::-1]
    lstm_out = jnp.transpose(jnp.concatenate([h_f, h_b], -1), (1, 0, 2))
    B, T, D = lstm_out.shape
    flat = lstm_out.reshape(B * T, D)
    logits_flat = flat @ raw["wc"].T + raw["bc"]
    logits = logits_flat.reshape(B, T, -1)
    lab = labels.reshape(-1)
    m = jnp.max(logits_flat, -1, keepdims=True)
    lse = (m + jnp.log(jnp.sum(jnp.exp(logits_flat - m), -1,
                               keepdims=True)))[:, 0]
    safe_lab = jnp.where(lab == -100, 0, lab)
    picked = jnp.take_along_axis(logits_flat, safe_lab[:, None], axis=1)[:, 0]
    mask = (lab != -100).astype(jnp.float32)
    loss = jnp.sum(mask * (lse - picked)) / jnp.sum(mask)
    return logits, loss


# ---------------------------------------------------------------------------
if __name__ == "__main__":
    VOCAB, TAGS, E, H, PAD = 50, 5, 100, 128, 0
    B, T = 2, 8

    key = jax.random.PRNGKey(0)
    pkey, ikey, lkey = jax.random.split(key, 3)
    raw = init_raw_params(pkey, VOCAB, TAGS, E, H, PAD)
    params = pack_params(raw, VOCAB, TAGS, E, H)

    input_ids = jax.random.randint(ikey, (B, T), 1, VOCAB, dtype=jnp.int32)
    labels = jax.random.randint(lkey, (B, T), 0, TAGS, dtype=jnp.int32)
    # simulate padding on the second sequence (last 3 tokens)
    input_ids = input_ids.at[1, 5:].set(PAD)
    labels = labels.at[1, 5:].set(-100)

    out = lstm_tagger_forward(params, input_ids, labels, tagset_size=TAGS)
    jax.block_until_ready(out)

    ref_logits, ref_loss = _ref_forward(raw, input_ids, labels)
    np.testing.assert_allclose(np.asarray(out["logits"]),
                               np.asarray(ref_logits), rtol=2e-2, atol=2e-2)
    np.testing.assert_allclose(float(out["loss"]), float(ref_loss),
                               rtol=2e-2, atol=2e-2)
    assert out["logits"].shape == (B, T, TAGS)

    print("KERNEL_OK")
</pallas_src>

<mosaic_0001>
module attributes {stable_mosaic.version = 11 : i64} {
  func.func @kernel(%arg0: memref<16x1xi32, #tpu.memory_space<vmem>>, %arg1: memref<16x1xi32, #tpu.memory_space<vmem>>, %arg2: memref<128x128xbf16, #tpu.memory_space<vmem>>, %arg3: memref<128x1024xbf16, #tpu.memory_space<vmem>>, %arg4: memref<256x1024xbf16, #tpu.memory_space<vmem>>, %arg5: memref<1x1024xf32, #tpu.memory_space<vmem>>, %arg6: memref<256x128xbf16, #tpu.memory_space<vmem>>, %arg7: memref<1x128xf32, #tpu.memory_space<vmem>>, %arg8: memref<16x128xf32, #tpu.memory_space<vmem>>, %arg9: memref<1x1xf32, #tpu.memory_space<vmem>>) attributes {dimension_semantics = [], scalar_prefetch = 0 : i64, scratch_operands = 0 : i64, tpu.core_type = #tpu.core_type<tc>} {
    %c0 = arith.constant 0 : index
    %c0_0 = arith.constant 0 : index
    %0 = vector.load %arg0[%c0, %c0_0] : memref<16x1xi32, #tpu.memory_space<vmem>>, vector<16x1xi32>
    %1 = tpu.iota {dimensions = array<i32: 1>} : vector<16x128xi32>
    %2 = vector.broadcast %0 : vector<16x1xi32> to vector<16x128xi32>
    %3 = arith.cmpi eq, %1, %2 : vector<16x128xi32>
    %4 = arith.extui %3 : vector<16x128xi1> to vector<16x128xi32>
    %5 = arith.sitofp %4 : vector<16x128xi32> to vector<16x128xf32>
    %6 = arith.truncf %5 : vector<16x128xf32> to vector<16x128xbf16>
    %c0_1 = arith.constant 0 : index
    %c0_2 = arith.constant 0 : index
    %7 = vector.load %arg2[%c0_1, %c0_2] : memref<128x128xbf16, #tpu.memory_space<vmem>>, vector<128x128xbf16>
    %cst = arith.constant dense<0.000000e+00> : vector<16x128xf32>
    %8 = tpu.matmul %6, %7, %cst {dimension_numbers = #tpu.dot_dimension_numbers<[1], [0], [0], [1], [0, 0, 1, 1], [], []>} : vector<16x128xbf16>, vector<128x128xbf16>, vector<16x128xf32> -> vector<16x128xf32>
    %9 = arith.truncf %8 : vector<16x128xf32> to vector<16x128xbf16>
    %c0_3 = arith.constant 0 : index
    %c0_4 = arith.constant 0 : index
    %10 = vector.load %arg3[%c0_3, %c0_4] : memref<128x1024xbf16, #tpu.memory_space<vmem>>, vector<128x1024xbf16>
    %cst_5 = arith.constant dense<0.000000e+00> : vector<16x1024xf32>
    %11 = tpu.matmul %9, %10, %cst_5 {dimension_numbers = #tpu.dot_dimension_numbers<[1], [0], [0], [1], [0, 0, 1, 1], [], []>} : vector<16x128xbf16>, vector<128x1024xbf16>, vector<16x1024xf32> -> vector<16x1024xf32>
    %c0_6 = arith.constant 0 : index
    %c0_7 = arith.constant 0 : index
    %12 = vector.load %arg5[%c0_6, %c0_7] : memref<1x1024xf32, #tpu.memory_space<vmem>>, vector<1x1024xf32>
    %13 = vector.broadcast %12 : vector<1x1024xf32> to vector<16x1024xf32>
    %14 = arith.addf %11, %13 : vector<16x1024xf32>
    %c0_8 = arith.constant 0 : index
    %c0_9 = arith.constant 0 : index
    %15 = vector.load %arg4[%c0_8, %c0_9] : memref<256x1024xbf16, #tpu.memory_space<vmem>>, vector<256x1024xbf16>
    %cst_10 = arith.constant 0.000000e+00 : f32
    %16 = vector.broadcast %cst_10 : f32 to vector<2x256xf32>
    %cst_11 = arith.constant 0.000000e+00 : f32
    %17 = vector.broadcast %cst_11 : f32 to vector<4x128xf32>
    %18 = arith.truncf %16 : vector<2x256xf32> to vector<2x256xbf16>
    %cst_12 = arith.constant dense<0.000000e+00> : vector<2x1024xf32>
    %19 = tpu.matmul %18, %15, %cst_12 {dimension_numbers = #tpu.dot_dimension_numbers<[1], [0], [0], [1], [0, 0, 1, 1], [], []>} : vector<2x256xbf16>, vector<256x1024xbf16>, vector<2x1024xf32> -> vector<2x1024xf32>
    %20 = vector.extract_strided_slice %14 {offsets = [0, 0], sizes = [2, 512], strides = [1, 1]} : vector<16x1024xf32> to vector<2x512xf32>
    %21 = vector.extract_strided_slice %19 {offsets = [0, 0], sizes = [2, 512], strides = [1, 1]} : vector<2x1024xf32> to vector<2x512xf32>
    %22 = arith.addf %20, %21 : vector<2x512xf32>
    %23 = vector.extract_strided_slice %14 {offsets = [14, 512], sizes = [2, 512], strides = [1, 1]} : vector<16x1024xf32> to vector<2x512xf32>
    %24 = vector.extract_strided_slice %19 {offsets = [0, 512], sizes = [2, 512], strides = [1, 1]} : vector<2x1024xf32> to vector<2x512xf32>
    %25 = arith.addf %23, %24 : vector<2x512xf32>
    %26 = tpu.concatenate %22, %25 in 0 : vector<2x512xf32>, vector<2x512xf32> -> vector<4x512xf32>
    %27 = vector.extract_strided_slice %26 {offsets = [0, 0], sizes = [4, 128], strides = [1, 1]} : vector<4x512xf32> to vector<4x128xf32>
    %28 = arith.negf %27 : vector<4x128xf32>
    %29 = math.exp %28 : vector<4x128xf32>
    %cst_13 = arith.constant 1.000000e+00 : f32
    %30 = vector.broadcast %cst_13 : f32 to vector<4x128xf32>
    %31 = arith.addf %30, %29 : vector<4x128xf32>
    %32 = arith.divf %30, %31 : vector<4x128xf32>
    %33 = vector.extract_strided_slice %26 {offsets = [0, 128], sizes = [4, 128], strides = [1, 1]} : vector<4x512xf32> to vector<4x128xf32>
    %34 = arith.negf %33 : vector<4x128xf32>
    %35 = math.exp %34 : vector<4x128xf32>
    %cst_14 = arith.constant 1.000000e+00 : f32
    %36 = vector.broadcast %cst_14 : f32 to vector<4x128xf32>
    %37 = arith.addf %36, %35 : vector<4x128xf32>
    %38 = arith.divf %36, %37 : vector<4x128xf32>
    %39 = vector.extract_strided_slice %26 {offsets = [0, 256], sizes = [4, 128], strides = [1, 1]} : vector<4x512xf32> to vector<4x128xf32>
    %40 = math.tanh %39 : vector<4x128xf32>
    %41 = vector.extract_strided_slice %26 {offsets = [0, 384], sizes = [4, 128], strides = [1, 1]} : vector<4x512xf32> to vector<4x128xf32>
    %42 = arith.negf %41 : vector<4x128xf32>
    %43 = math.exp %42 : vector<4x128xf32>
    %cst_15 = arith.constant 1.000000e+00 : f32
    %44 = vector.broadcast %cst_15 : f32 to vector<4x128xf32>
    %45 = arith.addf %44, %43 : vector<4x128xf32>
    %46 = arith.divf %44, %45 : vector<4x128xf32>
    %47 = arith.mulf %38, %17 : vector<4x128xf32>
    %48 = arith.mulf %32, %40 : vector<4x128xf32>
    %49 = arith.addf %47, %48 : vector<4x128xf32>
    %50 = math.tanh %49 : vector<4x128xf32>
    %51 = arith.mulf %46, %50 : vector<4x128xf32>
    %52 = vector.extract_strided_slice %51 {offsets = [0, 0], sizes = [2, 128], strides = [1, 1]} : vector<4x128xf32> to vector<2x128xf32>
    %53 = vector.extract_strided_slice %51 {offsets = [2, 0], sizes = [2, 128], strides = [1, 1]} : vector<4x128xf32> to vector<2x128xf32>
    %54 = tpu.concatenate %52, %53 in 1 : vector<2x128xf32>, vector<2x128xf32> -> vector<2x256xf32>
    %55 = arith.truncf %54 : vector<2x256xf32> to vector<2x256xbf16>
    %cst_16 = arith.constant dense<0.000000e+00> : vector<2x1024xf32>
    %56 = tpu.matmul %55, %15, %cst_16 {dimension_numbers = #tpu.dot_dimension_numbers<[1], [0], [0], [1], [0, 0, 1, 1], [], []>} : vector<2x256xbf16>, vector<256x1024xbf16>, vector<2x1024xf32> -> vector<2x1024xf32>
    %57 = vector.extract_strided_slice %14 {offsets = [2, 0], sizes = [2, 512], strides = [1, 1]} : vector<16x1024xf32> to vector<2x512xf32>
    %58 = vector.extract_strided_slice %56 {offsets = [0, 0], sizes = [2, 512], strides = [1, 1]} : vector<2x1024xf32> to vector<2x512xf32>
    %59 = arith.addf %57, %58 : vector<2x512xf32>
    %60 = vector.extract_strided_slice %14 {offsets = [12, 512], sizes = [2, 512], strides = [1, 1]} : vector<16x1024xf32> to vector<2x512xf32>
    %61 = vector.extract_strided_slice %56 {offsets = [0, 512], sizes = [2, 512], strides = [1, 1]} : vector<2x1024xf32> to vector<2x512xf32>
    %62 = arith.addf %60, %61 : vector<2x512xf32>
    %63 = tpu.concatenate %59, %62 in 0 : vector<2x512xf32>, vector<2x512xf32> -> vector<4x512xf32>
    %64 = vector.extract_strided_slice %63 {offsets = [0, 0], sizes = [4, 128], strides = [1, 1]} : vector<4x512xf32> to vector<4x128xf32>
    %65 = arith.negf %64 : vector<4x128xf32>
    %66 = math.exp %65 : vector<4x128xf32>
    %cst_17 = arith.constant 1.000000e+00 : f32
    %67 = vector.broadcast %cst_17 : f32 to vector<4x128xf32>
    %68 = arith.addf %67, %66 : vector<4x128xf32>
    %69 = arith.divf %67, %68 : vector<4x128xf32>
    %70 = vector.extract_strided_slice %63 {offsets = [0, 128], sizes = [4, 128], strides = [1, 1]} : vector<4x512xf32> to vector<4x128xf32>
    %71 = arith.negf %70 : vector<4x128xf32>
    %72 = math.exp %71 : vector<4x128xf32>
    %cst_18 = arith.constant 1.000000e+00 : f32
    %73 = vector.broadcast %cst_18 : f32 to vector<4x128xf32>
    %74 = arith.addf %73, %72 : vector<4x128xf32>
    %75 = arith.divf %73, %74 : vector<4x128xf32>
    %76 = vector.extract_strided_slice %63 {offsets = [0, 256], sizes = [4, 128], strides = [1, 1]} : vector<4x512xf32> to vector<4x128xf32>
    %77 = math.tanh %76 : vector<4x128xf32>
    %78 = vector.extract_strided_slice %63 {offsets = [0, 384], sizes = [4, 128], strides = [1, 1]} : vector<4x512xf32> to vector<4x128xf32>
    %79 = arith.negf %78 : vector<4x128xf32>
    %80 = math.exp %79 : vector<4x128xf32>
    %cst_19 = arith.constant 1.000000e+00 : f32
    %81 = vector.broadcast %cst_19 : f32 to vector<4x128xf32>
    %82 = arith.addf %81, %80 : vector<4x128xf32>
    %83 = arith.divf %81, %82 : vector<4x128xf32>
    %84 = arith.mulf %75, %49 : vector<4x128xf32>
    %85 = arith.mulf %69, %77 : vector<4x128xf32>
    %86 = arith.addf %84, %85 : vector<4x128xf32>
    %87 = math.tanh %86 : vector<4x128xf32>
    %88 = arith.mulf %83, %87 : vector<4x128xf32>
    %89 = vector.extract_strided_slice %88 {offsets = [0, 0], sizes = [2, 128], strides = [1, 1]} : vector<4x128xf32> to vector<2x128xf32>
    %90 = vector.extract_strided_slice %88 {offsets = [2, 0], sizes = [2, 128], strides = [1, 1]} : vector<4x128xf32> to vector<2x128xf32>
    %91 = tpu.concatenate %89, %90 in 1 : vector<2x128xf32>, vector<2x128xf32> -> vector<2x256xf32>
    %92 = arith.truncf %91 : vector<2x256xf32> to vector<2x256xbf16>
    %cst_20 = arith.constant dense<0.000000e+00> : vector<2x1024xf32>
    %93 = tpu.matmul %92, %15, %cst_20 {dimension_numbers = #tpu.dot_dimension_numbers<[1], [0], [0], [1], [0, 0, 1, 1], [], []>} : vector<2x256xbf16>, vector<256x1024xbf16>, vector<2x1024xf32> -> vector<2x1024xf32>
    %94 = vector.extract_strided_slice %14 {offsets = [4, 0], sizes = [2, 512], strides = [1, 1]} : vector<16x1024xf32> to vector<2x512xf32>
    %95 = vector.extract_strided_slice %93 {offsets = [0, 0], sizes = [2, 512], strides = [1, 1]} : vector<2x1024xf32> to vector<2x512xf32>
    %96 = arith.addf %94, %95 : vector<2x512xf32>
    %97 = vector.extract_strided_slice %14 {offsets = [10, 512], sizes = [2, 512], strides = [1, 1]} : vector<16x1024xf32> to vector<2x512xf32>
    %98 = vector.extract_strided_slice %93 {offsets = [0, 512], sizes = [2, 512], strides = [1, 1]} : vector<2x1024xf32> to vector<2x512xf32>
    %99 = arith.addf %97, %98 : vector<2x512xf32>
    %100 = tpu.concatenate %96, %99 in 0 : vector<2x512xf32>, vector<2x512xf32> -> vector<4x512xf32>
    %101 = vector.extract_strided_slice %100 {offsets = [0, 0], sizes = [4, 128], strides = [1, 1]} : vector<4x512xf32> to vector<4x128xf32>
    %102 = arith.negf %101 : vector<4x128xf32>
    %103 = math.exp %102 : vector<4x128xf32>
    %cst_21 = arith.constant 1.000000e+00 : f32
    %104 = vector.broadcast %cst_21 : f32 to vector<4x128xf32>
    %105 = arith.addf %104, %103 : vector<4x128xf32>
    %106 = arith.divf %104, %105 : vector<4x128xf32>
    %107 = vector.extract_strided_slice %100 {offsets = [0, 128], sizes = [4, 128], strides = [1, 1]} : vector<4x512xf32> to vector<4x128xf32>
    %108 = arith.negf %107 : vector<4x128xf32>
    %109 = math.exp %108 : vector<4x128xf32>
    %cst_22 = arith.constant 1.000000e+00 : f32
    %110 = vector.broadcast %cst_22 : f32 to vector<4x128xf32>
    %111 = arith.addf %110, %109 : vector<4x128xf32>
    %112 = arith.divf %110, %111 : vector<4x128xf32>
    %113 = vector.extract_strided_slice %100 {offsets = [0, 256], sizes = [4, 128], strides = [1, 1]} : vector<4x512xf32> to vector<4x128xf32>
    %114 = math.tanh %113 : vector<4x128xf32>
    %115 = vector.extract_strided_slice %100 {offsets = [0, 384], sizes = [4, 128], strides = [1, 1]} : vector<4x512xf32> to vector<4x128xf32>
    %116 = arith.negf %115 : vector<4x128xf32>
    %117 = math.exp %116 : vector<4x128xf32>
    %cst_23 = arith.constant 1.000000e+00 : f32
    %118 = vector.broadcast %cst_23 : f32 to vector<4x128xf32>
    %119 = arith.addf %118, %117 : vector<4x128xf32>
    %120 = arith.divf %118, %119 : vector<4x128xf32>
    %121 = arith.mulf %112, %86 : vector<4x128xf32>
    %122 = arith.mulf %106, %114 : vector<4x128xf32>
    %123 = arith.addf %121, %122 : vector<4x128xf32>
    %124 = math.tanh %123 : vector<4x128xf32>
    %125 = arith.mulf %120, %124 : vector<4x128xf32>
    %126 = vector.extract_strided_slice %125 {offsets = [0, 0], sizes = [2, 128], strides = [1, 1]} : vector<4x128xf32> to vector<2x128xf32>
    %127 = vector.extract_strided_slice %125 {offsets = [2, 0], sizes = [2, 128], strides = [1, 1]} : vector<4x128xf32> to vector<2x128xf32>
    %128 = tpu.concatenate %126, %127 in 1 : vector<2x128xf32>, vector<2x128xf32> -> vector<2x256xf32>
    %129 = arith.truncf %128 : vector<2x256xf32> to vector<2x256xbf16>
    %cst_24 = arith.constant dense<0.000000e+00> : vector<2x1024xf32>
    %130 = tpu.matmul %129, %15, %cst_24 {dimension_numbers = #tpu.dot_dimension_numbers<[1], [0], [0], [1], [0, 0, 1, 1], [], []>} : vector<2x256xbf16>, vector<256x1024xbf16>, vector<2x1024xf32> -> vector<2x1024xf32>
    %131 = vector.extract_strided_slice %14 {offsets = [6, 0], sizes = [2, 512], strides = [1, 1]} : vector<16x1024xf32> to vector<2x512xf32>
    %132 = vector.extract_strided_slice %130 {offsets = [0, 0], sizes = [2, 512], strides = [1, 1]} : vector<2x1024xf32> to vector<2x512xf32>
    %133 = arith.addf %131, %132 : vector<2x512xf32>
    %134 = vector.extract_strided_slice %14 {offsets = [8, 512], sizes = [2, 512], strides = [1, 1]} : vector<16x1024xf32> to vector<2x512xf32>
    %135 = vector.extract_strided_slice %130 {offsets = [0, 512], sizes = [2, 512], strides = [1, 1]} : vector<2x1024xf32> to vector<2x512xf32>
    %136 = arith.addf %134, %135 : vector<2x512xf32>
    %137 = tpu.concatenate %133, %136 in 0 : vector<2x512xf32>, vector<2x512xf32> -> vector<4x512xf32>
    %138 = vector.extract_strided_slice %137 {offsets = [0, 0], sizes = [4, 128], strides = [1, 1]} : vector<4x512xf32> to vector<4x128xf32>
    %139 = arith.negf %138 : vector<4x128xf32>
    %140 = math.exp %139 : vector<4x128xf32>
    %cst_25 = arith.constant 1.000000e+00 : f32
    %141 = vector.broadcast %cst_25 : f32 to vector<4x128xf32>
    %142 = arith.addf %141, %140 : vector<4x128xf32>
    %143 = arith.divf %141, %142 : vector<4x128xf32>
    %144 = vector.extract_strided_slice %137 {offsets = [0, 128], sizes = [4, 128], strides = [1, 1]} : vector<4x512xf32> to vector<4x128xf32>
    %145 = arith.negf %144 : vector<4x128xf32>
    %146 = math.exp %145 : vector<4x128xf32>
    %cst_26 = arith.constant 1.000000e+00 : f32
    %147 = vector.broadcast %cst_26 : f32 to vector<4x128xf32>
    %148 = arith.addf %147, %146 : vector<4x128xf32>
    %149 = arith.divf %147, %148 : vector<4x128xf32>
    %150 = vector.extract_strided_slice %137 {offsets = [0, 256], sizes = [4, 128], strides = [1, 1]} : vector<4x512xf32> to vector<4x128xf32>
    %151 = math.tanh %150 : vector<4x128xf32>
    %152 = vector.extract_strided_slice %137 {offsets = [0, 384], sizes = [4, 128], strides = [1, 1]} : vector<4x512xf32> to vector<4x128xf32>
    %153 = arith.negf %152 : vector<4x128xf32>
    %154 = math.exp %153 : vector<4x128xf32>
    %cst_27 = arith.constant 1.000000e+00 : f32
    %155 = vector.broadcast %cst_27 : f32 to vector<4x128xf32>
    %156 = arith.addf %155, %154 : vector<4x128xf32>
    %157 = arith.divf %155, %156 : vector<4x128xf32>
    %158 = arith.mulf %149, %123 : vector<4x128xf32>
    %159 = arith.mulf %143, %151 : vector<4x128xf32>
    %160 = arith.addf %158, %159 : vector<4x128xf32>
    %161 = math.tanh %160 : vector<4x128xf32>
    %162 = arith.mulf %157, %161 : vector<4x128xf32>
    %163 = vector.extract_strided_slice %162 {offsets = [0, 0], sizes = [2, 128], strides = [1, 1]} : vector<4x128xf32> to vector<2x128xf32>
    %164 = vector.extract_strided_slice %162 {offsets = [2, 0], sizes = [2, 128], strides = [1, 1]} : vector<4x128xf32> to vector<2x128xf32>
    %165 = tpu.concatenate %163, %164 in 1 : vector<2x128xf32>, vector<2x128xf32> -> vector<2x256xf32>
    %166 = arith.truncf %165 : vector<2x256xf32> to vector<2x256xbf16>
    %cst_28 = arith.constant dense<0.000000e+00> : vector<2x1024xf32>
    %167 = tpu.matmul %166, %15, %cst_28 {dimension_numbers = #tpu.dot_dimension_numbers<[1], [0], [0], [1], [0, 0, 1, 1], [], []>} : vector<2x256xbf16>, vector<256x1024xbf16>, vector<2x1024xf32> -> vector<2x1024xf32>
    %168 = vector.extract_strided_slice %14 {offsets = [8, 0], sizes = [2, 512], strides = [1, 1]} : vector<16x1024xf32> to vector<2x512xf32>
    %169 = vector.extract_strided_slice %167 {offsets = [0, 0], sizes = [2, 512], strides = [1, 1]} : vector<2x1024xf32> to vector<2x512xf32>
    %170 = arith.addf %168, %169 : vector<2x512xf32>
    %171 = vector.extract_strided_slice %14 {offsets = [6, 512], sizes = [2, 512], strides = [1, 1]} : vector<16x1024xf32> to vector<2x512xf32>
    %172 = vector.extract_strided_slice %167 {offsets = [0, 512], sizes = [2, 512], strides = [1, 1]} : vector<2x1024xf32> to vector<2x512xf32>
    %173 = arith.addf %171, %172 : vector<2x512xf32>
    %174 = tpu.concatenate %170, %173 in 0 : vector<2x512xf32>, vector<2x512xf32> -> vector<4x512xf32>
    %175 = vector.extract_strided_slice %174 {offsets = [0, 0], sizes = [4, 128], strides = [1, 1]} : vector<4x512xf32> to vector<4x128xf32>
    %176 = arith.negf %175 : vector<4x128xf32>
    %177 = math.exp %176 : vector<4x128xf32>
    %cst_29 = arith.constant 1.000000e+00 : f32
    %178 = vector.broadcast %cst_29 : f32 to vector<4x128xf32>
    %179 = arith.addf %178, %177 : vector<4x128xf32>
    %180 = arith.divf %178, %179 : vector<4x128xf32>
    %181 = vector.extract_strided_slice %174 {offsets = [0, 128], sizes = [4, 128], strides = [1, 1]} : vector<4x512xf32> to vector<4x128xf32>
    %182 = arith.negf %181 : vector<4x128xf32>
    %183 = math.exp %182 : vector<4x128xf32>
    %cst_30 = arith.constant 1.000000e+00 : f32
    %184 = vector.broadcast %cst_30 : f32 to vector<4x128xf32>
    %185 = arith.addf %184, %183 : vector<4x128xf32>
    %186 = arith.divf %184, %185 : vector<4x128xf32>
    %187 = vector.extract_strided_slice %174 {offsets = [0, 256], sizes = [4, 128], strides = [1, 1]} : vector<4x512xf32> to vector<4x128xf32>
    %188 = math.tanh %187 : vector<4x128xf32>
    %189 = vector.extract_strided_slice %174 {offsets = [0, 384], sizes = [4, 128], strides = [1, 1]} : vector<4x512xf32> to vector<4x128xf32>
    %190 = arith.negf %189 : vector<4x128xf32>
    %191 = math.exp %190 : vector<4x128xf32>
    %cst_31 = arith.constant 1.000000e+00 : f32
    %192 = vector.broadcast %cst_31 : f32 to vector<4x128xf32>
    %193 = arith.addf %192, %191 : vector<4x128xf32>
    %194 = arith.divf %192, %193 : vector<4x128xf32>
    %195 = arith.mulf %186, %160 : vector<4x128xf32>
    %196 = arith.mulf %180, %188 : vector<4x128xf32>
    %197 = arith.addf %195, %196 : vector<4x128xf32>
    %198 = math.tanh %197 : vector<4x128xf32>
    %199 = arith.mulf %194, %198 : vector<4x128xf32>
    %200 = vector.extract_strided_slice %199 {offsets = [0, 0], sizes = [2, 128], strides = [1, 1]} : vector<4x128xf32> to vector<2x128xf32>
    %201 = vector.extract_strided_slice %199 {offsets = [2, 0], sizes = [2, 128], strides = [1, 1]} : vector<4x128xf32> to vector<2x128xf32>
    %202 = tpu.concatenate %200, %201 in 1 : vector<2x128xf32>, vector<2x128xf32> -> vector<2x256xf32>
    %203 = arith.truncf %202 : vector<2x256xf32> to vector<2x256xbf16>
    %cst_32 = arith.constant dense<0.000000e+00> : vector<2x1024xf32>
    %204 = tpu.matmul %203, %15, %cst_32 {dimension_numbers = #tpu.dot_dimension_numbers<[1], [0], [0], [1], [0, 0, 1, 1], [], []>} : vector<2x256xbf16>, vector<256x1024xbf16>, vector<2x1024xf32> -> vector<2x1024xf32>
    %205 = vector.extract_strided_slice %14 {offsets = [10, 0], sizes = [2, 512], strides = [1, 1]} : vector<16x1024xf32> to vector<2x512xf32>
    %206 = vector.extract_strided_slice %204 {offsets = [0, 0], sizes = [2, 512], strides = [1, 1]} : vector<2x1024xf32> to vector<2x512xf32>
    %207 = arith.addf %205, %206 : vector<2x512xf32>
    %208 = vector.extract_strided_slice %14 {offsets = [4, 512], sizes = [2, 512], strides = [1, 1]} : vector<16x1024xf32> to vector<2x512xf32>
    %209 = vector.extract_strided_slice %204 {offsets = [0, 512], sizes = [2, 512], strides = [1, 1]} : vector<2x1024xf32> to vector<2x512xf32>
    %210 = arith.addf %208, %209 : vector<2x512xf32>
    %211 = tpu.concatenate %207, %210 in 0 : vector<2x512xf32>, vector<2x512xf32> -> vector<4x512xf32>
    %212 = vector.extract_strided_slice %211 {offsets = [0, 0], sizes = [4, 128], strides = [1, 1]} : vector<4x512xf32> to vector<4x128xf32>
    %213 = arith.negf %212 : vector<4x128xf32>
    %214 = math.exp %213 : vector<4x128xf32>
    %cst_33 = arith.constant 1.000000e+00 : f32
    %215 = vector.broadcast %cst_33 : f32 to vector<4x128xf32>
    %216 = arith.addf %215, %214 : vector<4x128xf32>
    %217 = arith.divf %215, %216 : vector<4x128xf32>
    %218 = vector.extract_strided_slice %211 {offsets = [0, 128], sizes = [4, 128], strides = [1, 1]} : vector<4x512xf32> to vector<4x128xf32>
    %219 = arith.negf %218 : vector<4x128xf32>
    %220 = math.exp %219 : vector<4x128xf32>
    %cst_34 = arith.constant 1.000000e+00 : f32
    %221 = vector.broadcast %cst_34 : f32 to vector<4x128xf32>
    %222 = arith.addf %221, %220 : vector<4x128xf32>
    %223 = arith.divf %221, %222 : vector<4x128xf32>
    %224 = vector.extract_strided_slice %211 {offsets = [0, 256], sizes = [4, 128], strides = [1, 1]} : vector<4x512xf32> to vector<4x128xf32>
    %225 = math.tanh %224 : vector<4x128xf32>
    %226 = vector.extract_strided_slice %211 {offsets = [0, 384], sizes = [4, 128], strides = [1, 1]} : vector<4x512xf32> to vector<4x128xf32>
    %227 = arith.negf %226 : vector<4x128xf32>
    %228 = math.exp %227 : vector<4x128xf32>
    %cst_35 = arith.constant 1.000000e+00 : f32
    %229 = vector.broadcast %cst_35 : f32 to vector<4x128xf32>
    %230 = arith.addf %229, %228 : vector<4x128xf32>
    %231 = arith.divf %229, %230 : vector<4x128xf32>
    %232 = arith.mulf %223, %197 : vector<4x128xf32>
    %233 = arith.mulf %217, %225 : vector<4x128xf32>
    %234 = arith.addf %232, %233 : vector<4x128xf32>
    %235 = math.tanh %234 : vector<4x128xf32>
    %236 = arith.mulf %231, %235 : vector<4x128xf32>
    %237 = vector.extract_strided_slice %236 {offsets = [0, 0], sizes = [2, 128], strides = [1, 1]} : vector<4x128xf32> to vector<2x128xf32>
    %238 = vector.extract_strided_slice %236 {offsets = [2, 0], sizes = [2, 128], strides = [1, 1]} : vector<4x128xf32> to vector<2x128xf32>
    %239 = tpu.concatenate %237, %238 in 1 : vector<2x128xf32>, vector<2x128xf32> -> vector<2x256xf32>
    %240 = arith.truncf %239 : vector<2x256xf32> to vector<2x256xbf16>
    %cst_36 = arith.constant dense<0.000000e+00> : vector<2x1024xf32>
    %241 = tpu.matmul %240, %15, %cst_36 {dimension_numbers = #tpu.dot_dimension_numbers<[1], [0], [0], [1], [0, 0, 1, 1], [], []>} : vector<2x256xbf16>, vector<256x1024xbf16>, vector<2x1024xf32> -> vector<2x1024xf32>
    %242 = vector.extract_strided_slice %14 {offsets = [12, 0], sizes = [2, 512], strides = [1, 1]} : vector<16x1024xf32> to vector<2x512xf32>
    %243 = vector.extract_strided_slice %241 {offsets = [0, 0], sizes = [2, 512], strides = [1, 1]} : vector<2x1024xf32> to vector<2x512xf32>
    %244 = arith.addf %242, %243 : vector<2x512xf32>
    %245 = vector.extract_strided_slice %14 {offsets = [2, 512], sizes = [2, 512], strides = [1, 1]} : vector<16x1024xf32> to vector<2x512xf32>
    %246 = vector.extract_strided_slice %241 {offsets = [0, 512], sizes = [2, 512], strides = [1, 1]} : vector<2x1024xf32> to vector<2x512xf32>
    %247 = arith.addf %245, %246 : vector<2x512xf32>
    %248 = tpu.concatenate %244, %247 in 0 : vector<2x512xf32>, vector<2x512xf32> -> vector<4x512xf32>
    %249 = vector.extract_strided_slice %248 {offsets = [0, 0], sizes = [4, 128], strides = [1, 1]} : vector<4x512xf32> to vector<4x128xf32>
    %250 = arith.negf %249 : vector<4x128xf32>
    %251 = math.exp %250 : vector<4x128xf32>
    %cst_37 = arith.constant 1.000000e+00 : f32
    %252 = vector.broadcast %cst_37 : f32 to vector<4x128xf32>
    %253 = arith.addf %252, %251 : vector<4x128xf32>
    %254 = arith.divf %252, %253 : vector<4x128xf32>
    %255 = vector.extract_strided_slice %248 {offsets = [0, 128], sizes = [4, 128], strides = [1, 1]} : vector<4x512xf32> to vector<4x128xf32>
    %256 = arith.negf %255 : vector<4x128xf32>
    %257 = math.exp %256 : vector<4x128xf32>
    %cst_38 = arith.constant 1.000000e+00 : f32
    %258 = vector.broadcast %cst_38 : f32 to vector<4x128xf32>
    %259 = arith.addf %258, %257 : vector<4x128xf32>
    %260 = arith.divf %258, %259 : vector<4x128xf32>
    %261 = vector.extract_strided_slice %248 {offsets = [0, 256], sizes = [4, 128], strides = [1, 1]} : vector<4x512xf32> to vector<4x128xf32>
    %262 = math.tanh %261 : vector<4x128xf32>
    %263 = vector.extract_strided_slice %248 {offsets = [0, 384], sizes = [4, 128], strides = [1, 1]} : vector<4x512xf32> to vector<4x128xf32>
    %264 = arith.negf %263 : vector<4x128xf32>
    %265 = math.exp %264 : vector<4x128xf32>
    %cst_39 = arith.constant 1.000000e+00 : f32
    %266 = vector.broadcast %cst_39 : f32 to vector<4x128xf32>
    %267 = arith.addf %266, %265 : vector<4x128xf32>
    %268 = arith.divf %266, %267 : vector<4x128xf32>
    %269 = arith.mulf %260, %234 : vector<4x128xf32>
    %270 = arith.mulf %254, %262 : vector<4x128xf32>
    %271 = arith.addf %269, %270 : vector<4x128xf32>
    %272 = math.tanh %271 : vector<4x128xf32>
    %273 = arith.mulf %268, %272 : vector<4x128xf32>
    %274 = vector.extract_strided_slice %273 {offsets = [0, 0], sizes = [2, 128], strides = [1, 1]} : vector<4x128xf32> to vector<2x128xf32>
    %275 = vector.extract_strided_slice %273 {offsets = [2, 0], sizes = [2, 128], strides = [1, 1]} : vector<4x128xf32> to vector<2x128xf32>
    %276 = tpu.concatenate %274, %275 in 1 : vector<2x128xf32>, vector<2x128xf32> -> vector<2x256xf32>
    %277 = arith.truncf %276 : vector<2x256xf32> to vector<2x256xbf16>
    %cst_40 = arith.constant dense<0.000000e+00> : vector<2x1024xf32>
    %278 = tpu.matmul %277, %15, %cst_40 {dimension_numbers = #tpu.dot_dimension_numbers<[1], [0], [0], [1], [0, 0, 1, 1], [], []>} : vector<2x256xbf16>, vector<256x1024xbf16>, vector<2x1024xf32> -> vector<2x1024xf32>
    %279 = vector.extract_strided_slice %14 {offsets = [14, 0], sizes = [2, 512], strides = [1, 1]} : vector<16x1024xf32> to vector<2x512xf32>
    %280 = vector.extract_strided_slice %278 {offsets = [0, 0], sizes = [2, 512], strides = [1, 1]} : vector<2x1024xf32> to vector<2x512xf32>
    %281 = arith.addf %279, %280 : vector<2x512xf32>
    %282 = vector.extract_strided_slice %14 {offsets = [0, 512], sizes = [2, 512], strides = [1, 1]} : vector<16x1024xf32> to vector<2x512xf32>
    %283 = vector.extract_strided_slice %278 {offsets = [0, 512], sizes = [2, 512], strides = [1, 1]} : vector<2x1024xf32> to vector<2x512xf32>
    %284 = arith.addf %282, %283 : vector<2x512xf32>
    %285 = tpu.concatenate %281, %284 in 0 : vector<2x512xf32>, vector<2x512xf32> -> vector<4x512xf32>
    %286 = vector.extract_strided_slice %285 {offsets = [0, 0], sizes = [4, 128], strides = [1, 1]} : vector<4x512xf32> to vector<4x128xf32>
    %287 = arith.negf %286 : vector<4x128xf32>
    %288 = math.exp %287 : vector<4x128xf32>
    %cst_41 = arith.constant 1.000000e+00 : f32
    %289 = vector.broadcast %cst_41 : f32 to vector<4x128xf32>
    %290 = arith.addf %289, %288 : vector<4x128xf32>
    %291 = arith.divf %289, %290 : vector<4x128xf32>
    %292 = vector.extract_strided_slice %285 {offsets = [0, 128], sizes = [4, 128], strides = [1, 1]} : vector<4x512xf32> to vector<4x128xf32>
    %293 = arith.negf %292 : vector<4x128xf32>
    %294 = math.exp %293 : vector<4x128xf32>
    %cst_42 = arith.constant 1.000000e+00 : f32
    %295 = vector.broadcast %cst_42 : f32 to vector<4x128xf32>
    %296 = arith.addf %295, %294 : vector<4x128xf32>
    %297 = arith.divf %295, %296 : vector<4x128xf32>
    %298 = vector.extract_strided_slice %285 {offsets = [0, 256], sizes = [4, 128], strides = [1, 1]} : vector<4x512xf32> to vector<4x128xf32>
    %299 = math.tanh %298 : vector<4x128xf32>
    %300 = vector.extract_strided_slice %285 {offsets = [0, 384], sizes = [4, 128], strides = [1, 1]} : vector<4x512xf32> to vector<4x128xf32>
    %301 = arith.negf %300 : vector<4x128xf32>
    %302 = math.exp %301 : vector<4x128xf32>
    %cst_43 = arith.constant 1.000000e+00 : f32
    %303 = vector.broadcast %cst_43 : f32 to vector<4x128xf32>
    %304 = arith.addf %303, %302 : vector<4x128xf32>
    %305 = arith.divf %303, %304 : vector<4x128xf32>
    %306 = arith.mulf %297, %271 : vector<4x128xf32>
    %307 = arith.mulf %291, %299 : vector<4x128xf32>
    %308 = arith.addf %306, %307 : vector<4x128xf32>
    %309 = math.tanh %308 : vector<4x128xf32>
    %310 = arith.mulf %305, %309 : vector<4x128xf32>
    %311 = vector.extract_strided_slice %310 {offsets = [0, 0], sizes = [2, 128], strides = [1, 1]} : vector<4x128xf32> to vector<2x128xf32>
    %312 = vector.extract_strided_slice %310 {offsets = [2, 0], sizes = [2, 128], strides = [1, 1]} : vector<4x128xf32> to vector<2x128xf32>
    %313 = tpu.concatenate %52, %312 in 1 : vector<2x128xf32>, vector<2x128xf32> -> vector<2x256xf32>
    %314 = tpu.concatenate %89, %275 in 1 : vector<2x128xf32>, vector<2x128xf32> -> vector<2x256xf32>
    %315 = tpu.concatenate %126, %238 in 1 : vector<2x128xf32>, vector<2x128xf32> -> vector<2x256xf32>
    %316 = tpu.concatenate %163, %201 in 1 : vector<2x128xf32>, vector<2x128xf32> -> vector<2x256xf32>
    %317 = tpu.concatenate %200, %164 in 1 : vector<2x128xf32>, vector<2x128xf32> -> vector<2x256xf32>
    %318 = tpu.concatenate %237, %127 in 1 : vector<2x128xf32>, vector<2x128xf32> -> vector<2x256xf32>
    %319 = tpu.concatenate %274, %90 in 1 : vector<2x128xf32>, vector<2x128xf32> -> vector<2x256xf32>
    %320 = tpu.concatenate %311, %53 in 1 : vector<2x128xf32>, vector<2x128xf32> -> vector<2x256xf32>
    %321 = tpu.concatenate %313, %314, %315, %316, %317, %318, %319, %320 in 0 : vector<2x256xf32>, vector<2x256xf32>, vector<2x256xf32>, vector<2x256xf32>, vector<2x256xf32>, vector<2x256xf32>, vector<2x256xf32>, vector<2x256xf32> -> vector<16x256xf32>
    %322 = arith.truncf %321 : vector<16x256xf32> to vector<16x256xbf16>
    %c0_44 = arith.constant 0 : index
    %c0_45 = arith.constant 0 : index
    %323 = vector.load %arg6[%c0_44, %c0_45] : memref<256x128xbf16, #tpu.memory_space<vmem>>, vector<256x128xbf16>
    %cst_46 = arith.constant dense<0.000000e+00> : vector<16x128xf32>
    %324 = tpu.matmul %322, %323, %cst_46 {dimension_numbers = #tpu.dot_dimension_numbers<[1], [0], [0], [1], [0, 0, 1, 1], [], []>} : vector<16x256xbf16>, vector<256x128xbf16>, vector<16x128xf32> -> vector<16x128xf32>
    %c0_47 = arith.constant 0 : index
    %c0_48 = arith.constant 0 : index
    %325 = vector.load %arg7[%c0_47, %c0_48] : memref<1x128xf32, #tpu.memory_space<vmem>>, vector<1x128xf32>
    %326 = vector.broadcast %325 : vector<1x128xf32> to vector<16x128xf32>
    %327 = arith.addf %324, %326 : vector<16x128xf32>
    %c0_49 = arith.constant 0 : index
    %c0_50 = arith.constant 0 : index
    %328 = vector.load %arg8[%c0_49, %c0_50] : memref<16x128xf32, #tpu.memory_space<vmem>>, vector<16x128xf32>
    tpu.vector_store %arg8[%c0_49, %c0_50], %327 {strides = array<i32>} : memref<16x128xf32, #tpu.memory_space<vmem>>, vector<16x128xf32>,
    %329 = tpu.iota {dimensions = array<i32: 1>} : vector<16x128xi32>
    %c5_i32 = arith.constant 5 : i32
    %330 = vector.broadcast %c5_i32 : i32 to vector<16x128xi32>
    %331 = arith.cmpi slt, %329, %330 : vector<16x128xi32>
    %cst_51 = arith.constant -1.000000e+30 : f32
    %332 = vector.broadcast %cst_51 : f32 to vector<16x128xf32>
    %333 = arith.select %331, %327, %332 : vector<16x128xi1>, vector<16x128xf32>
    %cst_52 = arith.constant dense<0xFF800000> : vector<16xf32>
    %334 = vector.multi_reduction <maximumf>, %333, %cst_52 [1] : vector<16x128xf32> to vector<16xf32>
    %335 = vector.shape_cast %334 : vector<16xf32> to vector<16x1xf32>
    %336 = vector.broadcast %335 : vector<16x1xf32> to vector<16x128xf32>
    %337 = arith.subf %333, %336 : vector<16x128xf32>
    %338 = math.exp %337 : vector<16x128xf32>
    %cst_53 = arith.constant dense<0.000000e+00> : vector<16xf32>
    %339 = vector.multi_reduction <add>, %338, %cst_53 [1] : vector<16x128xf32> to vector<16xf32>
    %340 = vector.shape_cast %339 : vector<16xf32> to vector<16x1xf32>
    %341 = math.log %340 : vector<16x1xf32>
    %342 = arith.addf %335, %341 : vector<16x1xf32>
    %c0_54 = arith.constant 0 : index
    %c0_55 = arith.constant 0 : index
    %343 = vector.load %arg1[%c0_54, %c0_55] : memref<16x1xi32, #tpu.memory_space<vmem>>, vector<16x1xi32>
    %344 = vector.broadcast %343 : vector<16x1xi32> to vector<16x128xi32>
    %345 = arith.cmpi eq, %329, %344 : vector<16x128xi32>
    %346 = arith.extui %345 : vector<16x128xi1> to vector<16x128xi32>
    %347 = arith.sitofp %346 : vector<16x128xi32> to vector<16x128xf32>
    %348 = arith.mulf %347, %327 : vector<16x128xf32>
    %cst_56 = arith.constant dense<0.000000e+00> : vector<16xf32>
    %349 = vector.multi_reduction <add>, %348, %cst_56 [1] : vector<16x128xf32> to vector<16xf32>
    %350 = vector.shape_cast %349 : vector<16xf32> to vector<16x1xf32>
    %c-100_i32 = arith.constant -100 : i32
    %351 = vector.broadcast %c-100_i32 : i32 to vector<16x1xi32>
    %352 = arith.cmpi ne, %343, %351 : vector<16x1xi32>
    %353 = arith.extui %352 : vector<16x1xi1> to vector<16x1xi32>
    %354 = arith.sitofp %353 : vector<16x1xi32> to vector<16x1xf32>
    %355 = arith.subf %342, %350 : vector<16x1xf32>
    %356 = arith.mulf %354, %355 : vector<16x1xf32>
    %357 = vector.shape_cast %356 : vector<16x1xf32> to vector<1x16x1xf32>
    %cst_57 = arith.constant dense<0.000000e+00> : vector<1xf32>
    %358 = vector.multi_reduction <add>, %357, %cst_57 [1, 2] : vector<1x16x1xf32> to vector<1xf32>
    %359 = vector.shape_cast %358 : vector<1xf32> to vector<1x1x1xf32>
    %360 = vector.extract %359[0, 0, 0] : f32 from vector<1x1x1xf32>
    %361 = vector.shape_cast %354 : vector<16x1xf32> to vector<1x16x1xf32>
    %cst_58 = arith.constant dense<0.000000e+00> : vector<1xf32>
    %362 = vector.multi_reduction <add>, %361, %cst_58 [1, 2] : vector<1x16x1xf32> to vector<1xf32>
    %363 = vector.shape_cast %362 : vector<1xf32> to vector<1x1x1xf32>
    %364 = vector.extract %363[0, 0, 0] : f32 from vector<1x1x1xf32>
    %365 = arith.divf %360, %364 : f32
    %366 = vector.broadcast %365 : f32 to vector<1x1xf32>
    %c0_59 = arith.constant 0 : index
    %c0_60 = arith.constant 0 : index
    %367 = vector.load %arg9[%c0_59, %c0_60] : memref<1x1xf32, #tpu.memory_space<vmem>>, vector<1x1xf32>
    tpu.vector_store %arg9[%c0_59, %c0_60], %366 {strides = array<i32>} : memref<1x1xf32, #tpu.memory_space<vmem>>, vector<1x1xf32>,
    return
  }
}

</mosaic_0001>

<llo_original>
// kernel: lstm_tagger_forward.1
$region0: #{lstm_tagger_forward.1}
  #allocation0 [shape = 'u32[]', space=smem, size = 0x4, offset = 0x4, fixed_abs, tag = 'smem constant byte address 0x4 - core index']
  #allocation1 [shape = 'u32[144,128]{1,0:T(1,128)}', space=vmem, size = 0x12000, scoped, tag = 'internal scratch']
  %s0 = inlined_call_operand.vmem [shape: s32[16,1], index: 0, kind: input, shape index: {}]
  %s1 = inlined_call_operand.vmem [shape: s32[16,1], index: 1, kind: input, shape index: {}]
  %s2 = inlined_call_operand.vmem [shape: bf16[128,128], index: 2, kind: input, shape index: {}]
  %s3 = inlined_call_operand.hbm [shape: bf16[128,1024], index: 3, kind: input, shape index: {}]
  %s4 = inlined_call_operand.hbm [shape: bf16[256,1024], index: 4, kind: input, shape index: {}]
  %s5 = inlined_call_operand.vmem [shape: f32[1,1024], index: 5, kind: input, shape index: {}]
  %s6 = inlined_call_operand.hbm [shape: bf16[256,128], index: 6, kind: input, shape index: {}]
  %s7 = inlined_call_operand.vmem [shape: f32[1,128], index: 7, kind: input, shape index: {}]
  %s8 = inlined_call_operand.vmem [shape: f32[16,128], index: 8, kind: output, shape index: {0}]
  %s9 = inlined_call_operand.hbm [shape: f32[1,1], index: 9, kind: output, shape index: {1}]
  %10 = xla_tuple %s8, %s9
  %s11 = sld [smem:[#allocation0]]
  $region62: #{lstm_tagger_forward.1} parent=0
    _
  %s13 = ssub.s32 1, %s11
  %s14 = scalar_select 0, %s13, %s11
  $region1: #{lstm_tagger_forward.1} parent=0
    #allocation2 [shape = 'u8[262144]{0}', space=vmem, size = 0x40000, scoped, tag = 'input window, operand 3, single buffered']
    #allocation3 [shape = 's32[1]{0}', space=sflag, size = 0x4, scoped, tag = 'scoped memory for lstm_tagger_forward.1']
    #allocation4 [shape = 's32[1]{0}', space=sflag, size = 0x4, scoped, tag = 'scoped memory for lstm_tagger_forward.1']
    #allocation5 [shape = 'u8[524288]{0}', space=vmem, size = 0x80000, scoped, tag = 'input window, operand 4, single buffered']
    #allocation6 [shape = 's32[1]{0}', space=sflag, size = 0x4, scoped, tag = 'scoped memory for lstm_tagger_forward.1']
    #allocation7 [shape = 'u8[65536]{0}', space=vmem, size = 0x10000, scoped, tag = 'input window, operand 6, single buffered']
    #allocation8 [shape = 'u8[512]{0}', space=vmem, size = 0x400, scoped, tag = 'output window, operand 1, single buffered']
    %15 = vsyncpa [#allocation3], 0
    %16 = vsyncpa [#allocation6], 0
    %17 = vsyncpa [#allocation4], 0
    // Predicated region
    $region2: #{lstm_tagger_forward.1} parent=1 // pred_check
      _
    $region3: #{lstm_tagger_forward.1} parent=1 // pred_check_branch
      %19 = sbr.rel (0) target = $region5
    $region4: #{lstm_tagger_forward.1} parent=1 // pred_region
      _
    $region5: #{lstm_tagger_forward.1} parent=1 // pred_fallthru
      _
    // Predicated region
    $region6: #{lstm_tagger_forward.1} parent=1 // pred_check
      _
    $region7: #{lstm_tagger_forward.1} parent=1 // pred_check_branch
      %21 = sbr.rel (0) target = $region9
    $region8: #{lstm_tagger_forward.1} parent=1 // pred_region
      _
    $region9: #{lstm_tagger_forward.1} parent=1 // pred_fallthru
      _
    // Predicated region
    $region10: #{lstm_tagger_forward.1} parent=1 // pred_check
      _
    $region11: #{lstm_tagger_forward.1} parent=1 // pred_check_branch
      %23 = sbr.rel (0) target = $region13
    $region12: #{lstm_tagger_forward.1} parent=1 // pred_region
      _
    $region13: #{lstm_tagger_forward.1} parent=1 // pred_fallthru
      _
    // Predicated region
    $region14: #{lstm_tagger_forward.1} parent=1 // pred_check
      _
    $region15: #{lstm_tagger_forward.1} parent=1 // pred_check_branch
      %25 = sbr.rel (0) target = $region17
    $region16: #{lstm_tagger_forward.1} parent=1 // pred_region
      %s27 = ssub.s32 8192, 8192
      %28 = vsyncadd [#allocation3], %s27
      %s29 = sshll.u32 [#allocation2], 4
      %s30 = int_to_ptr.vmem [resolvable:$true] %s29
      %35 = dma.hbm_to_vmem [thread:$0]  %s3, 8192, %s30, [#allocation3], 512, 512, 32
    $region17: #{lstm_tagger_forward.1} parent=1 // pred_fallthru
      _
    // Predicated region
    $region18: #{lstm_tagger_forward.1} parent=1 // pred_check
      _
    $region19: #{lstm_tagger_forward.1} parent=1 // pred_check_branch
      %37 = sbr.rel (0) target = $region21
    $region20: #{lstm_tagger_forward.1} parent=1 // pred_region
      %s39 = ssub.s32 16384, 16384
      %40 = vsyncadd [#allocation6], %s39
      %s41 = sshll.u32 [#allocation5], 4
      %s42 = int_to_ptr.vmem [resolvable:$true] %s41
      %47 = dma.hbm_to_vmem [thread:$0]  %s4, 16384, %s42, [#allocation6], 512, 512, 32
    $region21: #{lstm_tagger_forward.1} parent=1 // pred_fallthru
      _
    // Predicated region
    $region22: #{lstm_tagger_forward.1} parent=1 // pred_check
      _
    $region23: #{lstm_tagger_forward.1} parent=1 // pred_check_branch
      %49 = sbr.rel (0) target = $region25
    $region24: #{lstm_tagger_forward.1} parent=1 // pred_region
      _
    $region25: #{lstm_tagger_forward.1} parent=1 // pred_fallthru
      _
    // Predicated region
    $region26: #{lstm_tagger_forward.1} parent=1 // pred_check
      _
    $region27: #{lstm_tagger_forward.1} parent=1 // pred_check_branch
      %51 = sbr.rel (0) target = $region29
    $region28: #{lstm_tagger_forward.1} parent=1 // pred_region
      %s53 = ssub.s32 2048, 2048
      %54 = vsyncadd [#allocation6], %s53
      %s55 = sshll.u32 [#allocation7], 4
      %s56 = int_to_ptr.vmem [resolvable:$true] %s55
      %61 = dma.hbm_to_vmem [thread:$0]  %s6, 2048, %s56, [#allocation6], 64, 64, 4
    $region29: #{lstm_tagger_forward.1} parent=1 // pred_fallthru
      _
    // Predicated region
    $region30: #{lstm_tagger_forward.1} parent=1 // pred_check
      _
    $region31: #{lstm_tagger_forward.1} parent=1 // pred_check_branch
      %63 = sbr.rel (0) target = $region33
    $region32: #{lstm_tagger_forward.1} parent=1 // pred_region
      _
    $region33: #{lstm_tagger_forward.1} parent=1 // pred_fallthru
      _
    // Predicated region
    $region34: #{lstm_tagger_forward.1} parent=1 // pred_check
      _
    $region35: #{lstm_tagger_forward.1} parent=1 // pred_check_branch
      %65 = sbr.rel (0) target = $region37
    $region36: #{lstm_tagger_forward.1} parent=1 // pred_region
      %66 = dma.done [#allocation3], 8192
    $region37: #{lstm_tagger_forward.1} parent=1 // pred_fallthru
      _
    // Predicated region
    $region38: #{lstm_tagger_forward.1} parent=1 // pred_check
      _
    $region39: #{lstm_tagger_forward.1} parent=1 // pred_check_branch
      %68 = sbr.rel (0) target = $region41
    $region40: #{lstm_tagger_forward.1} parent=1 // pred_region
      %69 = dma.done [#allocation6], 16384
    $region41: #{lstm_tagger_forward.1} parent=1 // pred_fallthru
      _
    // Predicated region
    $region42: #{lstm_tagger_forward.1} parent=1 // pred_check
      _
    $region43: #{lstm_tagger_forward.1} parent=1 // pred_check_branch
      %71 = sbr.rel (0) target = $region45
    $region44: #{lstm_tagger_forward.1} parent=1 // pred_region
      %72 = dma.done [#allocation6], 2048
    $region45: #{lstm_tagger_forward.1} parent=1 // pred_fallthru
      _
    %v74 = vld [vmem:[%s0] sm:$0xff]
    %v75 = vld [vmem:[%s0 + $0x8] sm:$0xff]
    %v76 = vlaneseq
    %v77 = vand.u32 %v76, 127
    %78 = vset.pattern.permute.xlu0 0
    %79 = vperm.xlu0 %78, %v74
    %v80 = vpop.permute.xlu0 %79
    %81 = vset.pattern.permute.xlu0 0
    %82 = vperm.xlu0 %81, %v75
    %v83 = vpop.permute.xlu0 %82
    %vm84 = vcmp.eq.s32.totalorder %v77, %v80
    %vm85 = vcmp.eq.s32.totalorder %v77, %v83
    %v86 = vsel %vm84, 1, 0
    %v87 = vsel %vm85, 1, 0
    %v88 = vcvt.s32.f32 %v86
    %v89 = vcvt.s32.f32 %v87
    %v90 = vpack.c.bf16 %v89, %v88
    %v91 = vld [vmem:[%s2] sm:$0xf]
    %v92 = vld [vmem:[%s2 + $0x4] sm:$0xf]
    %v93 = vld [vmem:[%s2 + $0x8] sm:$0xf]
    %v94 = vld [vmem:[%s2 + $0xc] sm:$0xf]
    %v95 = vld [vmem:[%s2 + $0x10] sm:$0xf]
    %v96 = vld [vmem:[%s2 + $0x14] sm:$0xf]
    %v97 = vld [vmem:[%s2 + $0x18] sm:$0xf]
    %v98 = vld [vmem:[%s2 + $0x1c] sm:$0xf]
    %v99 = vld [vmem:[%s2 + $0x20] sm:$0xf]
    %v100 = vld [vmem:[%s2 + $0x24] sm:$0xf]
    %v101 = vld [vmem:[%s2 + $0x28] sm:$0xf]
    %v102 = vld [vmem:[%s2 + $0x2c] sm:$0xf]
    %v103 = vld [vmem:[%s2 + $0x30] sm:$0xf]
    %v104 = vld [vmem:[%s2 + $0x34] sm:$0xf]
    %v105 = vld [vmem:[%s2 + $0x38] sm:$0xf]
    %v106 = vld [vmem:[%s2 + $0x3c] sm:$0xf]
    %v123 = vunpack.c.l.b16 %v91
    %v124 = vunpack.c.l.b16 %v92
    %v125 = vunpack.c.l.b16 %v93
    %v126 = vunpack.c.l.b16 %v94
    %v127 = vunpack.c.l.b16 %v95
    %v128 = vunpack.c.l.b16 %v96
    %v129 = vunpack.c.l.b16 %v97
    %v130 = vunpack.c.l.b16 %v98
    %v131 = vunpack.c.l.b16 %v99
    %v132 = vunpack.c.l.b16 %v100
    %v133 = vunpack.c.l.b16 %v101
    %v134 = vunpack.c.l.b16 %v102
    %v135 = vunpack.c.l.b16 %v103
    %v136 = vunpack.c.l.b16 %v104
    %v137 = vunpack.c.l.b16 %v105
    %v138 = vunpack.c.l.b16 %v106
    %v139 = vpack.c.b16 %v124, %v123
    %v140 = vpack.c.b16 %v126, %v125
    %v141 = vpack.c.b16 %v128, %v127
    %v142 = vpack.c.b16 %v130, %v129
    %v143 = vpack.c.b16 %v132, %v131
    %v144 = vpack.c.b16 %v134, %v133
    %v145 = vpack.c.b16 %v136, %v135
    %v146 = vpack.c.b16 %v138, %v137
    %155 = vmatprep.subr.bf16.mxu0 0
    %156 = vmatpush1.bf16.msra.mxu0 %v139
    %157 = vmatprep.subr.bf16.mxu0 0
    %158 = vmatpush1.bf16.msra.mxu0 %v140
    %159 = vmatprep.subr.bf16.mxu0 0
    %160 = vmatpush1.bf16.msra.mxu0 %v141
    %161 = vmatprep.subr.bf16.mxu0 0
    %162 = vmatpush1.bf16.msra.mxu0 %v142
    %163 = vmatprep.subr.bf16.mxu0 0
    %164 = vmatpush1.bf16.msra.mxu0 %v143
    %165 = vmatprep.subr.bf16.mxu0 0
    %166 = vmatpush1.bf16.msra.mxu0 %v144
    %167 = vmatprep.subr.bf16.mxu0 0
    %168 = vmatpush1.bf16.msra.mxu0 %v145
    %169 = vmatprep.subr.bf16.mxu0 0
    %170 = vmatpush1.bf16.msra.mxu0 %v146
    %171 = vmatprep.subr.bf16.mxu0 0
    %172 = vmatpush1.bf16.msra.mxu0 0
    %173 = vmatprep.subr.bf16.mxu0 0
    %174 = vmatpush1.bf16.msra.mxu0 0
    %175 = vmatprep.subr.bf16.mxu0 0
    %176 = vmatpush1.bf16.msra.mxu0 0
    %177 = vmatprep.subr.bf16.mxu0 0
    %178 = vmatpush1.bf16.msra.mxu0 0
    %179 = vmatprep.subr.bf16.mxu0 0
    %180 = vmatpush1.bf16.msra.mxu0 0
    %181 = vmatprep.subr.bf16.mxu0 0
    %182 = vmatpush1.bf16.msra.mxu0 0
    %183 = vmatprep.subr.bf16.mxu0 0
    %184 = vmatpush1.bf16.msra.mxu0 0
    %185 = vmatprep.subr.bf16.mxu0 0
    %186 = vmatpush1.bf16.msra.mxu0 0
    %187 = vmatprep.mubr.bf16.mxu0 0
    %188 = vmatmul.mubr.bf16.gmra.mrb[0].mxu0 %v90
    %v189 = vpop.f32.mrb[0].mxu0
    %v190 = vadd.f32 0.0, %v189
    %v191 = vpop.f32.mrb[0].mxu0
    %v192 = vpop.f32.mrb[0].mxu0
    %v193 = vadd.f32 0.0, %v192
    %v194 = vpop.f32.mrb[0].mxu0
    %195 = vdwg.mxu0
    %v196 = vpack.c.bf16 %v193, %v190
    %v197 = vld [vmem:[#allocation2] sm:$0xff]
    %v198 = vld [vmem:[#allocation2 + $0x8] sm:$0xff]
    %v199 = vld [vmem:[#allocation2 + $0x10] sm:$0xff]
    %v200 = vld [vmem:[#allocation2 + $0x18] sm:$0xff]
    %v201 = vld [vmem:[#allocation2 + $0x20] sm:$0xff]
    %v202 = vld [vmem:[#allocation2 + $0x28] sm:$0xff]
    %v203 = vld [vmem:[#allocation2 + $0x30] sm:$0xff]
    %v204 = vld [vmem:[#allocation2 + $0x38] sm:$0xff]
    %v205 = vld [vmem:[#allocation2 + $0x40] sm:$0xff]
    %v206 = vld [vmem:[#allocation2 + $0x48] sm:$0xff]
    %v207 = vld [vmem:[#allocation2 + $0x50] sm:$0xff]
    %v208 = vld [vmem:[#allocation2 + $0x58] sm:$0xff]
    %v209 = vld [vmem:[#allocation2 + $0x60] sm:$0xff]
    %v210 = vld [vmem:[#allocation2 + $0x68] sm:$0xff]
    %v211 = vld [vmem:[#allocation2 + $0x70] sm:$0xff]
    %v212 = vld [vmem:[#allocation2 + $0x78] sm:$0xff]
    %v213 = vld [vmem:[#allocation2 + $0x80] sm:$0xff]
    %v214 = vld [vmem:[#allocation2 + $0x88] sm:$0xff]
    %v215 = vld [vmem:[#allocation2 + $0x90] sm:$0xff]
    %v216 = vld [vmem:[#allocation2 + $0x98] sm:$0xff]
    %v217 = vld [vmem:[#allocation2 + $0xa0] sm:$0xff]
    %v218 = vld [vmem:[#allocation2 + $0xa8] sm:$0xff]
    %v219 = vld [vmem:[#allocation2 + $0xb0] sm:$0xff]
    %v220 = vld [vmem:[#allocation2 + $0xb8] sm:$0xff]
    %v221 = vld [vmem:[#allocation2 + $0xc0] sm:$0xff]
    %v222 = vld [vmem:[#allocation2 + $0xc8] sm:$0xff]
    %v223 = vld [vmem:[#allocation2 + $0xd0] sm:$0xff]
    %v224 = vld [vmem:[#allocation2 + $0xd8] sm:$0xff]
    %v225 = vld [vmem:[#allocation2 + $0xe0] sm:$0xff]
    %v226 = vld [vmem:[#allocation2 + $0xe8] sm:$0xff]
    %v227 = vld [vmem:[#allocation2 + $0xf0] sm:$0xff]
    %v228 = vld [vmem:[#allocation2 + $0xf8] sm:$0xff]
    %v229 = vld [vmem:[#allocation2 + $0x100] sm:$0xff]
    %v230 = vld [vmem:[#allocation2 + $0x108] sm:$0xff]
    %v231 = vld [vmem:[#allocation2 + $0x110] sm:$0xff]
    %v232 = vld [vmem:[#allocation2 + $0x118] sm:$0xff]
    %v233 = vld [vmem:[#allocation2 + $0x120] sm:$0xff]
    %v234 = vld [vmem:[#allocation2 + $0x128] sm:$0xff]
    %v235 = vld [vmem:[#allocation2 + $0x130] sm:$0xff]
    %v236 = vld [vmem:[#allocation2 + $0x138] sm:$0xff]
    %v237 = vld [vmem:[#allocation2 + $0x140] sm:$0xff]
    %v238 = vld [vmem:[#allocation2 + $0x148] sm:$0xff]
    %v239 = vld [vmem:[#allocation2 + $0x150] sm:$0xff]
    %v240 = vld [vmem:[#allocation2 + $0x158] sm:$0xff]
    %v241 = vld [vmem:[#allocation2 + $0x160] sm:$0xff]
    %v242 = vld [vmem:[#allocation2 + $0x168] sm:$0xff]
    %v243 = vld [vmem:[#allocation2 + $0x170] sm:$0xff]
    %v244 = vld [vmem:[#allocation2 + $0x178] sm:$0xff]
    %v245 = vld [vmem:[#allocation2 + $0x180] sm:$0xff]
    %v246 = vld [vmem:[#allocation2 + $0x188] sm:$0xff]
    %v247 = vld [vmem:[#allocation2 + $0x190] sm:$0xff]
    %v248 = vld [vmem:[#allocation2 + $0x198] sm:$0xff]
    %v249 = vld [vmem:[#allocation2 + $0x1a0] sm:$0xff]
    %v250 = vld [vmem:[#allocation2 + $0x1a8] sm:$0xff]
    %v251 = vld [vmem:[#allocation2 + $0x1b0] sm:$0xff]
    %v252 = vld [vmem:[#allocation2 + $0x1b8] sm:$0xff]
    %v253 = vld [vmem:[#allocation2 + $0x1c0] sm:$0xff]
    %v254 = vld [vmem:[#allocation2 + $0x1c8] sm:$0xff]
    %v255 = vld [vmem:[#allocation2 + $0x1d0] sm:$0xff]
    %v256 = vld [vmem:[#allocation2 + $0x1d8] sm:$0xff]
    %v257 = vld [vmem:[#allocation2 + $0x1e0] sm:$0xff]
    %v258 = vld [vmem:[#allocation2 + $0x1e8] sm:$0xff]
    %v259 = vld [vmem:[#allocation2 + $0x1f0] sm:$0xff]
    %v260 = vld [vmem:[#allocation2 + $0x1f8] sm:$0xff]
    %v261 = vld [vmem:[%s5] sm:$0xff]
    %v263 = vlaneseq
    %v264 = vshrl.u32 %v263, 7
    %v265 = vsub.s32 0, %v264
    %v266 = vrot.slane %v261, %v265
    %v267 = vlaneseq
    %v268 = vshrl.u32 %v267, 7
    %v269 = vsub.s32 1, %v268
    %v270 = vrot.slane %v261, %v269
    %v271 = vlaneseq
    %v272 = vshrl.u32 %v271, 7
    %v273 = vsub.s32 2, %v272
    %v274 = vrot.slane %v261, %v273
    %v275 = vlaneseq
    %v276 = vshrl.u32 %v275, 7
    %v277 = vsub.s32 3, %v276
    %v278 = vrot.slane %v261, %v277
    %v279 = vlaneseq
    %v280 = vshrl.u32 %v279, 7
    %v281 = vsub.s32 4, %v280
    %v282 = vrot.slane %v261, %v281
    %v283 = vlaneseq
    %v284 = vshrl.u32 %v283, 7
    %v285 = vsub.s32 5, %v284
    %v286 = vrot.slane %v261, %v285
    %v287 = vlaneseq
    %v288 = vshrl.u32 %v287, 7
    %v289 = vsub.s32 6, %v288
    %v290 = vrot.slane %v261, %v289
    %v291 = vlaneseq
    %v292 = vshrl.u32 %v291, 7
    %v293 = vsub.s32 7, %v292
    %v294 = vrot.slane %v261, %v293
    %v367 = vunpack.c.l.b16 %v197
    %v368 = vunpack.c.h.b16 %v197
    %v369 = vunpack.c.l.b16 %v198
    %v370 = vunpack.c.h.b16 %v198
    %v371 = vunpack.c.l.b16 %v199
    %v372 = vunpack.c.h.b16 %v199
    %v373 = vunpack.c.l.b16 %v200
    %v374 = vunpack.c.h.b16 %v200
    %v375 = vunpack.c.l.b16 %v201
    %v376 = vunpack.c.h.b16 %v201
    %v377 = vunpack.c.l.b16 %v202
    %v378 = vunpack.c.h.b16 %v202
    %v379 = vunpack.c.l.b16 %v203
    %v380 = vunpack.c.h.b16 %v203
    %v381 = vunpack.c.l.b16 %v204
    %v382 = vunpack.c.h.b16 %v204
    %v383 = vunpack.c.l.b16 %v205
    %v384 = vunpack.c.h.b16 %v205
    %v385 = vunpack.c.l.b16 %v206
    %v386 = vunpack.c.h.b16 %v206
    %v387 = vunpack.c.l.b16 %v207
    %v388 = vunpack.c.h.b16 %v207
    %v389 = vunpack.c.l.b16 %v208
    %v390 = vunpack.c.h.b16 %v208
    %v391 = vunpack.c.l.b16 %v209
    %v392 = vunpack.c.h.b16 %v209
    %v393 = vunpack.c.l.b16 %v210
    %v394 = vunpack.c.h.b16 %v210
    %v395 = vunpack.c.l.b16 %v211
    %v396 = vunpack.c.h.b16 %v211
    %v397 = vunpack.c.l.b16 %v212
    %v398 = vunpack.c.h.b16 %v212
    %v399 = vunpack.c.l.b16 %v213
    %v400 = vunpack.c.h.b16 %v213
    %v401 = vunpack.c.l.b16 %v214
    %v402 = vunpack.c.h.b16 %v214
    %v403 = vunpack.c.l.b16 %v215
    %v404 = vunpack.c.h.b16 %v215
    %v405 = vunpack.c.l.b16 %v216
    %v406 = vunpack.c.h.b16 %v216
    %v407 = vunpack.c.l.b16 %v217
    %v408 = vunpack.c.h.b16 %v217
    %v409 = vunpack.c.l.b16 %v218
    %v410 = vunpack.c.h.b16 %v218
    %v411 = vunpack.c.l.b16 %v219
    %v412 = vunpack.c.h.b16 %v219
    %v413 = vunpack.c.l.b16 %v220
    %v414 = vunpack.c.h.b16 %v220
    %v415 = vunpack.c.l.b16 %v221
    %v416 = vunpack.c.h.b16 %v221
    %v417 = vunpack.c.l.b16 %v222
    %v418 = vunpack.c.h.b16 %v222
    %v419 = vunpack.c.l.b16 %v223
    %v420 = vunpack.c.h.b16 %v223
    %v421 = vunpack.c.l.b16 %v224
    %v422 = vunpack.c.h.b16 %v224
    %v423 = vunpack.c.l.b16 %v225
    %v424 = vunpack.c.h.b16 %v225
    %v425 = vunpack.c.l.b16 %v226
    %v426 = vunpack.c.h.b16 %v226
    %v427 = vunpack.c.l.b16 %v227
    %v428 = vunpack.c.h.b16 %v227
    %v429 = vunpack.c.l.b16 %v228
    %v430 = vunpack.c.h.b16 %v228
    %v431 = vunpack.c.l.b16 %v229
    %v432 = vunpack.c.h.b16 %v229
    %v433 = vunpack.c.l.b16 %v230
    %v434 = vunpack.c.h.b16 %v230
    %v435 = vunpack.c.l.b16 %v231
    %v436 = vunpack.c.h.b16 %v231
    %v437 = vunpack.c.l.b16 %v232
    %v438 = vunpack.c.h.b16 %v232
    %v439 = vunpack.c.l.b16 %v233
    %v440 = vunpack.c.h.b16 %v233
    %v441 = vunpack.c.l.b16 %v234
    %v442 = vunpack.c.h.b16 %v234
    %v443 = vunpack.c.l.b16 %v235
    %v444 = vunpack.c.h.b16 %v235
    %v445 = vunpack.c.l.b16 %v236
    %v446 = vunpack.c.h.b16 %v236
    %v447 = vunpack.c.l.b16 %v237
    %v448 = vunpack.c.h.b16 %v237
    %v449 = vunpack.c.l.b16 %v238
    %v450 = vunpack.c.h.b16 %v238
    %v451 = vunpack.c.l.b16 %v239
    %v452 = vunpack.c.h.b16 %v239
    %v453 = vunpack.c.l.b16 %v240
    %v454 = vunpack.c.h.b16 %v240
    %v455 = vunpack.c.l.b16 %v241
    %v456 = vunpack.c.h.b16 %v241
    %v457 = vunpack.c.l.b16 %v242
    %v458 = vunpack.c.h.b16 %v242
    %v459 = vunpack.c.l.b16 %v243
    %v460 = vunpack.c.h.b16 %v243
    %v461 = vunpack.c.l.b16 %v244
    %v462 = vunpack.c.h.b16 %v244
    %v463 = vunpack.c.l.b16 %v245
    %v464 = vunpack.c.h.b16 %v245
    %v465 = vunpack.c.l.b16 %v246
    %v466 = vunpack.c.h.b16 %v246
    %v467 = vunpack.c.l.b16 %v247
    %v468 = vunpack.c.h.b16 %v247
    %v469 = vunpack.c.l.b16 %v248
    %v470 = vunpack.c.h.b16 %v248
    %v471 = vunpack.c.l.b16 %v249
    %v472 = vunpack.c.h.b16 %v249
    %v473 = vunpack.c.l.b16 %v250
    %v474 = vunpack.c.h.b16 %v250
    %v475 = vunpack.c.l.b16 %v251
    %v476 = vunpack.c.h.b16 %v251
    %v477 = vunpack.c.l.b16 %v252
    %v478 = vunpack.c.h.b16 %v252
    %v479 = vunpack.c.l.b16 %v253
    %v480 = vunpack.c.h.b16 %v253
    %v481 = vunpack.c.l.b16 %v254
    %v482 = vunpack.c.h.b16 %v254
    %v483 = vunpack.c.l.b16 %v255
    %v484 = vunpack.c.h.b16 %v255
    %v485 = vunpack.c.l.b16 %v256
    %v486 = vunpack.c.h.b16 %v256
    %v487 = vunpack.c.l.b16 %v257
    %v488 = vunpack.c.h.b16 %v257
    %v489 = vunpack.c.l.b16 %v258
    %v490 = vunpack.c.h.b16 %v258
    %v491 = vunpack.c.l.b16 %v259
    %v492 = vunpack.c.h.b16 %v259
    %v493 = vunpack.c.l.b16 %v260
    %v494 = vunpack.c.h.b16 %v260
    %v495 = vpack.c.b16 %v375, %v367
    %v496 = vpack.c.b16 %v376, %v368
    %v497 = vpack.c.b16 %v377, %v369
    %v498 = vpack.c.b16 %v378, %v370
    %v499 = vpack.c.b16 %v379, %v371
    %v500 = vpack.c.b16 %v380, %v372
    %v501 = vpack.c.b16 %v381, %v373
    %v502 = vpack.c.b16 %v382, %v374
    %v503 = vpack.c.b16 %v391, %v383
    %v504 = vpack.c.b16 %v392, %v384
    %v505 = vpack.c.b16 %v393, %v385
    %v506 = vpack.c.b16 %v394, %v386
    %v507 = vpack.c.b16 %v395, %v387
    %v508 = vpack.c.b16 %v396, %v388
    %v509 = vpack.c.b16 %v397, %v389
    %v510 = vpack.c.b16 %v398, %v390
    %v511 = vpack.c.b16 %v407, %v399
    %v512 = vpack.c.b16 %v408, %v400
    %v513 = vpack.c.b16 %v409, %v401
    %v514 = vpack.c.b16 %v410, %v402
    %v515 = vpack.c.b16 %v411, %v403
    %v516 = vpack.c.b16 %v412, %v404
    %v517 = vpack.c.b16 %v413, %v405
    %v518 = vpack.c.b16 %v414, %v406
    %v519 = vpack.c.b16 %v423, %v415
    %v520 = vpack.c.b16 %v424, %v416
    %v521 = vpack.c.b16 %v425, %v417
    %v522 = vpack.c.b16 %v426, %v418
    %v523 = vpack.c.b16 %v427, %v419
    %v524 = vpack.c.b16 %v428, %v420
    %v525 = vpack.c.b16 %v429, %v421
    %v526 = vpack.c.b16 %v430, %v422
    %v527 = vpack.c.b16 %v439, %v431
    %v528 = vpack.c.b16 %v440, %v432
    %v529 = vpack.c.b16 %v441, %v433
    %v530 = vpack.c.b16 %v442, %v434
    %v531 = vpack.c.b16 %v443, %v435
    %v532 = vpack.c.b16 %v444, %v436
    %v533 = vpack.c.b16 %v445, %v437
    %v534 = vpack.c.b16 %v446, %v438
    %v535 = vpack.c.b16 %v455, %v447
    %v536 = vpack.c.b16 %v456, %v448
    %v537 = vpack.c.b16 %v457, %v449
    %v538 = vpack.c.b16 %v458, %v450
    %v539 = vpack.c.b16 %v459, %v451
    %v540 = vpack.c.b16 %v460, %v452
    %v541 = vpack.c.b16 %v461, %v453
    %v542 = vpack.c.b16 %v462, %v454
    %v543 = vpack.c.b16 %v471, %v463
    %v544 = vpack.c.b16 %v472, %v464
    %v545 = vpack.c.b16 %v473, %v465
    %v546 = vpack.c.b16 %v474, %v466
    %v547 = vpack.c.b16 %v475, %v467
    %v548 = vpack.c.b16 %v476, %v468
    %v549 = vpack.c.b16 %v477, %v469
    %v550 = vpack.c.b16 %v478, %v470
    %v551 = vpack.c.b16 %v487, %v479
    %v552 = vpack.c.b16 %v488, %v480
    %v553 = vpack.c.b16 %v489, %v481
    %v554 = vpack.c.b16 %v490, %v482
    %v555 = vpack.c.b16 %v491, %v483
    %v556 = vpack.c.b16 %v492, %v484
    %v557 = vpack.c.b16 %v493, %v485
    %v558 = vpack.c.b16 %v494, %v486
    %623 = vmatprep.subr.bf16.mxu0 %v496
    %624 = vmatpush1.bf16.msra.mxu0 %v495
    %625 = vmatprep.subr.bf16.mxu0 %v504
    %626 = vmatpush1.bf16.msra.mxu0 %v503
    %627 = vmatprep.subr.bf16.mxu0 %v512
    %628 = vmatpush1.bf16.msra.mxu0 %v511
    %629 = vmatprep.subr.bf16.mxu0 %v520
    %630 = vmatpush1.bf16.msra.mxu0 %v519
    %631 = vmatprep.subr.bf16.mxu0 %v528
    %632 = vmatpush1.bf16.msra.mxu0 %v527
    %633 = vmatprep.subr.bf16.mxu0 %v536
    %634 = vmatpush1.bf16.msra.mxu0 %v535
    %635 = vmatprep.subr.bf16.mxu0 %v544
    %636 = vmatpush1.bf16.msra.mxu0 %v543
    %637 = vmatprep.subr.bf16.mxu0 %v552
    %638 = vmatpush1.bf16.msra.mxu0 %v551
    %639 = vmatprep.subr.bf16.mxu0 0
    %640 = vmatpush1.bf16.msra.mxu0 0
    %641 = vmatprep.subr.bf16.mxu0 0
    %642 = vmatpush1.bf16.msra.mxu0 0
    %643 = vmatprep.subr.bf16.mxu0 0
    %644 = vmatpush1.bf16.msra.mxu0 0
    %645 = vmatprep.subr.bf16.mxu0 0
    %646 = vmatpush1.bf16.msra.mxu0 0
    %647 = vmatprep.subr.bf16.mxu0 0
    %648 = vmatpush1.bf16.msra.mxu0 0
    %649 = vmatprep.subr.bf16.mxu0 0
    %650 = vmatpush1.bf16.msra.mxu0 0
    %651 = vmatprep.subr.bf16.mxu0 0
    %652 = vmatpush1.bf16.msra.mxu0 0
    %653 = vmatprep.subr.bf16.mxu0 0
    %654 = vmatpush1.bf16.msra.mxu0 0
    %655 = vmatprep.mubr.bf16.mxu0 0
    %656 = vmatmul.mubr.bf16.gmra.mrb[0].mxu0 %v196
    %v657 = vpop.f32.mrb[0].mxu0
    %v658 = vadd.f32 %v266, %v657
    %v659 = vpop.f32.mrb[0].mxu0
    %v660 = vadd.f32 %v270, %v659
    %v661 = vpop.f32.mrb[0].mxu0
    %v662 = vadd.f32 %v266, %v661
    %v663 = vpop.f32.mrb[0].mxu0
    %v664 = vadd.f32 %v270, %v663
    %665 = vdwg.mxu0
    %666 = vmatprep.subr.bf16.mxu0 %v498
    %667 = vmatpush1.bf16.msra.mxu0 %v497
    %668 = vmatprep.subr.bf16.mxu0 %v506
    %669 = vmatpush1.bf16.msra.mxu0 %v505
    %670 = vmatprep.subr.bf16.mxu0 %v514
    %671 = vmatpush1.bf16.msra.mxu0 %v513
    %672 = vmatprep.subr.bf16.mxu0 %v522
    %673 = vmatpush1.bf16.msra.mxu0 %v521
    %674 = vmatprep.subr.bf16.mxu0 %v530
    %675 = vmatpush1.bf16.msra.mxu0 %v529
    %676 = vmatprep.subr.bf16.mxu0 %v538
    %677 = vmatpush1.bf16.msra.mxu0 %v537
    %678 = vmatprep.subr.bf16.mxu0 %v546
    %679 = vmatpush1.bf16.msra.mxu0 %v545
    %680 = vmatprep.subr.bf16.mxu0 %v554
    %681 = vmatpush1.bf16.msra.mxu0 %v553
    %682 = vmatprep.subr.bf16.mxu0 0
    %683 = vmatpush1.bf16.msra.mxu0 0
    %684 = vmatprep.subr.bf16.mxu0 0
    %685 = vmatpush1.bf16.msra.mxu0 0
    %686 = vmatprep.subr.bf16.mxu0 0
    %687 = vmatpush1.bf16.msra.mxu0 0
    %688 = vmatprep.subr.bf16.mxu0 0
    %689 = vmatpush1.bf16.msra.mxu0 0
    %690 = vmatprep.subr.bf16.mxu0 0
    %691 = vmatpush1.bf16.msra.mxu0 0
    %692 = vmatprep.subr.bf16.mxu0 0
    %693 = vmatpush1.bf16.msra.mxu0 0
    %694 = vmatprep.subr.bf16.mxu0 0
    %695 = vmatpush1.bf16.msra.mxu0 0
    %696 = vmatprep.subr.bf16.mxu0 0
    %697 = vmatpush1.bf16.msra.mxu0 0
    %698 = vmatprep.mubr.bf16.mxu0 0
    %699 = vmatmul.mubr.bf16.gmra.mrb[0].mxu0 %v196
    %v700 = vpop.f32.mrb[0].mxu0
    %v701 = vadd.f32 %v274, %v700
    %v702 = vpop.f32.mrb[0].mxu0
    %v703 = vadd.f32 %v278, %v702
    %v704 = vpop.f32.mrb[0].mxu0
    %v705 = vadd.f32 %v274, %v704
    %v706 = vpop.f32.mrb[0].mxu0
    %v707 = vadd.f32 %v278, %v706
    %708 = vdwg.mxu0
    %709 = vmatprep.subr.bf16.mxu0 %v500
    %710 = vmatpush1.bf16.msra.mxu0 %v499
    %711 = vmatprep.subr.bf16.mxu0 %v508
    %712 = vmatpush1.bf16.msra.mxu0 %v507
    %713 = vmatprep.subr.bf16.mxu0 %v516
    %714 = vmatpush1.bf16.msra.mxu0 %v515
    %715 = vmatprep.subr.bf16.mxu0 %v524
    %716 = vmatpush1.bf16.msra.mxu0 %v523
    %717 = vmatprep.subr.bf16.mxu0 %v532
    %718 = vmatpush1.bf16.msra.mxu0 %v531
    %719 = vmatprep.subr.bf16.mxu0 %v540
    %720 = vmatpush1.bf16.msra.mxu0 %v539
    %721 = vmatprep.subr.bf16.mxu0 %v548
    %722 = vmatpush1.bf16.msra.mxu0 %v547
    %723 = vmatprep.subr.bf16.mxu0 %v556
    %724 = vmatpush1.bf16.msra.mxu0 %v555
    %725 = vmatprep.subr.bf16.mxu0 0
    %726 = vmatpush1.bf16.msra.mxu0 0
    %727 = vmatprep.subr.bf16.mxu0 0
    %728 = vmatpush1.bf16.msra.mxu0 0
    %729 = vmatprep.subr.bf16.mxu0 0
    %730 = vmatpush1.bf16.msra.mxu0 0
    %731 = vmatprep.subr.bf16.mxu0 0
    %732 = vmatpush1.bf16.msra.mxu0 0
    %733 = vmatprep.subr.bf16.mxu0 0
    %734 = vmatpush1.bf16.msra.mxu0 0
    %735 = vmatprep.subr.bf16.mxu0 0
    %736 = vmatpush1.bf16.msra.mxu0 0
    %737 = vmatprep.subr.bf16.mxu0 0
    %738 = vmatpush1.bf16.msra.mxu0 0
    %739 = vmatprep.subr.bf16.mxu0 0
    %740 = vmatpush1.bf16.msra.mxu0 0
    %741 = vmatprep.mubr.bf16.mxu0 0
    %742 = vmatmul.mubr.bf16.gmra.mrb[0].mxu0 %v196
    %v743 = vpop.f32.mrb[0].mxu0
    %v744 = vadd.f32 %v282, %v743
    %v745 = vpop.f32.mrb[0].mxu0
    %v746 = vadd.f32 %v286, %v745
    %v747 = vpop.f32.mrb[0].mxu0
    %v748 = vadd.f32 %v282, %v747
    %v749 = vpop.f32.mrb[0].mxu0
    %v750 = vadd.f32 %v286, %v749
    %751 = vdwg.mxu0
    %752 = vmatprep.subr.bf16.mxu0 %v502
    %753 = vmatpush1.bf16.msra.mxu0 %v501
    %754 = vmatprep.subr.bf16.mxu0 %v510
    %755 = vmatpush1.bf16.msra.mxu0 %v509
    %756 = vmatprep.subr.bf16.mxu0 %v518
    %757 = vmatpush1.bf16.msra.mxu0 %v517
    %758 = vmatprep.subr.bf16.mxu0 %v526
    %759 = vmatpush1.bf16.msra.mxu0 %v525
    %760 = vmatprep.subr.bf16.mxu0 %v534
    %761 = vmatpush1.bf16.msra.mxu0 %v533
    %762 = vmatprep.subr.bf16.mxu0 %v542
    %763 = vmatpush1.bf16.msra.mxu0 %v541
    %764 = vmatprep.subr.bf16.mxu0 %v550
    %765 = vmatpush1.bf16.msra.mxu0 %v549
    %766 = vmatprep.subr.bf16.mxu0 %v558
    %767 = vmatpush1.bf16.msra.mxu0 %v557
    %768 = vmatprep.subr.bf16.mxu0 0
    %769 = vmatpush1.bf16.msra.mxu0 0
    %770 = vmatprep.subr.bf16.mxu0 0
    %771 = vmatpush1.bf16.msra.mxu0 0
    %772 = vmatprep.subr.bf16.mxu0 0
    %773 = vmatpush1.bf16.msra.mxu0 0
    %774 = vmatprep.subr.bf16.mxu0 0
    %775 = vmatpush1.bf16.msra.mxu0 0
    %776 = vmatprep.subr.bf16.mxu0 0
    %777 = vmatpush1.bf16.msra.mxu0 0
    %778 = vmatprep.subr.bf16.mxu0 0
    %779 = vmatpush1.bf16.msra.mxu0 0
    %780 = vmatprep.subr.bf16.mxu0 0
    %781 = vmatpush1.bf16.msra.mxu0 0
    %782 = vmatprep.subr.bf16.mxu0 0
    %783 = vmatpush1.bf16.msra.mxu0 0
    %784 = vmatprep.mubr.bf16.mxu0 0
    %785 = vmatmul.mubr.bf16.gmra.mrb[0].mxu0 %v196
    %v786 = vpop.f32.mrb[0].mxu0
    %v787 = vadd.f32 %v290, %v786
    %v788 = vpop.f32.mrb[0].mxu0
    %v789 = vadd.f32 %v294, %v788
    %v790 = vpop.f32.mrb[0].mxu0
    %v791 = vadd.f32 %v290, %v790
    %v792 = vpop.f32.mrb[0].mxu0
    %v793 = vadd.f32 %v294, %v792
    %794 = vdwg.mxu0
    %v795 = vld [vmem:[#allocation5] sm:$0xff]
    %v796 = vld [vmem:[#allocation5 + $0x8] sm:$0xff]
    %v797 = vld [vmem:[#allocation5 + $0x10] sm:$0xff]
    %v798 = vld [vmem:[#allocation5 + $0x18] sm:$0xff]
    %v799 = vld [vmem:[#allocation5 + $0x20] sm:$0xff]
    %v800 = vld [vmem:[#allocation5 + $0x28] sm:$0xff]
    %v801 = vld [vmem:[#allocation5 + $0x30] sm:$0xff]
    %v802 = vld [vmem:[#allocation5 + $0x38] sm:$0xff]
    %v803 = vld [vmem:[#allocation5 + $0x40] sm:$0xff]
    %v804 = vld [vmem:[#allocation5 + $0x48] sm:$0xff]
    %v805 = vld [vmem:[#allocation5 + $0x50] sm:$0xff]
    %v806 = vld [vmem:[#allocation5 + $0x58] sm:$0xff]
    %v807 = vld [vmem:[#allocation5 + $0x60] sm:$0xff]
    %v808 = vld [vmem:[#allocation5 + $0x68] sm:$0xff]
    %v809 = vld [vmem:[#allocation5 + $0x70] sm:$0xff]
    %v810 = vld [vmem:[#allocation5 + $0x78] sm:$0xff]
    %v811 = vld [vmem:[#allocation5 + $0x80] sm:$0xff]
    %v812 = vld [vmem:[#allocation5 + $0x88] sm:$0xff]
    %v813 = vld [vmem:[#allocation5 + $0x90] sm:$0xff]
    %v814 = vld [vmem:[#allocation5 + $0x98] sm:$0xff]
    %v815 = vld [vmem:[#allocation5 + $0xa0] sm:$0xff]
    %v816 = vld [vmem:[#allocation5 + $0xa8] sm:$0xff]
    %v817 = vld [vmem:[#allocation5 + $0xb0] sm:$0xff]
    %v818 = vld [vmem:[#allocation5 + $0xb8] sm:$0xff]
    %v819 = vld [vmem:[#allocation5 + $0xc0] sm:$0xff]
    %v820 = vld [vmem:[#allocation5 + $0xc8] sm:$0xff]
    %v821 = vld [vmem:[#allocation5 + $0xd0] sm:$0xff]
    %v822 = vld [vmem:[#allocation5 + $0xd8] sm:$0xff]
    %v823 = vld [vmem:[#allocation5 + $0xe0] sm:$0xff]
    %v824 = vld [vmem:[#allocation5 + $0xe8] sm:$0xff]
    %v825 = vld [vmem:[#allocation5 + $0xf0] sm:$0xff]
    %v826 = vld [vmem:[#allocation5 + $0xf8] sm:$0xff]
    %v827 = vld [vmem:[#allocation5 + $0x100] sm:$0xff]
    %v828 = vld [vmem:[#allocation5 + $0x108] sm:$0xff]
    %v829 = vld [vmem:[#allocation5 + $0x110] sm:$0xff]
    %v830 = vld [vmem:[#allocation5 + $0x118] sm:$0xff]
    %v831 = vld [vmem:[#allocation5 + $0x120] sm:$0xff]
    %v832 = vld [vmem:[#allocation5 + $0x128] sm:$0xff]
    %v833 = vld [vmem:[#allocation5 + $0x130] sm:$0xff]
    %v834 = vld [vmem:[#allocation5 + $0x138] sm:$0xff]
    %v835 = vld [vmem:[#allocation5 + $0x140] sm:$0xff]
    %v836 = vld [vmem:[#allocation5 + $0x148] sm:$0xff]
    %v837 = vld [vmem:[#allocation5 + $0x150] sm:$0xff]
    %v838 = vld [vmem:[#allocation5 + $0x158] sm:$0xff]
    %v839 = vld [vmem:[#allocation5 + $0x160] sm:$0xff]
    %v840 = vld [vmem:[#allocation5 + $0x168] sm:$0xff]
    %v841 = vld [vmem:[#allocation5 + $0x170] sm:$0xff]
    %v842 = vld [vmem:[#allocation5 + $0x178] sm:$0xff]
    %v843 = vld [vmem:[#allocation5 + $0x180] sm:$0xff]
    %v844 = vld [vmem:[#allocation5 + $0x188] sm:$0xff]
    %v845 = vld [vmem:[#allocation5 + $0x190] sm:$0xff]
    %v846 = vld [vmem:[#allocation5 + $0x198] sm:$0xff]
    %v847 = vld [vmem:[#allocation5 + $0x1a0] sm:$0xff]
    %v848 = vld [vmem:[#allocation5 + $0x1a8] sm:$0xff]
    %v849 = vld [vmem:[#allocation5 + $0x1b0] sm:$0xff]
    %v850 = vld [vmem:[#allocation5 + $0x1b8] sm:$0xff]
    %v851 = vld [vmem:[#allocation5 + $0x1c0] sm:$0xff]
    %v852 = vld [vmem:[#allocation5 + $0x1c8] sm:$0xff]
    %v853 = vld [vmem:[#allocation5 + $0x1d0] sm:$0xff]
    %v854 = vld [vmem:[#allocation5 + $0x1d8] sm:$0xff]
    %v855 = vld [vmem:[#allocation5 + $0x1e0] sm:$0xff]
    %v856 = vld [vmem:[#allocation5 + $0x1e8] sm:$0xff]
    %v857 = vld [vmem:[#allocation5 + $0x1f0] sm:$0xff]
    %v858 = vld [vmem:[#allocation5 + $0x1f8] sm:$0xff]
    %v859 = vld [vmem:[#allocation5 + $0x200] sm:$0xff]
    %v860 = vld [vmem:[#allocation5 + $0x208] sm:$0xff]
    %v861 = vld [vmem:[#allocation5 + $0x210] sm:$0xff]
    %v862 = vld [vmem:[#allocation5 + $0x218] sm:$0xff]
    %v863 = vld [vmem:[#allocation5 + $0x220] sm:$0xff]
    %v864 = vld [vmem:[#allocation5 + $0x228] sm:$0xff]
    %v865 = vld [vmem:[#allocation5 + $0x230] sm:$0xff]
    %v866 = vld [vmem:[#allocation5 + $0x238] sm:$0xff]
    %v867 = vld [vmem:[#allocation5 + $0x240] sm:$0xff]
    %v868 = vld [vmem:[#allocation5 + $0x248] sm:$0xff]
    %v869 = vld [vmem:[#allocation5 + $0x250] sm:$0xff]
    %v870 = vld [vmem:[#allocation5 + $0x258] sm:$0xff]
    %v871 = vld [vmem:[#allocation5 + $0x260] sm:$0xff]
    %v872 = vld [vmem:[#allocation5 + $0x268] sm:$0xff]
    %v873 = vld [vmem:[#allocation5 + $0x270] sm:$0xff]
    %v874 = vld [vmem:[#allocation5 + $0x278] sm:$0xff]
    %v875 = vld [vmem:[#allocation5 + $0x280] sm:$0xff]
    %v876 = vld [vmem:[#allocation5 + $0x288] sm:$0xff]
    %v877 = vld [vmem:[#allocation5 + $0x290] sm:$0xff]
    %v878 = vld [vmem:[#allocation5 + $0x298] sm:$0xff]
    %v879 = vld [vmem:[#allocation5 + $0x2a0] sm:$0xff]
    %v880 = vld [vmem:[#allocation5 + $0x2a8] sm:$0xff]
    %v881 = vld [vmem:[#allocation5 + $0x2b0] sm:$0xff]
    %v882 = vld [vmem:[#allocation5 + $0x2b8] sm:$0xff]
    %v883 = vld [vmem:[#allocation5 + $0x2c0] sm:$0xff]
    %v884 = vld [vmem:[#allocation5 + $0x2c8] sm:$0xff]
    %v885 = vld [vmem:[#allocation5 + $0x2d0] sm:$0xff]
    %v886 = vld [vmem:[#allocation5 + $0x2d8] sm:$0xff]
    %v887 = vld [vmem:[#allocation5 + $0x2e0] sm:$0xff]
    %v888 = vld [vmem:[#allocation5 + $0x2e8] sm:$0xff]
    %v889 = vld [vmem:[#allocation5 + $0x2f0] sm:$0xff]
    %v890 = vld [vmem:[#allocation5 + $0x2f8] sm:$0xff]
    %v891 = vld [vmem:[#allocation5 + $0x300] sm:$0xff]
    %v892 = vld [vmem:[#allocation5 + $0x308] sm:$0xff]
    %v893 = vld [vmem:[#allocation5 + $0x310] sm:$0xff]
    %v894 = vld [vmem:[#allocation5 + $0x318] sm:$0xff]
    %v895 = vld [vmem:[#allocation5 + $0x320] sm:$0xff]
    %v896 = vld [vmem:[#allocation5 + $0x328] sm:$0xff]
    %v897 = vld [vmem:[#allocation5 + $0x330] sm:$0xff]
    %v898 = vld [vmem:[#allocation5 + $0x338] sm:$0xff]
    %v899 = vld [vmem:[#allocation5 + $0x340] sm:$0xff]
    %v900 = vld [vmem:[#allocation5 + $0x348] sm:$0xff]
    %v901 = vld [vmem:[#allocation5 + $0x350] sm:$0xff]
    %v902 = vld [vmem:[#allocation5 + $0x358] sm:$0xff]
    %v903 = vld [vmem:[#allocation5 + $0x360] sm:$0xff]
    %v904 = vld [vmem:[#allocation5 + $0x368] sm:$0xff]
    %v905 = vld [vmem:[#allocation5 + $0x370] sm:$0xff]
    %v906 = vld [vmem:[#allocation5 + $0x378] sm:$0xff]
    %v907 = vld [vmem:[#allocation5 + $0x380] sm:$0xff]
    %v908 = vld [vmem:[#allocation5 + $0x388] sm:$0xff]
    %v909 = vld [vmem:[#allocation5 + $0x390] sm:$0xff]
    %v910 = vld [vmem:[#allocation5 + $0x398] sm:$0xff]
    %v911 = vld [vmem:[#allocation5 + $0x3a0] sm:$0xff]
    %v912 = vld [vmem:[#allocation5 + $0x3a8] sm:$0xff]
    %v913 = vld [vmem:[#allocation5 + $0x3b0] sm:$0xff]
    %v914 = vld [vmem:[#allocation5 + $0x3b8] sm:$0xff]
    %v915 = vld [vmem:[#allocation5 + $0x3c0] sm:$0xff]
    %v916 = vld [vmem:[#allocation5 + $0x3c8] sm:$0xff]
    %v917 = vld [vmem:[#allocation5 + $0x3d0] sm:$0xff]
    %v918 = vld [vmem:[#allocation5 + $0x3d8] sm:$0xff]
    %v919 = vld [vmem:[#allocation5 + $0x3e0] sm:$0xff]
    %v920 = vld [vmem:[#allocation5 + $0x3e8] sm:$0xff]
    %v921 = vld [vmem:[#allocation5 + $0x3f0] sm:$0xff]
    %v922 = vld [vmem:[#allocation5 + $0x3f8] sm:$0xff]
    %v1051 = vunpack.c.l.b16 %v795
    %v1052 = vunpack.c.h.b16 %v795
    %v1053 = vunpack.c.l.b16 %v796
    %v1054 = vunpack.c.h.b16 %v796
    %v1055 = vunpack.c.l.b16 %v797
    %v1056 = vunpack.c.h.b16 %v797
    %v1057 = vunpack.c.l.b16 %v798
    %v1058 = vunpack.c.h.b16 %v798
    %v1059 = vunpack.c.l.b16 %v799
    %v1060 = vunpack.c.h.b16 %v799
    %v1061 = vunpack.c.l.b16 %v800
    %v1062 = vunpack.c.h.b16 %v800
    %v1063 = vunpack.c.l.b16 %v801
    %v1064 = vunpack.c.h.b16 %v801
    %v1065 = vunpack.c.l.b16 %v802
    %v1066 = vunpack.c.h.b16 %v802
    %v1067 = vunpack.c.l.b16 %v803
    %v1068 = vunpack.c.h.b16 %v803
    %v1069 = vunpack.c.l.b16 %v804
    %v1070 = vunpack.c.h.b16 %v804
    %v1071 = vunpack.c.l.b16 %v805
    %v1072 = vunpack.c.h.b16 %v805
    %v1073 = vunpack.c.l.b16 %v806
    %v1074 = vunpack.c.h.b16 %v806
    %v1075 = vunpack.c.l.b16 %v807
    %v1076 = vunpack.c.h.b16 %v807
    %v1077 = vunpack.c.l.b16 %v808
    %v1078 = vunpack.c.h.b16 %v808
    %v1079 = vunpack.c.l.b16 %v809
    %v1080 = vunpack.c.h.b16 %v809
    %v1081 = vunpack.c.l.b16 %v810
    %v1082 = vunpack.c.h.b16 %v810
    %v1083 = vunpack.c.l.b16 %v811
    %v1084 = vunpack.c.h.b16 %v811
    %v1085 = vunpack.c.l.b16 %v812
    %v1086 = vunpack.c.h.b16 %v812
    %v1087 = vunpack.c.l.b16 %v813
    %v1088 = vunpack.c.h.b16 %v813
    %v1089 = vunpack.c.l.b16 %v814
    %v1090 = vunpack.c.h.b16 %v814
    %v1091 = vunpack.c.l.b16 %v815
    %v1092 = vunpack.c.h.b16 %v815
    %v1093 = vunpack.c.l.b16 %v816
    %v1094 = vunpack.c.h.b16 %v816
    %v1095 = vunpack.c.l.b16 %v817
    %v1096 = vunpack.c.h.b16 %v817
    %v1097 = vunpack.c.l.b16 %v818
    %v1098 = vunpack.c.h.b16 %v818
    %v1099 = vunpack.c.l.b16 %v819
    %v1100 = vunpack.c.h.b16 %v819
    %v1101 = vunpack.c.l.b16 %v820
    %v1102 = vunpack.c.h.b16 %v820
    %v1103 = vunpack.c.l.b16 %v821
    %v1104 = vunpack.c.h.b16 %v821
    %v1105 = vunpack.c.l.b16 %v822
    %v1106 = vunpack.c.h.b16 %v822
    %v1107 = vunpack.c.l.b16 %v823
    %v1108 = vunpack.c.h.b16 %v823
    %v1109 = vunpack.c.l.b16 %v824
    %v1110 = vunpack.c.h.b16 %v824
    %v1111 = vunpack.c.l.b16 %v825
    %v1112 = vunpack.c.h.b16 %v825
    %v1113 = vunpack.c.l.b16 %v826
    %v1114 = vunpack.c.h.b16 %v826
    %v1115 = vunpack.c.l.b16 %v827
    %v1116 = vunpack.c.h.b16 %v827
    %v1117 = vunpack.c.l.b16 %v828
    %v1118 = vunpack.c.h.b16 %v828
    %v1119 = vunpack.c.l.b16 %v829
    %v1120 = vunpack.c.h.b16 %v829
    %v1121 = vunpack.c.l.b16 %v830
    %v1122 = vunpack.c.h.b16 %v830
    %v1123 = vunpack.c.l.b16 %v831
    %v1124 = vunpack.c.h.b16 %v831
    %v1125 = vunpack.c.l.b16 %v832
    %v1126 = vunpack.c.h.b16 %v832
    %v1127 = vunpack.c.l.b16 %v833
    %v1128 = vunpack.c.h.b16 %v833
    %v1129 = vunpack.c.l.b16 %v834
    %v1130 = vunpack.c.h.b16 %v834
    %v1131 = vunpack.c.l.b16 %v835
    %v1132 = vunpack.c.h.b16 %v835
    %v1133 = vunpack.c.l.b16 %v836
    %v1134 = vunpack.c.h.b16 %v836
    %v1135 = vunpack.c.l.b16 %v837
    %v1136 = vunpack.c.h.b16 %v837
    %v1137 = vunpack.c.l.b16 %v838
    %v1138 = vunpack.c.h.b16 %v838
    %v1139 = vunpack.c.l.b16 %v839
    %v1140 = vunpack.c.h.b16 %v839
    %v1141 = vunpack.c.l.b16 %v840
    %v1142 = vunpack.c.h.b16 %v840
    %v1143 = vunpack.c.l.b16 %v841
    %v1144 = vunpack.c.h.b16 %v841
    %v1145 = vunpack.c.l.b16 %v842
    %v1146 = vunpack.c.h.b16 %v842
    %v1147 = vunpack.c.l.b16 %v843
    %v1148 = vunpack.c.h.b16 %v843
    %v1149 = vunpack.c.l.b16 %v844
    %v1150 = vunpack.c.h.b16 %v844
    %v1151 = vunpack.c.l.b16 %v845
    %v1152 = vunpack.c.h.b16 %v845
    %v1153 = vunpack.c.l.b16 %v846
    %v1154 = vunpack.c.h.b16 %v846
    %v1155 = vunpack.c.l.b16 %v847
    %v1156 = vunpack.c.h.b16 %v847
    %v1157 = vunpack.c.l.b16 %v848
    %v1158 = vunpack.c.h.b16 %v848
    %v1159 = vunpack.c.l.b16 %v849
    %v1160 = vunpack.c.h.b16 %v849
    %v1161 = vunpack.c.l.b16 %v850
    %v1162 = vunpack.c.h.b16 %v850
    %v1163 = vunpack.c.l.b16 %v851
    %v1164 = vunpack.c.h.b16 %v851
    %v1165 = vunpack.c.l.b16 %v852
    %v1166 = vunpack.c.h.b16 %v852
    %v1167 = vunpack.c.l.b16 %v853
    %v1168 = vunpack.c.h.b16 %v853
    %v1169 = vunpack.c.l.b16 %v854
    %v1170 = vunpack.c.h.b16 %v854
    %v1171 = vunpack.c.l.b16 %v855
    %v1172 = vunpack.c.h.b16 %v855
    %v1173 = vunpack.c.l.b16 %v856
    %v1174 = vunpack.c.h.b16 %v856
    %v1175 = vunpack.c.l.b16 %v857
    %v1176 = vunpack.c.h.b16 %v857
    %v1177 = vunpack.c.l.b16 %v858
    %v1178 = vunpack.c.h.b16 %v858
    %v1179 = vunpack.c.l.b16 %v859
    %v1180 = vunpack.c.h.b16 %v859
    %v1181 = vunpack.c.l.b16 %v860
    %v1182 = vunpack.c.h.b16 %v860
    %v1183 = vunpack.c.l.b16 %v861
    %v1184 = vunpack.c.h.b16 %v861
    %v1185 = vunpack.c.l.b16 %v862
    %v1186 = vunpack.c.h.b16 %v862
    %v1187 = vunpack.c.l.b16 %v863
    %v1188 = vunpack.c.h.b16 %v863
    %v1189 = vunpack.c.l.b16 %v864
    %v1190 = vunpack.c.h.b16 %v864
    %v1191 = vunpack.c.l.b16 %v865
    %v1192 = vunpack.c.h.b16 %v865
    %v1193 = vunpack.c.l.b16 %v866
    %v1194 = vunpack.c.h.b16 %v866
    %v1195 = vunpack.c.l.b16 %v867
    %v1196 = vunpack.c.h.b16 %v867
    %v1197 = vunpack.c.l.b16 %v868
    %v1198 = vunpack.c.h.b16 %v868
    %v1199 = vunpack.c.l.b16 %v869
    %v1200 = vunpack.c.h.b16 %v869
    %v1201 = vunpack.c.l.b16 %v870
    %v1202 = vunpack.c.h.b16 %v870
    %v1203 = vunpack.c.l.b16 %v871
    %v1204 = vunpack.c.h.b16 %v871
    %v1205 = vunpack.c.l.b16 %v872
    %v1206 = vunpack.c.h.b16 %v872
    %v1207 = vunpack.c.l.b16 %v873
    %v1208 = vunpack.c.h.b16 %v873
    %v1209 = vunpack.c.l.b16 %v874
    %v1210 = vunpack.c.h.b16 %v874
    %v1211 = vunpack.c.l.b16 %v875
    %v1212 = vunpack.c.h.b16 %v875
    %v1213 = vunpack.c.l.b16 %v876
    %v1214 = vunpack.c.h.b16 %v876
    %v1215 = vunpack.c.l.b16 %v877
    %v1216 = vunpack.c.h.b16 %v877
    %v1217 = vunpack.c.l.b16 %v878
    %v1218 = vunpack.c.h.b16 %v878
    %v1219 = vunpack.c.l.b16 %v879
    %v1220 = vunpack.c.h.b16 %v879
    %v1221 = vunpack.c.l.b16 %v880
    %v1222 = vunpack.c.h.b16 %v880
    %v1223 = vunpack.c.l.b16 %v881
    %v1224 = vunpack.c.h.b16 %v881
    %v1225 = vunpack.c.l.b16 %v882
    %v1226 = vunpack.c.h.b16 %v882
    %v1227 = vunpack.c.l.b16 %v883
    %v1228 = vunpack.c.h.b16 %v883
    %v1229 = vunpack.c.l.b16 %v884
    %v1230 = vunpack.c.h.b16 %v884
    %v1231 = vunpack.c.l.b16 %v885
    %v1232 = vunpack.c.h.b16 %v885
    %v1233 = vunpack.c.l.b16 %v886
    %v1234 = vunpack.c.h.b16 %v886
    %v1235 = vunpack.c.l.b16 %v887
    %v1236 = vunpack.c.h.b16 %v887
    %v1237 = vunpack.c.l.b16 %v888
    %v1238 = vunpack.c.h.b16 %v888
    %v1239 = vunpack.c.l.b16 %v889
    %v1240 = vunpack.c.h.b16 %v889
    %v1241 = vunpack.c.l.b16 %v890
    %v1242 = vunpack.c.h.b16 %v890
    %v1243 = vunpack.c.l.b16 %v891
    %v1244 = vunpack.c.h.b16 %v891
    %v1245 = vunpack.c.l.b16 %v892
    %v1246 = vunpack.c.h.b16 %v892
    %v1247 = vunpack.c.l.b16 %v893
    %v1248 = vunpack.c.h.b16 %v893
    %v1249 = vunpack.c.l.b16 %v894
    %v1250 = vunpack.c.h.b16 %v894
    %v1251 = vunpack.c.l.b16 %v895
    %v1252 = vunpack.c.h.b16 %v895
    %v1253 = vunpack.c.l.b16 %v896
    %v1254 = vunpack.c.h.b16 %v896
    %v1255 = vunpack.c.l.b16 %v897
    %v1256 = vunpack.c.h.b16 %v897
    %v1257 = vunpack.c.l.b16 %v898
    %v1258 = vunpack.c.h.b16 %v898
    %v1259 = vunpack.c.l.b16 %v899
    %v1260 = vunpack.c.h.b16 %v899
    %v1261 = vunpack.c.l.b16 %v900
    %v1262 = vunpack.c.h.b16 %v900
    %v1263 = vunpack.c.l.b16 %v901
    %v1264 = vunpack.c.h.b16 %v901
    %v1265 = vunpack.c.l.b16 %v902
    %v1266 = vunpack.c.h.b16 %v902
    %v1267 = vunpack.c.l.b16 %v903
    %v1268 = vunpack.c.h.b16 %v903
    %v1269 = vunpack.c.l.b16 %v904
    %v1270 = vunpack.c.h.b16 %v904
    %v1271 = vunpack.c.l.b16 %v905
    %v1272 = vunpack.c.h.b16 %v905
    %v1273 = vunpack.c.l.b16 %v906
    %v1274 = vunpack.c.h.b16 %v906
    %v1275 = vunpack.c.l.b16 %v907
    %v1276 = vunpack.c.h.b16 %v907
    %v1277 = vunpack.c.l.b16 %v908
    %v1278 = vunpack.c.h.b16 %v908
    %v1279 = vunpack.c.l.b16 %v909
    %v1280 = vunpack.c.h.b16 %v909
    %v1281 = vunpack.c.l.b16 %v910
    %v1282 = vunpack.c.h.b16 %v910
    %v1283 = vunpack.c.l.b16 %v911
    %v1284 = vunpack.c.h.b16 %v911
    %v1285 = vunpack.c.l.b16 %v912
    %v1286 = vunpack.c.h.b16 %v912
    %v1287 = vunpack.c.l.b16 %v913
    %v1288 = vunpack.c.h.b16 %v913
    %v1289 = vunpack.c.l.b16 %v914
    %v1290 = vunpack.c.h.b16 %v914
    %v1291 = vunpack.c.l.b16 %v915
    %v1292 = vunpack.c.h.b16 %v915
    %v1293 = vunpack.c.l.b16 %v916
    %v1294 = vunpack.c.h.b16 %v916
    %v1295 = vunpack.c.l.b16 %v917
    %v1296 = vunpack.c.h.b16 %v917
    %v1297 = vunpack.c.l.b16 %v918
    %v1298 = vunpack.c.h.b16 %v918
    %v1299 = vunpack.c.l.b16 %v919
    %v1300 = vunpack.c.h.b16 %v919
    %v1301 = vunpack.c.l.b16 %v920
    %v1302 = vunpack.c.h.b16 %v920
    %v1303 = vunpack.c.l.b16 %v921
    %v1304 = vunpack.c.h.b16 %v921
    %v1305 = vunpack.c.l.b16 %v922
    %v1306 = vunpack.c.h.b16 %v922
    %v1307 = vpack.c.b16 %v1059, %v1051
    %v1308 = vpack.c.b16 %v1060, %v1052
    %v1309 = vpack.c.b16 %v1061, %v1053
    %v1310 = vpack.c.b16 %v1062, %v1054
    %v1311 = vpack.c.b16 %v1063, %v1055
    %v1312 = vpack.c.b16 %v1064, %v1056
    %v1313 = vpack.c.b16 %v1065, %v1057
    %v1314 = vpack.c.b16 %v1066, %v1058
    %v1315 = vpack.c.b16 %v1075, %v1067
    %v1316 = vpack.c.b16 %v1076, %v1068
    %v1317 = vpack.c.b16 %v1077, %v1069
    %v1318 = vpack.c.b16 %v1078, %v1070
    %v1319 = vpack.c.b16 %v1079, %v1071
    %v1320 = vpack.c.b16 %v1080, %v1072
    %v1321 = vpack.c.b16 %v1081, %v1073
    %v1322 = vpack.c.b16 %v1082, %v1074
    %v1323 = vpack.c.b16 %v1091, %v1083
    %v1324 = vpack.c.b16 %v1092, %v1084
    %v1325 = vpack.c.b16 %v1093, %v1085
    %v1326 = vpack.c.b16 %v1094, %v1086
    %v1327 = vpack.c.b16 %v1095, %v1087
    %v1328 = vpack.c.b16 %v1096, %v1088
    %v1329 = vpack.c.b16 %v1097, %v1089
    %v1330 = vpack.c.b16 %v1098, %v1090
    %v1331 = vpack.c.b16 %v1107, %v1099
    %v1332 = vpack.c.b16 %v1108, %v1100
    %v1333 = vpack.c.b16 %v1109, %v1101
    %v1334 = vpack.c.b16 %v1110, %v1102
    %v1335 = vpack.c.b16 %v1111, %v1103
    %v1336 = vpack.c.b16 %v1112, %v1104
    %v1337 = vpack.c.b16 %v1113, %v1105
    %v1338 = vpack.c.b16 %v1114, %v1106
    %v1339 = vpack.c.b16 %v1123, %v1115
    %v1340 = vpack.c.b16 %v1124, %v1116
    %v1341 = vpack.c.b16 %v1125, %v1117
    %v1342 = vpack.c.b16 %v1126, %v1118
    %v1343 = vpack.c.b16 %v1127, %v1119
    %v1344 = vpack.c.b16 %v1128, %v1120
    %v1345 = vpack.c.b16 %v1129, %v1121
    %v1346 = vpack.c.b16 %v1130, %v1122
    %v1347 = vpack.c.b16 %v1139, %v1131
    %v1348 = vpack.c.b16 %v1140, %v1132
    %v1349 = vpack.c.b16 %v1141, %v1133
    %v1350 = vpack.c.b16 %v1142, %v1134
    %v1351 = vpack.c.b16 %v1143, %v1135
    %v1352 = vpack.c.b16 %v1144, %v1136
    %v1353 = vpack.c.b16 %v1145, %v1137
    %v1354 = vpack.c.b16 %v1146, %v1138
    %v1355 = vpack.c.b16 %v1155, %v1147
    %v1356 = vpack.c.b16 %v1156, %v1148
    %v1357 = vpack.c.b16 %v1157, %v1149
    %v1358 = vpack.c.b16 %v1158, %v1150
    %v1359 = vpack.c.b16 %v1159, %v1151
    %v1360 = vpack.c.b16 %v1160, %v1152
    %v1361 = vpack.c.b16 %v1161, %v1153
    %v1362 = vpack.c.b16 %v1162, %v1154
    %v1363 = vpack.c.b16 %v1171, %v1163
    %v1364 = vpack.c.b16 %v1172, %v1164
    %v1365 = vpack.c.b16 %v1173, %v1165
    %v1366 = vpack.c.b16 %v1174, %v1166
    %v1367 = vpack.c.b16 %v1175, %v1167
    %v1368 = vpack.c.b16 %v1176, %v1168
    %v1369 = vpack.c.b16 %v1177, %v1169
    %v1370 = vpack.c.b16 %v1178, %v1170
    %v1371 = vpack.c.b16 %v1187, %v1179
    %v1372 = vpack.c.b16 %v1188, %v1180
    %v1373 = vpack.c.b16 %v1189, %v1181
    %v1374 = vpack.c.b16 %v1190, %v1182
    %v1375 = vpack.c.b16 %v1191, %v1183
    %v1376 = vpack.c.b16 %v1192, %v1184
    %v1377 = vpack.c.b16 %v1193, %v1185
    %v1378 = vpack.c.b16 %v1194, %v1186
    %v1379 = vpack.c.b16 %v1203, %v1195
    %v1380 = vpack.c.b16 %v1204, %v1196
    %v1381 = vpack.c.b16 %v1205, %v1197
    %v1382 = vpack.c.b16 %v1206, %v1198
    %v1383 = vpack.c.b16 %v1207, %v1199
    %v1384 = vpack.c.b16 %v1208, %v1200
    %v1385 = vpack.c.b16 %v1209, %v1201
    %v1386 = vpack.c.b16 %v1210, %v1202
    %v1387 = vpack.c.b16 %v1219, %v1211
    %v1388 = vpack.c.b16 %v1220, %v1212
    %v1389 = vpack.c.b16 %v1221, %v1213
    %v1390 = vpack.c.b16 %v1222, %v1214
    %v1391 = vpack.c.b16 %v1223, %v1215
    %v1392 = vpack.c.b16 %v1224, %v1216
    %v1393 = vpack.c.b16 %v1225, %v1217
    %v1394 = vpack.c.b16 %v1226, %v1218
    %v1395 = vpack.c.b16 %v1235, %v1227
    %v1396 = vpack.c.b16 %v1236, %v1228
    %v1397 = vpack.c.b16 %v1237, %v1229
    %v1398 = vpack.c.b16 %v1238, %v1230
    %v1399 = vpack.c.b16 %v1239, %v1231
    %v1400 = vpack.c.b16 %v1240, %v1232
    %v1401 = vpack.c.b16 %v1241, %v1233
    %v1402 = vpack.c.b16 %v1242, %v1234
    %v1403 = vpack.c.b16 %v1251, %v1243
    %v1404 = vpack.c.b16 %v1252, %v1244
    %v1405 = vpack.c.b16 %v1253, %v1245
    %v1406 = vpack.c.b16 %v1254, %v1246
    %v1407 = vpack.c.b16 %v1255, %v1247
    %v1408 = vpack.c.b16 %v1256, %v1248
    %v1409 = vpack.c.b16 %v1257, %v1249
    %v1410 = vpack.c.b16 %v1258, %v1250
    %v1411 = vpack.c.b16 %v1267, %v1259
    %v1412 = vpack.c.b16 %v1268, %v1260
    %v1413 = vpack.c.b16 %v1269, %v1261
    %v1414 = vpack.c.b16 %v1270, %v1262
    %v1415 = vpack.c.b16 %v1271, %v1263
    %v1416 = vpack.c.b16 %v1272, %v1264
    %v1417 = vpack.c.b16 %v1273, %v1265
    %v1418 = vpack.c.b16 %v1274, %v1266
    %v1419 = vpack.c.b16 %v1283, %v1275
    %v1420 = vpack.c.b16 %v1284, %v1276
    %v1421 = vpack.c.b16 %v1285, %v1277
    %v1422 = vpack.c.b16 %v1286, %v1278
    %v1423 = vpack.c.b16 %v1287, %v1279
    %v1424 = vpack.c.b16 %v1288, %v1280
    %v1425 = vpack.c.b16 %v1289, %v1281
    %v1426 = vpack.c.b16 %v1290, %v1282
    %v1427 = vpack.c.b16 %v1299, %v1291
    %v1428 = vpack.c.b16 %v1300, %v1292
    %v1429 = vpack.c.b16 %v1301, %v1293
    %v1430 = vpack.c.b16 %v1302, %v1294
    %v1431 = vpack.c.b16 %v1303, %v1295
    %v1432 = vpack.c.b16 %v1304, %v1296
    %v1433 = vpack.c.b16 %v1305, %v1297
    %v1434 = vpack.c.b16 %v1306, %v1298
    %1563 = vmatprep.subr.bf16.mxu0 %v1308
    %1564 = vmatpush1.bf16.msra.mxu0 %v1307
    %1565 = vmatprep.subr.bf16.mxu0 %v1316
    %1566 = vmatpush1.bf16.msra.mxu0 %v1315
    %1567 = vmatprep.subr.bf16.mxu0 %v1324
    %1568 = vmatpush1.bf16.msra.mxu0 %v1323
    %1569 = vmatprep.subr.bf16.mxu0 %v1332
    %1570 = vmatpush1.bf16.msra.mxu0 %v1331
    %1571 = vmatprep.subr.bf16.mxu0 %v1340
    %1572 = vmatpush1.bf16.msra.mxu0 %v1339
    %1573 = vmatprep.subr.bf16.mxu0 %v1348
    %1574 = vmatpush1.bf16.msra.mxu0 %v1347
    %1575 = vmatprep.subr.bf16.mxu0 %v1356
    %1576 = vmatpush1.bf16.msra.mxu0 %v1355
    %1577 = vmatprep.subr.bf16.mxu0 %v1364
    %1578 = vmatpush1.bf16.msra.mxu0 %v1363
    %1579 = vmatprep.subr.bf16.mxu0 %v1372
    %1580 = vmatpush1.bf16.msra.mxu0 %v1371
    %1581 = vmatprep.subr.bf16.mxu0 %v1380
    %1582 = vmatpush1.bf16.msra.mxu0 %v1379
    %1583 = vmatprep.subr.bf16.mxu0 %v1388
    %1584 = vmatpush1.bf16.msra.mxu0 %v1387
    %1585 = vmatprep.subr.bf16.mxu0 %v1396
    %1586 = vmatpush1.bf16.msra.mxu0 %v1395
    %1587 = vmatprep.subr.bf16.mxu0 %v1404
    %1588 = vmatpush1.bf16.msra.mxu0 %v1403
    %1589 = vmatprep.subr.bf16.mxu0 %v1412
    %1590 = vmatpush1.bf16.msra.mxu0 %v1411
    %1591 = vmatprep.subr.bf16.mxu0 %v1420
    %1592 = vmatpush1.bf16.msra.mxu0 %v1419
    %1593 = vmatprep.subr.bf16.mxu0 %v1428
    %1594 = vmatpush1.bf16.msra.mxu0 %v1427
    %1595 = vmatprep.mubr.bf16.mxu0 0
    %1596 = vmatmul.mubr.bf16.gmra.mrb[0].mxu0 0
    %v1597 = vpop.f32.mrb[0].mxu0
    %v1598 = vadd.f32 0.0, %v1597
    %v1599 = vpop.f32.mrb[0].mxu0
    %v1600 = vadd.f32 0.0, %v1599
    %v1601 = vpop.f32.mrb[0].mxu0
    %v1602 = vpop.f32.mrb[0].mxu0
    %1603 = vdwg.mxu0
    %1604 = vmatprep.subr.bf16.mxu0 %v1310
    %1605 = vmatpush1.bf16.msra.mxu0 %v1309
    %1606 = vmatprep.subr.bf16.mxu0 %v1318
    %1607 = vmatpush1.bf16.msra.mxu0 %v1317
    %1608 = vmatprep.subr.bf16.mxu0 %v1326
    %1609 = vmatpush1.bf16.msra.mxu0 %v1325
    %1610 = vmatprep.subr.bf16.mxu0 %v1334
    %1611 = vmatpush1.bf16.msra.mxu0 %v1333
    %1612 = vmatprep.subr.bf16.mxu0 %v1342
    %1613 = vmatpush1.bf16.msra.mxu0 %v1341
    %1614 = vmatprep.subr.bf16.mxu0 %v1350
    %1615 = vmatpush1.bf16.msra.mxu0 %v1349
    %1616 = vmatprep.subr.bf16.mxu0 %v1358
    %1617 = vmatpush1.bf16.msra.mxu0 %v1357
    %1618 = vmatprep.subr.bf16.mxu0 %v1366
    %1619 = vmatpush1.bf16.msra.mxu0 %v1365
    %1620 = vmatprep.subr.bf16.mxu0 %v1374
    %1621 = vmatpush1.bf16.msra.mxu0 %v1373
    %1622 = vmatprep.subr.bf16.mxu0 %v1382
    %1623 = vmatpush1.bf16.msra.mxu0 %v1381
    %1624 = vmatprep.subr.bf16.mxu0 %v1390
    %1625 = vmatpush1.bf16.msra.mxu0 %v1389
    %1626 = vmatprep.subr.bf16.mxu0 %v1398
    %1627 = vmatpush1.bf16.msra.mxu0 %v1397
    %1628 = vmatprep.subr.bf16.mxu0 %v1406
    %1629 = vmatpush1.bf16.msra.mxu0 %v1405
    %1630 = vmatprep.subr.bf16.mxu0 %v1414
    %1631 = vmatpush1.bf16.msra.mxu0 %v1413
    %1632 = vmatprep.subr.bf16.mxu0 %v1422
    %1633 = vmatpush1.bf16.msra.mxu0 %v1421
    %1634 = vmatprep.subr.bf16.mxu0 %v1430
    %1635 = vmatpush1.bf16.msra.mxu0 %v1429
    %1636 = vmatprep.mubr.bf16.mxu0 0
    %1637 = vmatmul.mubr.bf16.gmra.mrb[0].mxu0 0
    %v1638 = vpop.f32.mrb[0].mxu0
    %v1639 = vadd.f32 0.0, %v1638
    %v1640 = vpop.f32.mrb[0].mxu0
    %v1641 = vadd.f32 0.0, %v1640
    %v1642 = vpop.f32.mrb[0].mxu0
    %v1643 = vpop.f32.mrb[0].mxu0
    %1644 = vdwg.mxu0
    %1645 = vmatprep.subr.bf16.mxu0 %v1312
    %1646 = vmatpush1.bf16.msra.mxu0 %v1311
    %1647 = vmatprep.subr.bf16.mxu0 %v1320
    %1648 = vmatpush1.bf16.msra.mxu0 %v1319
    %1649 = vmatprep.subr.bf16.mxu0 %v1328
    %1650 = vmatpush1.bf16.msra.mxu0 %v1327
    %1651 = vmatprep.subr.bf16.mxu0 %v1336
    %1652 = vmatpush1.bf16.msra.mxu0 %v1335
    %1653 = vmatprep.subr.bf16.mxu0 %v1344
    %1654 = vmatpush1.bf16.msra.mxu0 %v1343
    %1655 = vmatprep.subr.bf16.mxu0 %v1352
    %1656 = vmatpush1.bf16.msra.mxu0 %v1351
    %1657 = vmatprep.subr.bf16.mxu0 %v1360
    %1658 = vmatpush1.bf16.msra.mxu0 %v1359
    %1659 = vmatprep.subr.bf16.mxu0 %v1368
    %1660 = vmatpush1.bf16.msra.mxu0 %v1367
    %1661 = vmatprep.subr.bf16.mxu0 %v1376
    %1662 = vmatpush1.bf16.msra.mxu0 %v1375
    %1663 = vmatprep.subr.bf16.mxu0 %v1384
    %1664 = vmatpush1.bf16.msra.mxu0 %v1383
    %1665 = vmatprep.subr.bf16.mxu0 %v1392
    %1666 = vmatpush1.bf16.msra.mxu0 %v1391
    %1667 = vmatprep.subr.bf16.mxu0 %v1400
    %1668 = vmatpush1.bf16.msra.mxu0 %v1399
    %1669 = vmatprep.subr.bf16.mxu0 %v1408
    %1670 = vmatpush1.bf16.msra.mxu0 %v1407
    %1671 = vmatprep.subr.bf16.mxu0 %v1416
    %1672 = vmatpush1.bf16.msra.mxu0 %v1415
    %1673 = vmatprep.subr.bf16.mxu0 %v1424
    %1674 = vmatpush1.bf16.msra.mxu0 %v1423
    %1675 = vmatprep.subr.bf16.mxu0 %v1432
    %1676 = vmatpush1.bf16.msra.mxu0 %v1431
    %1677 = vmatprep.mubr.bf16.mxu0 0
    %1678 = vmatmul.mubr.bf16.gmra.mrb[0].mxu0 0
    %v1679 = vpop.f32.mrb[0].mxu0
    %v1680 = vadd.f32 0.0, %v1679
    %v1681 = vpop.f32.mrb[0].mxu0
    %v1682 = vadd.f32 0.0, %v1681
    %v1683 = vpop.f32.mrb[0].mxu0
    %v1684 = vpop.f32.mrb[0].mxu0
    %1685 = vdwg.mxu0
    %1686 = vmatprep.subr.bf16.mxu0 %v1314
    %1687 = vmatpush1.bf16.msra.mxu0 %v1313
    %1688 = vmatprep.subr.bf16.mxu0 %v1322
    %1689 = vmatpush1.bf16.msra.mxu0 %v1321
    %1690 = vmatprep.subr.bf16.mxu0 %v1330
    %1691 = vmatpush1.bf16.msra.mxu0 %v1329
    %1692 = vmatprep.subr.bf16.mxu0 %v1338
    %1693 = vmatpush1.bf16.msra.mxu0 %v1337
    %1694 = vmatprep.subr.bf16.mxu0 %v1346
    %1695 = vmatpush1.bf16.msra.mxu0 %v1345
    %1696 = vmatprep.subr.bf16.mxu0 %v1354
    %1697 = vmatpush1.bf16.msra.mxu0 %v1353
    %1698 = vmatprep.subr.bf16.mxu0 %v1362
    %1699 = vmatpush1.bf16.msra.mxu0 %v1361
    %1700 = vmatprep.subr.bf16.mxu0 %v1370
    %1701 = vmatpush1.bf16.msra.mxu0 %v1369
    %1702 = vmatprep.subr.bf16.mxu0 %v1378
    %1703 = vmatpush1.bf16.msra.mxu0 %v1377
    %1704 = vmatprep.subr.bf16.mxu0 %v1386
    %1705 = vmatpush1.bf16.msra.mxu0 %v1385
    %1706 = vmatprep.subr.bf16.mxu0 %v1394
    %1707 = vmatpush1.bf16.msra.mxu0 %v1393
    %1708 = vmatprep.subr.bf16.mxu0 %v1402
    %1709 = vmatpush1.bf16.msra.mxu0 %v1401
    %1710 = vmatprep.subr.bf16.mxu0 %v1410
    %1711 = vmatpush1.bf16.msra.mxu0 %v1409
    %1712 = vmatprep.subr.bf16.mxu0 %v1418
    %1713 = vmatpush1.bf16.msra.mxu0 %v1417
    %1714 = vmatprep.subr.bf16.mxu0 %v1426
    %1715 = vmatpush1.bf16.msra.mxu0 %v1425
    %1716 = vmatprep.subr.bf16.mxu0 %v1434
    %1717 = vmatpush1.bf16.msra.mxu0 %v1433
    %1718 = vmatprep.mubr.bf16.mxu0 0
    %1719 = vmatmul.mubr.bf16.gmra.mrb[0].mxu0 0
    %v1720 = vpop.f32.mrb[0].mxu0
    %v1721 = vadd.f32 0.0, %v1720
    %v1722 = vpop.f32.mrb[0].mxu0
    %v1723 = vadd.f32 0.0, %v1722
    %v1724 = vpop.f32.mrb[0].mxu0
    %v1725 = vpop.f32.mrb[0].mxu0
    %1726 = vdwg.mxu0
    %v1727 = vadd.f32 %v658, %v1598
    %v1728 = vadd.f32 %v660, %v1600
    %v1729 = vadd.f32 %v701, %v1639
    %v1730 = vadd.f32 %v703, %v1641
    %v1735 = vrot.slane %v1680, 2
    %v1736 = vrot.slane %v1682, 2
    %v1737 = vrot.slane %v1721, 2
    %v1738 = vrot.slane %v1723, 2
    %v1743 = vadd.f32 %v748, %v1735
    %v1744 = vadd.f32 %v750, %v1736
    %v1745 = vadd.f32 %v791, %v1737
    %v1746 = vadd.f32 %v793, %v1738
    %v1751 = vrot.slane %v1743, 4
    %v1752 = vrot.slane %v1744, 4
    %v1753 = vrot.slane %v1745, 4
    %v1754 = vrot.slane %v1746, 4
    %vm1759 = vcmask 1041408
    %v1760 = vsel %vm1759, %v1727, %v1751
    %v1761 = vsel %vm1759, %v1728, %v1752
    %v1762 = vsel %vm1759, %v1729, %v1753
    %v1763 = vsel %vm1759, %v1730, %v1754
    %v1764 = vxor.u32 %v1760, 2147483648
    %v1765 = vmul.f32 %v1764, 1.442695
    %v1766 = vpow.pop %v1765
    %v1767 = vadd.f32 %v1766, 1.0
    %v1768 = vrcp.pop %v1767
    %v1769 = vmul.f32 1.0, %v1768
    %v1770 = vxor.u32 %v1761, 2147483648
    %v1771 = vmul.f32 %v1770, 1.442695
    %v1772 = vpow.pop %v1771
    %v1773 = vadd.f32 %v1772, 1.0
    %v1774 = vrcp.pop %v1773
    %v1775 = vmul.f32 1.0, %v1774
    %v1776 = vtanh.pop %v1762
    %v1777 = vxor.u32 %v1763, 2147483648
    %v1778 = vmul.f32 %v1777, 1.442695
    %v1779 = vpow.pop %v1778
    %v1780 = vadd.f32 %v1779, 1.0
    %v1781 = vrcp.pop %v1780
    %v1782 = vmul.f32 1.0, %v1781
    %v1783 = vmul.f32 %v1775, 0.0
    %v1784 = vmul.f32 %v1769, %v1776
    %v1785 = vadd.f32 %v1783, %v1784
    %v1786 = vtanh.pop %v1785
    %v1787 = vmul.f32 %v1782, %v1786
    %v1789 = vrot.slane %v1787, 2
    %v1791 = vpack.c.bf16 %v1787, %v1787
    %v1792 = vpack.c.bf16 %v1789, %v1789
    %1793 = vmatprep.subr.bf16.mxu0 %v1308
    %1794 = vmatpush1.bf16.msra.mxu0 %v1307
    %1795 = vmatprep.subr.bf16.mxu0 %v1316
    %1796 = vmatpush1.bf16.msra.mxu0 %v1315
    %1797 = vmatprep.subr.bf16.mxu0 %v1324
    %1798 = vmatpush1.bf16.msra.mxu0 %v1323
    %1799 = vmatprep.subr.bf16.mxu0 %v1332
    %1800 = vmatpush1.bf16.msra.mxu0 %v1331
    %1801 = vmatprep.subr.bf16.mxu0 %v1340
    %1802 = vmatpush1.bf16.msra.mxu0 %v1339
    %1803 = vmatprep.subr.bf16.mxu0 %v1348
    %1804 = vmatpush1.bf16.msra.mxu0 %v1347
    %1805 = vmatprep.subr.bf16.mxu0 %v1356
    %1806 = vmatpush1.bf16.msra.mxu0 %v1355
    %1807 = vmatprep.subr.bf16.mxu0 %v1364
    %1808 = vmatpush1.bf16.msra.mxu0 %v1363
    %1809 = vmatprep.subr.bf16.mxu0 %v1372
    %1810 = vmatpush1.bf16.msra.mxu0 %v1371
    %1811 = vmatprep.subr.bf16.mxu0 %v1380
    %1812 = vmatpush1.bf16.msra.mxu0 %v1379
    %1813 = vmatprep.subr.bf16.mxu0 %v1388
    %1814 = vmatpush1.bf16.msra.mxu0 %v1387
    %1815 = vmatprep.subr.bf16.mxu0 %v1396
    %1816 = vmatpush1.bf16.msra.mxu0 %v1395
    %1817 = vmatprep.subr.bf16.mxu0 %v1404
    %1818 = vmatpush1.bf16.msra.mxu0 %v1403
    %1819 = vmatprep.subr.bf16.mxu0 %v1412
    %1820 = vmatpush1.bf16.msra.mxu0 %v1411
    %1821 = vmatprep.subr.bf16.mxu0 %v1420
    %1822 = vmatpush1.bf16.msra.mxu0 %v1419
    %1823 = vmatprep.subr.bf16.mxu0 %v1428
    %1824 = vmatpush1.bf16.msra.mxu0 %v1427
    %1825 = vmatprep.mubr.bf16.mxu0 %v1792
    %1826 = vmatmul.mubr.bf16.gmra.mrb[0].mxu0 %v1791
    %v1827 = vpop.f32.mrb[0].mxu0
    %v1828 = vadd.f32 0.0, %v1827
    %v1829 = vpop.f32.mrb[0].mxu0
    %v1830 = vadd.f32 0.0, %v1829
    %v1831 = vpop.f32.mrb[0].mxu0
    %v1832 = vpop.f32.mrb[0].mxu0
    %1833 = vdwg.mxu0
    %1834 = vmatprep.subr.bf16.mxu0 %v1310
    %1835 = vmatpush1.bf16.msra.mxu0 %v1309
    %1836 = vmatprep.subr.bf16.mxu0 %v1318
    %1837 = vmatpush1.bf16.msra.mxu0 %v1317
    %1838 = vmatprep.subr.bf16.mxu0 %v1326
    %1839 = vmatpush1.bf16.msra.mxu0 %v1325
    %1840 = vmatprep.subr.bf16.mxu0 %v1334
    %1841 = vmatpush1.bf16.msra.mxu0 %v1333
    %1842 = vmatprep.subr.bf16.mxu0 %v1342
    %1843 = vmatpush1.bf16.msra.mxu0 %v1341
    %1844 = vmatprep.subr.bf16.mxu0 %v1350
    %1845 = vmatpush1.bf16.msra.mxu0 %v1349
    %1846 = vmatprep.subr.bf16.mxu0 %v1358
    %1847 = vmatpush1.bf16.msra.mxu0 %v1357
    %1848 = vmatprep.subr.bf16.mxu0 %v1366
    %1849 = vmatpush1.bf16.msra.mxu0 %v1365
    %1850 = vmatprep.subr.bf16.mxu0 %v1374
    %1851 = vmatpush1.bf16.msra.mxu0 %v1373
    %1852 = vmatprep.subr.bf16.mxu0 %v1382
    %1853 = vmatpush1.bf16.msra.mxu0 %v1381
    %1854 = vmatprep.subr.bf16.mxu0 %v1390
    %1855 = vmatpush1.bf16.msra.mxu0 %v1389
    %1856 = vmatprep.subr.bf16.mxu0 %v1398
    %1857 = vmatpush1.bf16.msra.mxu0 %v1397
    %1858 = vmatprep.subr.bf16.mxu0 %v1406
    %1859 = vmatpush1.bf16.msra.mxu0 %v1405
    %1860 = vmatprep.subr.bf16.mxu0 %v1414
    %1861 = vmatpush1.bf16.msra.mxu0 %v1413
    %1862 = vmatprep.subr.bf16.mxu0 %v1422
    %1863 = vmatpush1.bf16.msra.mxu0 %v1421
    %1864 = vmatprep.subr.bf16.mxu0 %v1430
    %1865 = vmatpush1.bf16.msra.mxu0 %v1429
    %1866 = vmatprep.mubr.bf16.mxu0 %v1792
    %1867 = vmatmul.mubr.bf16.gmra.mrb[0].mxu0 %v1791
    %v1868 = vpop.f32.mrb[0].mxu0
    %v1869 = vadd.f32 0.0, %v1868
    %v1870 = vpop.f32.mrb[0].mxu0
    %v1871 = vadd.f32 0.0, %v1870
    %v1872 = vpop.f32.mrb[0].mxu0
    %v1873 = vpop.f32.mrb[0].mxu0
    %1874 = vdwg.mxu0
    %1875 = vmatprep.subr.bf16.mxu0 %v1312
    %1876 = vmatpush1.bf16.msra.mxu0 %v1311
    %1877 = vmatprep.subr.bf16.mxu0 %v1320
    %1878 = vmatpush1.bf16.msra.mxu0 %v1319
    %1879 = vmatprep.subr.bf16.mxu0 %v1328
    %1880 = vmatpush1.bf16.msra.mxu0 %v1327
    %1881 = vmatprep.subr.bf16.mxu0 %v1336
    %1882 = vmatpush1.bf16.msra.mxu0 %v1335
    %1883 = vmatprep.subr.bf16.mxu0 %v1344
    %1884 = vmatpush1.bf16.msra.mxu0 %v1343
    %1885 = vmatprep.subr.bf16.mxu0 %v1352
    %1886 = vmatpush1.bf16.msra.mxu0 %v1351
    %1887 = vmatprep.subr.bf16.mxu0 %v1360
    %1888 = vmatpush1.bf16.msra.mxu0 %v1359
    %1889 = vmatprep.subr.bf16.mxu0 %v1368
    %1890 = vmatpush1.bf16.msra.mxu0 %v1367
    %1891 = vmatprep.subr.bf16.mxu0 %v1376
    %1892 = vmatpush1.bf16.msra.mxu0 %v1375
    %1893 = vmatprep.subr.bf16.mxu0 %v1384
    %1894 = vmatpush1.bf16.msra.mxu0 %v1383
    %1895 = vmatprep.subr.bf16.mxu0 %v1392
    %1896 = vmatpush1.bf16.msra.mxu0 %v1391
    %1897 = vmatprep.subr.bf16.mxu0 %v1400
    %1898 = vmatpush1.bf16.msra.mxu0 %v1399
    %1899 = vmatprep.subr.bf16.mxu0 %v1408
    %1900 = vmatpush1.bf16.msra.mxu0 %v1407
    %1901 = vmatprep.subr.bf16.mxu0 %v1416
    %1902 = vmatpush1.bf16.msra.mxu0 %v1415
    %1903 = vmatprep.subr.bf16.mxu0 %v1424
    %1904 = vmatpush1.bf16.msra.mxu0 %v1423
    %1905 = vmatprep.subr.bf16.mxu0 %v1432
    %1906 = vmatpush1.bf16.msra.mxu0 %v1431
    %1907 = vmatprep.mubr.bf16.mxu0 %v1792
    %1908 = vmatmul.mubr.bf16.gmra.mrb[0].mxu0 %v1791
    %v1909 = vpop.f32.mrb[0].mxu0
    %v1910 = vadd.f32 0.0, %v1909
    %v1911 = vpop.f32.mrb[0].mxu0
    %v1912 = vadd.f32 0.0, %v1911
    %v1913 = vpop.f32.mrb[0].mxu0
    %v1914 = vpop.f32.mrb[0].mxu0
    %1915 = vdwg.mxu0
    %1916 = vmatprep.subr.bf16.mxu0 %v1314
    %1917 = vmatpush1.bf16.msra.mxu0 %v1313
    %1918 = vmatprep.subr.bf16.mxu0 %v1322
    %1919 = vmatpush1.bf16.msra.mxu0 %v1321
    %1920 = vmatprep.subr.bf16.mxu0 %v1330
    %1921 = vmatpush1.bf16.msra.mxu0 %v1329
    %1922 = vmatprep.subr.bf16.mxu0 %v1338
    %1923 = vmatpush1.bf16.msra.mxu0 %v1337
    %1924 = vmatprep.subr.bf16.mxu0 %v1346
    %1925 = vmatpush1.bf16.msra.mxu0 %v1345
    %1926 = vmatprep.subr.bf16.mxu0 %v1354
    %1927 = vmatpush1.bf16.msra.mxu0 %v1353
    %1928 = vmatprep.subr.bf16.mxu0 %v1362
    %1929 = vmatpush1.bf16.msra.mxu0 %v1361
    %1930 = vmatprep.subr.bf16.mxu0 %v1370
    %1931 = vmatpush1.bf16.msra.mxu0 %v1369
    %1932 = vmatprep.subr.bf16.mxu0 %v1378
    %1933 = vmatpush1.bf16.msra.mxu0 %v1377
    %1934 = vmatprep.subr.bf16.mxu0 %v1386
    %1935 = vmatpush1.bf16.msra.mxu0 %v1385
    %1936 = vmatprep.subr.bf16.mxu0 %v1394
    %1937 = vmatpush1.bf16.msra.mxu0 %v1393
    %1938 = vmatprep.subr.bf16.mxu0 %v1402
    %1939 = vmatpush1.bf16.msra.mxu0 %v1401
    %1940 = vmatprep.subr.bf16.mxu0 %v1410
    %1941 = vmatpush1.bf16.msra.mxu0 %v1409
    %1942 = vmatprep.subr.bf16.mxu0 %v1418
    %1943 = vmatpush1.bf16.msra.mxu0 %v1417
    %1944 = vmatprep.subr.bf16.mxu0 %v1426
    %1945 = vmatpush1.bf16.msra.mxu0 %v1425
    %1946 = vmatprep.subr.bf16.mxu0 %v1434
    %1947 = vmatpush1.bf16.msra.mxu0 %v1433
    %1948 = vmatprep.mubr.bf16.mxu0 %v1792
    %1949 = vmatmul.mubr.bf16.gmra.mrb[0].mxu0 %v1791
    %v1950 = vpop.f32.mrb[0].mxu0
    %v1951 = vadd.f32 0.0, %v1950
    %v1952 = vpop.f32.mrb[0].mxu0
    %v1953 = vadd.f32 0.0, %v1952
    %v1954 = vpop.f32.mrb[0].mxu0
    %v1955 = vpop.f32.mrb[0].mxu0
    %1956 = vdwg.mxu0
    %v1961 = vrot.slane %v1828, 6
    %v1962 = vrot.slane %v1830, 6
    %v1963 = vrot.slane %v1869, 6
    %v1964 = vrot.slane %v1871, 6
    %v1969 = vadd.f32 %v658, %v1961
    %v1970 = vadd.f32 %v660, %v1962
    %v1971 = vadd.f32 %v701, %v1963
    %v1972 = vadd.f32 %v703, %v1964
    %v1977 = vrot.slane %v1910, 4
    %v1978 = vrot.slane %v1912, 4
    %v1979 = vrot.slane %v1951, 4
    %v1980 = vrot.slane %v1953, 4
    %v1985 = vadd.f32 %v748, %v1977
    %v1986 = vadd.f32 %v750, %v1978
    %v1987 = vadd.f32 %v791, %v1979
    %v1988 = vadd.f32 %v793, %v1980
    %v1993 = vrot.slane %v1969, 2
    %v1994 = vrot.slane %v1970, 2
    %v1995 = vrot.slane %v1971, 2
    %v1996 = vrot.slane %v1972, 2
    %v2005 = vrot.slane %v1985, 2
    %v2006 = vrot.slane %v1986, 2
    %v2007 = vrot.slane %v1987, 2
    %v2008 = vrot.slane %v1988, 2
    %v2013 = vsel %vm1759, %v1993, %v2005
    %v2014 = vsel %vm1759, %v1994, %v2006
    %v2015 = vsel %vm1759, %v1995, %v2007
    %v2016 = vsel %vm1759, %v1996, %v2008
    %v2017 = vxor.u32 %v2013, 2147483648
    %v2018 = vmul.f32 %v2017, 1.442695
    %v2019 = vpow.pop %v2018
    %v2020 = vadd.f32 %v2019, 1.0
    %v2021 = vrcp.pop %v2020
    %v2022 = vmul.f32 1.0, %v2021
    %v2023 = vxor.u32 %v2014, 2147483648
    %v2024 = vmul.f32 %v2023, 1.442695
    %v2025 = vpow.pop %v2024
    %v2026 = vadd.f32 %v2025, 1.0
    %v2027 = vrcp.pop %v2026
    %v2028 = vmul.f32 1.0, %v2027
    %v2029 = vtanh.pop %v2015
    %v2030 = vxor.u32 %v2016, 2147483648
    %v2031 = vmul.f32 %v2030, 1.442695
    %v2032 = vpow.pop %v2031
    %v2033 = vadd.f32 %v2032, 1.0
    %v2034 = vrcp.pop %v2033
    %v2035 = vmul.f32 1.0, %v2034
    %v2036 = vmul.f32 %v2028, %v1785
    %v2037 = vmul.f32 %v2022, %v2029
    %v2038 = vadd.f32 %v2036, %v2037
    %v2039 = vtanh.pop %v2038
    %v2040 = vmul.f32 %v2035, %v2039
    %v2042 = vrot.slane %v2040, 2
    %v2044 = vpack.c.bf16 %v2040, %v2040
    %v2045 = vpack.c.bf16 %v2042, %v2042
    %2046 = vmatprep.subr.bf16.mxu0 %v1308
    %2047 = vmatpush1.bf16.msra.mxu0 %v1307
    %2048 = vmatprep.subr.bf16.mxu0 %v1316
    %2049 = vmatpush1.bf16.msra.mxu0 %v1315
    %2050 = vmatprep.subr.bf16.mxu0 %v1324
    %2051 = vmatpush1.bf16.msra.mxu0 %v1323
    %2052 = vmatprep.subr.bf16.mxu0 %v1332
    %2053 = vmatpush1.bf16.msra.mxu0 %v1331
    %2054 = vmatprep.subr.bf16.mxu0 %v1340
    %2055 = vmatpush1.bf16.msra.mxu0 %v1339
    %2056 = vmatprep.subr.bf16.mxu0 %v1348
    %2057 = vmatpush1.bf16.msra.mxu0 %v1347
    %2058 = vmatprep.subr.bf16.mxu0 %v1356
    %2059 = vmatpush1.bf16.msra.mxu0 %v1355
    %2060 = vmatprep.subr.bf16.mxu0 %v1364
    %2061 = vmatpush1.bf16.msra.mxu0 %v1363
    %2062 = vmatprep.subr.bf16.mxu0 %v1372
    %2063 = vmatpush1.bf16.msra.mxu0 %v1371
    %2064 = vmatprep.subr.bf16.mxu0 %v1380
    %2065 = vmatpush1.bf16.msra.mxu0 %v1379
    %2066 = vmatprep.subr.bf16.mxu0 %v1388
    %2067 = vmatpush1.bf16.msra.mxu0 %v1387
    %2068 = vmatprep.subr.bf16.mxu0 %v1396
    %2069 = vmatpush1.bf16.msra.mxu0 %v1395
    %2070 = vmatprep.subr.bf16.mxu0 %v1404
    %2071 = vmatpush1.bf16.msra.mxu0 %v1403
    %2072 = vmatprep.subr.bf16.mxu0 %v1412
    %2073 = vmatpush1.bf16.msra.mxu0 %v1411
    %2074 = vmatprep.subr.bf16.mxu0 %v1420
    %2075 = vmatpush1.bf16.msra.mxu0 %v1419
    %2076 = vmatprep.subr.bf16.mxu0 %v1428
    %2077 = vmatpush1.bf16.msra.mxu0 %v1427
    %2078 = vmatprep.mubr.bf16.mxu0 %v2045
    %2079 = vmatmul.mubr.bf16.gmra.mrb[0].mxu0 %v2044
    %v2080 = vpop.f32.mrb[0].mxu0
    %v2081 = vadd.f32 0.0, %v2080
    %v2082 = vpop.f32.mrb[0].mxu0
    %v2083 = vadd.f32 0.0, %v2082
    %v2084 = vpop.f32.mrb[0].mxu0
    %v2085 = vpop.f32.mrb[0].mxu0
    %2086 = vdwg.mxu0
    %2087 = vmatprep.subr.bf16.mxu0 %v1310
    %2088 = vmatpush1.bf16.msra.mxu0 %v1309
    %2089 = vmatprep.subr.bf16.mxu0 %v1318
    %2090 = vmatpush1.bf16.msra.mxu0 %v1317
    %2091 = vmatprep.subr.bf16.mxu0 %v1326
    %2092 = vmatpush1.bf16.msra.mxu0 %v1325
    %2093 = vmatprep.subr.bf16.mxu0 %v1334
    %2094 = vmatpush1.bf16.msra.mxu0 %v1333
    %2095 = vmatprep.subr.bf16.mxu0 %v1342
    %2096 = vmatpush1.bf16.msra.mxu0 %v1341
    %2097 = vmatprep.subr.bf16.mxu0 %v1350
    %2098 = vmatpush1.bf16.msra.mxu0 %v1349
    %2099 = vmatprep.subr.bf16.mxu0 %v1358
    %2100 = vmatpush1.bf16.msra.mxu0 %v1357
    %2101 = vmatprep.subr.bf16.mxu0 %v1366
    %2102 = vmatpush1.bf16.msra.mxu0 %v1365
    %2103 = vmatprep.subr.bf16.mxu0 %v1374
    %2104 = vmatpush1.bf16.msra.mxu0 %v1373
    %2105 = vmatprep.subr.bf16.mxu0 %v1382
    %2106 = vmatpush1.bf16.msra.mxu0 %v1381
    %2107 = vmatprep.subr.bf16.mxu0 %v1390
    %2108 = vmatpush1.bf16.msra.mxu0 %v1389
    %2109 = vmatprep.subr.bf16.mxu0 %v1398
    %2110 = vmatpush1.bf16.msra.mxu0 %v1397
    %2111 = vmatprep.subr.bf16.mxu0 %v1406
    %2112 = vmatpush1.bf16.msra.mxu0 %v1405
    %2113 = vmatprep.subr.bf16.mxu0 %v1414
    %2114 = vmatpush1.bf16.msra.mxu0 %v1413
    %2115 = vmatprep.subr.bf16.mxu0 %v1422
    %2116 = vmatpush1.bf16.msra.mxu0 %v1421
    %2117 = vmatprep.subr.bf16.mxu0 %v1430
    %2118 = vmatpush1.bf16.msra.mxu0 %v1429
    %2119 = vmatprep.mubr.bf16.mxu0 %v2045
    %2120 = vmatmul.mubr.bf16.gmra.mrb[0].mxu0 %v2044
    %v2121 = vpop.f32.mrb[0].mxu0
    %v2122 = vadd.f32 0.0, %v2121
    %v2123 = vpop.f32.mrb[0].mxu0
    %v2124 = vadd.f32 0.0, %v2123
    %v2125 = vpop.f32.mrb[0].mxu0
    %v2126 = vpop.f32.mrb[0].mxu0
    %2127 = vdwg.mxu0
    %2128 = vmatprep.subr.bf16.mxu0 %v1312
    %2129 = vmatpush1.bf16.msra.mxu0 %v1311
    %2130 = vmatprep.subr.bf16.mxu0 %v1320
    %2131 = vmatpush1.bf16.msra.mxu0 %v1319
    %2132 = vmatprep.subr.bf16.mxu0 %v1328
    %2133 = vmatpush1.bf16.msra.mxu0 %v1327
    %2134 = vmatprep.subr.bf16.mxu0 %v1336
    %2135 = vmatpush1.bf16.msra.mxu0 %v1335
    %2136 = vmatprep.subr.bf16.mxu0 %v1344
    %2137 = vmatpush1.bf16.msra.mxu0 %v1343
    %2138 = vmatprep.subr.bf16.mxu0 %v1352
    %2139 = vmatpush1.bf16.msra.mxu0 %v1351
    %2140 = vmatprep.subr.bf16.mxu0 %v1360
    %2141 = vmatpush1.bf16.msra.mxu0 %v1359
    %2142 = vmatprep.subr.bf16.mxu0 %v1368
    %2143 = vmatpush1.bf16.msra.mxu0 %v1367
    %2144 = vmatprep.subr.bf16.mxu0 %v1376
    %2145 = vmatpush1.bf16.msra.mxu0 %v1375
    %2146 = vmatprep.subr.bf16.mxu0 %v1384
    %2147 = vmatpush1.bf16.msra.mxu0 %v1383
    %2148 = vmatprep.subr.bf16.mxu0 %v1392
    %2149 = vmatpush1.bf16.msra.mxu0 %v1391
    %2150 = vmatprep.subr.bf16.mxu0 %v1400
    %2151 = vmatpush1.bf16.msra.mxu0 %v1399
    %2152 = vmatprep.subr.bf16.mxu0 %v1408
    %2153 = vmatpush1.bf16.msra.mxu0 %v1407
    %2154 = vmatprep.subr.bf16.mxu0 %v1416
    %2155 = vmatpush1.bf16.msra.mxu0 %v1415
    %2156 = vmatprep.subr.bf16.mxu0 %v1424
    %2157 = vmatpush1.bf16.msra.mxu0 %v1423
    %2158 = vmatprep.subr.bf16.mxu0 %v1432
    %2159 = vmatpush1.bf16.msra.mxu0 %v1431
    %2160 = vmatprep.mubr.bf16.mxu0 %v2045
    %2161 = vmatmul.mubr.bf16.gmra.mrb[0].mxu0 %v2044
    %v2162 = vpop.f32.mrb[0].mxu0
    %v2163 = vadd.f32 0.0, %v2162
    %v2164 = vpop.f32.mrb[0].mxu0
    %v2165 = vadd.f32 0.0, %v2164
    %v2166 = vpop.f32.mrb[0].mxu0
    %v2167 = vpop.f32.mrb[0].mxu0
    %2168 = vdwg.mxu0
    %2169 = vmatprep.subr.bf16.mxu0 %v1314
    %2170 = vmatpush1.bf16.msra.mxu0 %v1313
    %2171 = vmatprep.subr.bf16.mxu0 %v1322
    %2172 = vmatpush1.bf16.msra.mxu0 %v1321
    %2173 = vmatprep.subr.bf16.mxu0 %v1330
    %2174 = vmatpush1.bf16.msra.mxu0 %v1329
    %2175 = vmatprep.subr.bf16.mxu0 %v1338
    %2176 = vmatpush1.bf16.msra.mxu0 %v1337
    %2177 = vmatprep.subr.bf16.mxu0 %v1346
    %2178 = vmatpush1.bf16.msra.mxu0 %v1345
    %2179 = vmatprep.subr.bf16.mxu0 %v1354
    %2180 = vmatpush1.bf16.msra.mxu0 %v1353
    %2181 = vmatprep.subr.bf16.mxu0 %v1362
    %2182 = vmatpush1.bf16.msra.mxu0 %v1361
    %2183 = vmatprep.subr.bf16.mxu0 %v1370
    %2184 = vmatpush1.bf16.msra.mxu0 %v1369
    %2185 = vmatprep.subr.bf16.mxu0 %v1378
    %2186 = vmatpush1.bf16.msra.mxu0 %v1377
    %2187 = vmatprep.subr.bf16.mxu0 %v1386
    %2188 = vmatpush1.bf16.msra.mxu0 %v1385
    %2189 = vmatprep.subr.bf16.mxu0 %v1394
    %2190 = vmatpush1.bf16.msra.mxu0 %v1393
    %2191 = vmatprep.subr.bf16.mxu0 %v1402
    %2192 = vmatpush1.bf16.msra.mxu0 %v1401
    %2193 = vmatprep.subr.bf16.mxu0 %v1410
    %2194 = vmatpush1.bf16.msra.mxu0 %v1409
    %2195 = vmatprep.subr.bf16.mxu0 %v1418
    %2196 = vmatpush1.bf16.msra.mxu0 %v1417
    %2197 = vmatprep.subr.bf16.mxu0 %v1426
    %2198 = vmatpush1.bf16.msra.mxu0 %v1425
    %2199 = vmatprep.subr.bf16.mxu0 %v1434
    %2200 = vmatpush1.bf16.msra.mxu0 %v1433
    %2201 = vmatprep.mubr.bf16.mxu0 %v2045
    %2202 = vmatmul.mubr.bf16.gmra.mrb[0].mxu0 %v2044
    %v2203 = vpop.f32.mrb[0].mxu0
    %v2204 = vadd.f32 0.0, %v2203
    %v2205 = vpop.f32.mrb[0].mxu0
    %v2206 = vadd.f32 0.0, %v2205
    %v2207 = vpop.f32.mrb[0].mxu0
    %v2208 = vpop.f32.mrb[0].mxu0
    %2209 = vdwg.mxu0
    %v2214 = vrot.slane %v2081, 4
    %v2215 = vrot.slane %v2083, 4
    %v2216 = vrot.slane %v2122, 4
    %v2217 = vrot.slane %v2124, 4
    %v2222 = vadd.f32 %v658, %v2214
    %v2223 = vadd.f32 %v660, %v2215
    %v2224 = vadd.f32 %v701, %v2216
    %v2225 = vadd.f32 %v703, %v2217
    %v2230 = vrot.slane %v2163, 6
    %v2231 = vrot.slane %v2165, 6
    %v2232 = vrot.slane %v2204, 6
    %v2233 = vrot.slane %v2206, 6
    %v2238 = vadd.f32 %v748, %v2230
    %v2239 = vadd.f32 %v750, %v2231
    %v2240 = vadd.f32 %v791, %v2232
    %v2241 = vadd.f32 %v793, %v2233
    %v2246 = vrot.slane %v2222, 4
    %v2247 = vrot.slane %v2223, 4
    %v2248 = vrot.slane %v2224, 4
    %v2249 = vrot.slane %v2225, 4
    %v2254 = vsel %vm1759, %v2246, %v2238
    %v2255 = vsel %vm1759, %v2247, %v2239
    %v2256 = vsel %vm1759, %v2248, %v2240
    %v2257 = vsel %vm1759, %v2249, %v2241
    %v2258 = vxor.u32 %v2254, 2147483648
    %v2259 = vmul.f32 %v2258, 1.442695
    %v2260 = vpow.pop %v2259
    %v2261 = vadd.f32 %v2260, 1.0
    %v2262 = vrcp.pop %v2261
    %v2263 = vmul.f32 1.0, %v2262
    %v2264 = vxor.u32 %v2255, 2147483648
    %v2265 = vmul.f32 %v2264, 1.442695
    %v2266 = vpow.pop %v2265
    %v2267 = vadd.f32 %v2266, 1.0
    %v2268 = vrcp.pop %v2267
    %v2269 = vmul.f32 1.0, %v2268
    %v2270 = vtanh.pop %v2256
    %v2271 = vxor.u32 %v2257, 2147483648
    %v2272 = vmul.f32 %v2271, 1.442695
    %v2273 = vpow.pop %v2272
    %v2274 = vadd.f32 %v2273, 1.0
    %v2275 = vrcp.pop %v2274
    %v2276 = vmul.f32 1.0, %v2275
    %v2277 = vmul.f32 %v2269, %v2038
    %v2278 = vmul.f32 %v2263, %v2270
    %v2279 = vadd.f32 %v2277, %v2278
    %v2280 = vtanh.pop %v2279
    %v2281 = vmul.f32 %v2276, %v2280
    %v2283 = vrot.slane %v2281, 2
    %v2285 = vpack.c.bf16 %v2281, %v2281
    %v2286 = vpack.c.bf16 %v2283, %v2283
    %2287 = vmatprep.subr.bf16.mxu0 %v1308
    %2288 = vmatpush1.bf16.msra.mxu0 %v1307
    %2289 = vmatprep.subr.bf16.mxu0 %v1316
    %2290 = vmatpush1.bf16.msra.mxu0 %v1315
    %2291 = vmatprep.subr.bf16.mxu0 %v1324
    %2292 = vmatpush1.bf16.msra.mxu0 %v1323
    %2293 = vmatprep.subr.bf16.mxu0 %v1332
    %2294 = vmatpush1.bf16.msra.mxu0 %v1331
    %2295 = vmatprep.subr.bf16.mxu0 %v1340
    %2296 = vmatpush1.bf16.msra.mxu0 %v1339
    %2297 = vmatprep.subr.bf16.mxu0 %v1348
    %2298 = vmatpush1.bf16.msra.mxu0 %v1347
    %2299 = vmatprep.subr.bf16.mxu0 %v1356
    %2300 = vmatpush1.bf16.msra.mxu0 %v1355
    %2301 = vmatprep.subr.bf16.mxu0 %v1364
    %2302 = vmatpush1.bf16.msra.mxu0 %v1363
    %2303 = vmatprep.subr.bf16.mxu0 %v1372
    %2304 = vmatpush1.bf16.msra.mxu0 %v1371
    %2305 = vmatprep.subr.bf16.mxu0 %v1380
    %2306 = vmatpush1.bf16.msra.mxu0 %v1379
    %2307 = vmatprep.subr.bf16.mxu0 %v1388
    %2308 = vmatpush1.bf16.msra.mxu0 %v1387
    %2309 = vmatprep.subr.bf16.mxu0 %v1396
    %2310 = vmatpush1.bf16.msra.mxu0 %v1395
    %2311 = vmatprep.subr.bf16.mxu0 %v1404
    %2312 = vmatpush1.bf16.msra.mxu0 %v1403
    %2313 = vmatprep.subr.bf16.mxu0 %v1412
    %2314 = vmatpush1.bf16.msra.mxu0 %v1411
    %2315 = vmatprep.subr.bf16.mxu0 %v1420
    %2316 = vmatpush1.bf16.msra.mxu0 %v1419
    %2317 = vmatprep.subr.bf16.mxu0 %v1428
    %2318 = vmatpush1.bf16.msra.mxu0 %v1427
    %2319 = vmatprep.mubr.bf16.mxu0 %v2286
    %2320 = vmatmul.mubr.bf16.gmra.mrb[0].mxu0 %v2285
    %v2321 = vpop.f32.mrb[0].mxu0
    %v2322 = vadd.f32 0.0, %v2321
    %v2323 = vpop.f32.mrb[0].mxu0
    %v2324 = vadd.f32 0.0, %v2323
    %v2325 = vpop.f32.mrb[0].mxu0
    %v2326 = vpop.f32.mrb[0].mxu0
    %2327 = vdwg.mxu0
    %2328 = vmatprep.subr.bf16.mxu0 %v1310
    %2329 = vmatpush1.bf16.msra.mxu0 %v1309
    %2330 = vmatprep.subr.bf16.mxu0 %v1318
    %2331 = vmatpush1.bf16.msra.mxu0 %v1317
    %2332 = vmatprep.subr.bf16.mxu0 %v1326
    %2333 = vmatpush1.bf16.msra.mxu0 %v1325
    %2334 = vmatprep.subr.bf16.mxu0 %v1334
    %2335 = vmatpush1.bf16.msra.mxu0 %v1333
    %2336 = vmatprep.subr.bf16.mxu0 %v1342
    %2337 = vmatpush1.bf16.msra.mxu0 %v1341
    %2338 = vmatprep.subr.bf16.mxu0 %v1350
    %2339 = vmatpush1.bf16.msra.mxu0 %v1349
    %2340 = vmatprep.subr.bf16.mxu0 %v1358
    %2341 = vmatpush1.bf16.msra.mxu0 %v1357
    %2342 = vmatprep.subr.bf16.mxu0 %v1366
    %2343 = vmatpush1.bf16.msra.mxu0 %v1365
    %2344 = vmatprep.subr.bf16.mxu0 %v1374
    %2345 = vmatpush1.bf16.msra.mxu0 %v1373
    %2346 = vmatprep.subr.bf16.mxu0 %v1382
    %2347 = vmatpush1.bf16.msra.mxu0 %v1381
    %2348 = vmatprep.subr.bf16.mxu0 %v1390
    %2349 = vmatpush1.bf16.msra.mxu0 %v1389
    %2350 = vmatprep.subr.bf16.mxu0 %v1398
    %2351 = vmatpush1.bf16.msra.mxu0 %v1397
    %2352 = vmatprep.subr.bf16.mxu0 %v1406
    %2353 = vmatpush1.bf16.msra.mxu0 %v1405
    %2354 = vmatprep.subr.bf16.mxu0 %v1414
    %2355 = vmatpush1.bf16.msra.mxu0 %v1413
    %2356 = vmatprep.subr.bf16.mxu0 %v1422
    %2357 = vmatpush1.bf16.msra.mxu0 %v1421
    %2358 = vmatprep.subr.bf16.mxu0 %v1430
    %2359 = vmatpush1.bf16.msra.mxu0 %v1429
    %2360 = vmatprep.mubr.bf16.mxu0 %v2286
    %2361 = vmatmul.mubr.bf16.gmra.mrb[0].mxu0 %v2285
    %v2362 = vpop.f32.mrb[0].mxu0
    %v2363 = vadd.f32 0.0, %v2362
    %v2364 = vpop.f32.mrb[0].mxu0
    %v2365 = vadd.f32 0.0, %v2364
    %v2366 = vpop.f32.mrb[0].mxu0
    %v2367 = vpop.f32.mrb[0].mxu0
    %2368 = vdwg.mxu0
    %2369 = vmatprep.subr.bf16.mxu0 %v1312
    %2370 = vmatpush1.bf16.msra.mxu0 %v1311
    %2371 = vmatprep.subr.bf16.mxu0 %v1320
    %2372 = vmatpush1.bf16.msra.mxu0 %v1319
    %2373 = vmatprep.subr.bf16.mxu0 %v1328
    %2374 = vmatpush1.bf16.msra.mxu0 %v1327
    %2375 = vmatprep.subr.bf16.mxu0 %v1336
    %2376 = vmatpush1.bf16.msra.mxu0 %v1335
    %2377 = vmatprep.subr.bf16.mxu0 %v1344
    %2378 = vmatpush1.bf16.msra.mxu0 %v1343
    %2379 = vmatprep.subr.bf16.mxu0 %v1352
    %2380 = vmatpush1.bf16.msra.mxu0 %v1351
    %2381 = vmatprep.subr.bf16.mxu0 %v1360
    %2382 = vmatpush1.bf16.msra.mxu0 %v1359
    %2383 = vmatprep.subr.bf16.mxu0 %v1368
    %2384 = vmatpush1.bf16.msra.mxu0 %v1367
    %2385 = vmatprep.subr.bf16.mxu0 %v1376
    %2386 = vmatpush1.bf16.msra.mxu0 %v1375
    %2387 = vmatprep.subr.bf16.mxu0 %v1384
    %2388 = vmatpush1.bf16.msra.mxu0 %v1383
    %2389 = vmatprep.subr.bf16.mxu0 %v1392
    %2390 = vmatpush1.bf16.msra.mxu0 %v1391
    %2391 = vmatprep.subr.bf16.mxu0 %v1400
    %2392 = vmatpush1.bf16.msra.mxu0 %v1399
    %2393 = vmatprep.subr.bf16.mxu0 %v1408
    %2394 = vmatpush1.bf16.msra.mxu0 %v1407
    %2395 = vmatprep.subr.bf16.mxu0 %v1416
    %2396 = vmatpush1.bf16.msra.mxu0 %v1415
    %2397 = vmatprep.subr.bf16.mxu0 %v1424
    %2398 = vmatpush1.bf16.msra.mxu0 %v1423
    %2399 = vmatprep.subr.bf16.mxu0 %v1432
    %2400 = vmatpush1.bf16.msra.mxu0 %v1431
    %2401 = vmatprep.mubr.bf16.mxu0 %v2286
    %2402 = vmatmul.mubr.bf16.gmra.mrb[0].mxu0 %v2285
    %v2403 = vpop.f32.mrb[0].mxu0
    %v2404 = vadd.f32 0.0, %v2403
    %v2405 = vpop.f32.mrb[0].mxu0
    %v2406 = vadd.f32 0.0, %v2405
    %v2407 = vpop.f32.mrb[0].mxu0
    %v2408 = vpop.f32.mrb[0].mxu0
    %2409 = vdwg.mxu0
    %2410 = vmatprep.subr.bf16.mxu0 %v1314
    %2411 = vmatpush1.bf16.msra.mxu0 %v1313
    %2412 = vmatprep.subr.bf16.mxu0 %v1322
    %2413 = vmatpush1.bf16.msra.mxu0 %v1321
    %2414 = vmatprep.subr.bf16.mxu0 %v1330
    %2415 = vmatpush1.bf16.msra.mxu0 %v1329
    %2416 = vmatprep.subr.bf16.mxu0 %v1338
    %2417 = vmatpush1.bf16.msra.mxu0 %v1337
    %2418 = vmatprep.subr.bf16.mxu0 %v1346
    %2419 = vmatpush1.bf16.msra.mxu0 %v1345
    %2420 = vmatprep.subr.bf16.mxu0 %v1354
    %2421 = vmatpush1.bf16.msra.mxu0 %v1353
    %2422 = vmatprep.subr.bf16.mxu0 %v1362
    %2423 = vmatpush1.bf16.msra.mxu0 %v1361
    %2424 = vmatprep.subr.bf16.mxu0 %v1370
    %2425 = vmatpush1.bf16.msra.mxu0 %v1369
    %2426 = vmatprep.subr.bf16.mxu0 %v1378
    %2427 = vmatpush1.bf16.msra.mxu0 %v1377
    %2428 = vmatprep.subr.bf16.mxu0 %v1386
    %2429 = vmatpush1.bf16.msra.mxu0 %v1385
    %2430 = vmatprep.subr.bf16.mxu0 %v1394
    %2431 = vmatpush1.bf16.msra.mxu0 %v1393
    %2432 = vmatprep.subr.bf16.mxu0 %v1402
    %2433 = vmatpush1.bf16.msra.mxu0 %v1401
    %2434 = vmatprep.subr.bf16.mxu0 %v1410
    %2435 = vmatpush1.bf16.msra.mxu0 %v1409
    %2436 = vmatprep.subr.bf16.mxu0 %v1418
    %2437 = vmatpush1.bf16.msra.mxu0 %v1417
    %2438 = vmatprep.subr.bf16.mxu0 %v1426
    %2439 = vmatpush1.bf16.msra.mxu0 %v1425
    %2440 = vmatprep.subr.bf16.mxu0 %v1434
    %2441 = vmatpush1.bf16.msra.mxu0 %v1433
    %2442 = vmatprep.mubr.bf16.mxu0 %v2286
    %2443 = vmatmul.mubr.bf16.gmra.mrb[0].mxu0 %v2285
    %v2444 = vpop.f32.mrb[0].mxu0
    %v2445 = vadd.f32 0.0, %v2444
    %v2446 = vpop.f32.mrb[0].mxu0
    %v2447 = vadd.f32 0.0, %v2446
    %v2448 = vpop.f32.mrb[0].mxu0
    %v2449 = vpop.f32.mrb[0].mxu0
    %2450 = vdwg.mxu0
    %v2455 = vrot.slane %v2322, 2
    %v2456 = vrot.slane %v2324, 2
    %v2457 = vrot.slane %v2363, 2
    %v2458 = vrot.slane %v2365, 2
    %v2463 = vadd.f32 %v658, %v2455
    %v2464 = vadd.f32 %v660, %v2456
    %v2465 = vadd.f32 %v701, %v2457
    %v2466 = vadd.f32 %v703, %v2458
    %v2467 = vadd.f32 %v748, %v2404
    %v2468 = vadd.f32 %v750, %v2406
    %v2469 = vadd.f32 %v791, %v2445
    %v2470 = vadd.f32 %v793, %v2447
    %v2475 = vrot.slane %v2463, 6
    %v2476 = vrot.slane %v2464, 6
    %v2477 = vrot.slane %v2465, 6
    %v2478 = vrot.slane %v2466, 6
    %v2487 = vrot.slane %v2467, 6
    %v2488 = vrot.slane %v2468, 6
    %v2489 = vrot.slane %v2469, 6
    %v2490 = vrot.slane %v2470, 6
    %v2495 = vsel %vm1759, %v2475, %v2487
    %v2496 = vsel %vm1759, %v2476, %v2488
    %v2497 = vsel %vm1759, %v2477, %v2489
    %v2498 = vsel %vm1759, %v2478, %v2490
    %v2499 = vxor.u32 %v2495, 2147483648
    %v2500 = vmul.f32 %v2499, 1.442695
    %v2501 = vpow.pop %v2500
    %v2502 = vadd.f32 %v2501, 1.0
    %v2503 = vrcp.pop %v2502
    %v2504 = vmul.f32 1.0, %v2503
    %v2505 = vxor.u32 %v2496, 2147483648
    %v2506 = vmul.f32 %v2505, 1.442695
    %v2507 = vpow.pop %v2506
    %v2508 = vadd.f32 %v2507, 1.0
    %v2509 = vrcp.pop %v2508
    %v2510 = vmul.f32 1.0, %v2509
    %v2511 = vtanh.pop %v2497
    %v2512 = vxor.u32 %v2498, 2147483648
    %v2513 = vmul.f32 %v2512, 1.442695
    %v2514 = vpow.pop %v2513
    %v2515 = vadd.f32 %v2514, 1.0
    %v2516 = vrcp.pop %v2515
    %v2517 = vmul.f32 1.0, %v2516
    %v2518 = vmul.f32 %v2510, %v2279
    %v2519 = vmul.f32 %v2504, %v2511
    %v2520 = vadd.f32 %v2518, %v2519
    %v2521 = vtanh.pop %v2520
    %v2522 = vmul.f32 %v2517, %v2521
    %v2524 = vrot.slane %v2522, 2
    %v2526 = vpack.c.bf16 %v2522, %v2522
    %v2527 = vpack.c.bf16 %v2524, %v2524
    %2528 = vmatprep.subr.bf16.mxu0 %v1308
    %2529 = vmatpush1.bf16.msra.mxu0 %v1307
    %2530 = vmatprep.subr.bf16.mxu0 %v1316
    %2531 = vmatpush1.bf16.msra.mxu0 %v1315
    %2532 = vmatprep.subr.bf16.mxu0 %v1324
    %2533 = vmatpush1.bf16.msra.mxu0 %v1323
    %2534 = vmatprep.subr.bf16.mxu0 %v1332
    %2535 = vmatpush1.bf16.msra.mxu0 %v1331
    %2536 = vmatprep.subr.bf16.mxu0 %v1340
    %2537 = vmatpush1.bf16.msra.mxu0 %v1339
    %2538 = vmatprep.subr.bf16.mxu0 %v1348
    %2539 = vmatpush1.bf16.msra.mxu0 %v1347
    %2540 = vmatprep.subr.bf16.mxu0 %v1356
    %2541 = vmatpush1.bf16.msra.mxu0 %v1355
    %2542 = vmatprep.subr.bf16.mxu0 %v1364
    %2543 = vmatpush1.bf16.msra.mxu0 %v1363
    %2544 = vmatprep.subr.bf16.mxu0 %v1372
    %2545 = vmatpush1.bf16.msra.mxu0 %v1371
    %2546 = vmatprep.subr.bf16.mxu0 %v1380
    %2547 = vmatpush1.bf16.msra.mxu0 %v1379
    %2548 = vmatprep.subr.bf16.mxu0 %v1388
    %2549 = vmatpush1.bf16.msra.mxu0 %v1387
    %2550 = vmatprep.subr.bf16.mxu0 %v1396
    %2551 = vmatpush1.bf16.msra.mxu0 %v1395
    %2552 = vmatprep.subr.bf16.mxu0 %v1404
    %2553 = vmatpush1.bf16.msra.mxu0 %v1403
    %2554 = vmatprep.subr.bf16.mxu0 %v1412
    %2555 = vmatpush1.bf16.msra.mxu0 %v1411
    %2556 = vmatprep.subr.bf16.mxu0 %v1420
    %2557 = vmatpush1.bf16.msra.mxu0 %v1419
    %2558 = vmatprep.subr.bf16.mxu0 %v1428
    %2559 = vmatpush1.bf16.msra.mxu0 %v1427
    %2560 = vmatprep.mubr.bf16.mxu0 %v2527
    %2561 = vmatmul.mubr.bf16.gmra.mrb[0].mxu0 %v2526
    %v2562 = vpop.f32.mrb[0].mxu0
    %v2563 = vadd.f32 0.0, %v2562
    %v2564 = vpop.f32.mrb[0].mxu0
    %v2565 = vadd.f32 0.0, %v2564
    %v2566 = vpop.f32.mrb[0].mxu0
    %v2567 = vpop.f32.mrb[0].mxu0
    %2568 = vdwg.mxu0
    %2569 = vmatprep.subr.bf16.mxu0 %v1310
    %2570 = vmatpush1.bf16.msra.mxu0 %v1309
    %2571 = vmatprep.subr.bf16.mxu0 %v1318
    %2572 = vmatpush1.bf16.msra.mxu0 %v1317
    %2573 = vmatprep.subr.bf16.mxu0 %v1326
    %2574 = vmatpush1.bf16.msra.mxu0 %v1325
    %2575 = vmatprep.subr.bf16.mxu0 %v1334
    %2576 = vmatpush1.bf16.msra.mxu0 %v1333
    %2577 = vmatprep.subr.bf16.mxu0 %v1342
    %2578 = vmatpush1.bf16.msra.mxu0 %v1341
    %2579 = vmatprep.subr.bf16.mxu0 %v1350
    %2580 = vmatpush1.bf16.msra.mxu0 %v1349
    %2581 = vmatprep.subr.bf16.mxu0 %v1358
    %2582 = vmatpush1.bf16.msra.mxu0 %v1357
    %2583 = vmatprep.subr.bf16.mxu0 %v1366
    %2584 = vmatpush1.bf16.msra.mxu0 %v1365
    %2585 = vmatprep.subr.bf16.mxu0 %v1374
    %2586 = vmatpush1.bf16.msra.mxu0 %v1373
    %2587 = vmatprep.subr.bf16.mxu0 %v1382
    %2588 = vmatpush1.bf16.msra.mxu0 %v1381
    %2589 = vmatprep.subr.bf16.mxu0 %v1390
    %2590 = vmatpush1.bf16.msra.mxu0 %v1389
    %2591 = vmatprep.subr.bf16.mxu0 %v1398
    %2592 = vmatpush1.bf16.msra.mxu0 %v1397
    %2593 = vmatprep.subr.bf16.mxu0 %v1406
    %2594 = vmatpush1.bf16.msra.mxu0 %v1405
    %2595 = vmatprep.subr.bf16.mxu0 %v1414
    %2596 = vmatpush1.bf16.msra.mxu0 %v1413
    %2597 = vmatprep.subr.bf16.mxu0 %v1422
    %2598 = vmatpush1.bf16.msra.mxu0 %v1421
    %2599 = vmatprep.subr.bf16.mxu0 %v1430
    %2600 = vmatpush1.bf16.msra.mxu0 %v1429
    %2601 = vmatprep.mubr.bf16.mxu0 %v2527
    %2602 = vmatmul.mubr.bf16.gmra.mrb[0].mxu0 %v2526
    %v2603 = vpop.f32.mrb[0].mxu0
    %v2604 = vadd.f32 0.0, %v2603
    %v2605 = vpop.f32.mrb[0].mxu0
    %v2606 = vadd.f32 0.0, %v2605
    %v2607 = vpop.f32.mrb[0].mxu0
    %v2608 = vpop.f32.mrb[0].mxu0
    %2609 = vdwg.mxu0
    %2610 = vmatprep.subr.bf16.mxu0 %v1312
    %2611 = vmatpush1.bf16.msra.mxu0 %v1311
    %2612 = vmatprep.subr.bf16.mxu0 %v1320
    %2613 = vmatpush1.bf16.msra.mxu0 %v1319
    %2614 = vmatprep.subr.bf16.mxu0 %v1328
    %2615 = vmatpush1.bf16.msra.mxu0 %v1327
    %2616 = vmatprep.subr.bf16.mxu0 %v1336
    %2617 = vmatpush1.bf16.msra.mxu0 %v1335
    %2618 = vmatprep.subr.bf16.mxu0 %v1344
    %2619 = vmatpush1.bf16.msra.mxu0 %v1343
    %2620 = vmatprep.subr.bf16.mxu0 %v1352
    %2621 = vmatpush1.bf16.msra.mxu0 %v1351
    %2622 = vmatprep.subr.bf16.mxu0 %v1360
    %2623 = vmatpush1.bf16.msra.mxu0 %v1359
    %2624 = vmatprep.subr.bf16.mxu0 %v1368
    %2625 = vmatpush1.bf16.msra.mxu0 %v1367
    %2626 = vmatprep.subr.bf16.mxu0 %v1376
    %2627 = vmatpush1.bf16.msra.mxu0 %v1375
    %2628 = vmatprep.subr.bf16.mxu0 %v1384
    %2629 = vmatpush1.bf16.msra.mxu0 %v1383
    %2630 = vmatprep.subr.bf16.mxu0 %v1392
    %2631 = vmatpush1.bf16.msra.mxu0 %v1391
    %2632 = vmatprep.subr.bf16.mxu0 %v1400
    %2633 = vmatpush1.bf16.msra.mxu0 %v1399
    %2634 = vmatprep.subr.bf16.mxu0 %v1408
    %2635 = vmatpush1.bf16.msra.mxu0 %v1407
    %2636 = vmatprep.subr.bf16.mxu0 %v1416
    %2637 = vmatpush1.bf16.msra.mxu0 %v1415
    %2638 = vmatprep.subr.bf16.mxu0 %v1424
    %2639 = vmatpush1.bf16.msra.mxu0 %v1423
    %2640 = vmatprep.subr.bf16.mxu0 %v1432
    %2641 = vmatpush1.bf16.msra.mxu0 %v1431
    %2642 = vmatprep.mubr.bf16.mxu0 %v2527
    %2643 = vmatmul.mubr.bf16.gmra.mrb[0].mxu0 %v2526
    %v2644 = vpop.f32.mrb[0].mxu0
    %v2645 = vadd.f32 0.0, %v2644
    %v2646 = vpop.f32.mrb[0].mxu0
    %v2647 = vadd.f32 0.0, %v2646
    %v2648 = vpop.f32.mrb[0].mxu0
    %v2649 = vpop.f32.mrb[0].mxu0
    %2650 = vdwg.mxu0
    %2651 = vmatprep.subr.bf16.mxu0 %v1314
    %2652 = vmatpush1.bf16.msra.mxu0 %v1313
    %2653 = vmatprep.subr.bf16.mxu0 %v1322
    %2654 = vmatpush1.bf16.msra.mxu0 %v1321
    %2655 = vmatprep.subr.bf16.mxu0 %v1330
    %2656 = vmatpush1.bf16.msra.mxu0 %v1329
    %2657 = vmatprep.subr.bf16.mxu0 %v1338
    %2658 = vmatpush1.bf16.msra.mxu0 %v1337
    %2659 = vmatprep.subr.bf16.mxu0 %v1346
    %2660 = vmatpush1.bf16.msra.mxu0 %v1345
    %2661 = vmatprep.subr.bf16.mxu0 %v1354
    %2662 = vmatpush1.bf16.msra.mxu0 %v1353
    %2663 = vmatprep.subr.bf16.mxu0 %v1362
    %2664 = vmatpush1.bf16.msra.mxu0 %v1361
    %2665 = vmatprep.subr.bf16.mxu0 %v1370
    %2666 = vmatpush1.bf16.msra.mxu0 %v1369
    %2667 = vmatprep.subr.bf16.mxu0 %v1378
    %2668 = vmatpush1.bf16.msra.mxu0 %v1377
    %2669 = vmatprep.subr.bf16.mxu0 %v1386
    %2670 = vmatpush1.bf16.msra.mxu0 %v1385
    %2671 = vmatprep.subr.bf16.mxu0 %v1394
    %2672 = vmatpush1.bf16.msra.mxu0 %v1393
    %2673 = vmatprep.subr.bf16.mxu0 %v1402
    %2674 = vmatpush1.bf16.msra.mxu0 %v1401
    %2675 = vmatprep.subr.bf16.mxu0 %v1410
    %2676 = vmatpush1.bf16.msra.mxu0 %v1409
    %2677 = vmatprep.subr.bf16.mxu0 %v1418
    %2678 = vmatpush1.bf16.msra.mxu0 %v1417
    %2679 = vmatprep.subr.bf16.mxu0 %v1426
    %2680 = vmatpush1.bf16.msra.mxu0 %v1425
    %2681 = vmatprep.subr.bf16.mxu0 %v1434
    %2682 = vmatpush1.bf16.msra.mxu0 %v1433
    %2683 = vmatprep.mubr.bf16.mxu0 %v2527
    %2684 = vmatmul.mubr.bf16.gmra.mrb[0].mxu0 %v2526
    %v2685 = vpop.f32.mrb[0].mxu0
    %v2686 = vadd.f32 0.0, %v2685
    %v2687 = vpop.f32.mrb[0].mxu0
    %v2688 = vadd.f32 0.0, %v2687
    %v2689 = vpop.f32.mrb[0].mxu0
    %v2690 = vpop.f32.mrb[0].mxu0
    %2691 = vdwg.mxu0
    %v2692 = vadd.f32 %v662, %v2563
    %v2693 = vadd.f32 %v664, %v2565
    %v2694 = vadd.f32 %v705, %v2604
    %v2695 = vadd.f32 %v707, %v2606
    %v2700 = vrot.slane %v2645, 2
    %v2701 = vrot.slane %v2647, 2
    %v2702 = vrot.slane %v2686, 2
    %v2703 = vrot.slane %v2688, 2
    %v2708 = vadd.f32 %v744, %v2700
    %v2709 = vadd.f32 %v746, %v2701
    %v2710 = vadd.f32 %v787, %v2702
    %v2711 = vadd.f32 %v789, %v2703
    %v2716 = vrot.slane %v2708, 4
    %v2717 = vrot.slane %v2709, 4
    %v2718 = vrot.slane %v2710, 4
    %v2719 = vrot.slane %v2711, 4
    %v2724 = vsel %vm1759, %v2692, %v2716
    %v2725 = vsel %vm1759, %v2693, %v2717
    %v2726 = vsel %vm1759, %v2694, %v2718
    %v2727 = vsel %vm1759, %v2695, %v2719
    %v2728 = vxor.u32 %v2724, 2147483648
    %v2729 = vmul.f32 %v2728, 1.442695
    %v2730 = vpow.pop %v2729
    %v2731 = vadd.f32 %v2730, 1.0
    %v2732 = vrcp.pop %v2731
    %v2733 = vmul.f32 1.0, %v2732
    %v2734 = vxor.u32 %v2725, 2147483648
    %v2735 = vmul.f32 %v2734, 1.442695
    %v2736 = vpow.pop %v2735
    %v2737 = vadd.f32 %v2736, 1.0
    %v2738 = vrcp.pop %v2737
    %v2739 = vmul.f32 1.0, %v2738
    %v2740 = vtanh.pop %v2726
    %v2741 = vxor.u32 %v2727, 2147483648
    %v2742 = vmul.f32 %v2741, 1.442695
    %v2743 = vpow.pop %v2742
    %v2744 = vadd.f32 %v2743, 1.0
    %v2745 = vrcp.pop %v2744
    %v2746 = vmul.f32 1.0, %v2745
    %v2747 = vmul.f32 %v2739, %v2520
    %v2748 = vmul.f32 %v2733, %v2740
    %v2749 = vadd.f32 %v2747, %v2748
    %v2750 = vtanh.pop %v2749
    %v2751 = vmul.f32 %v2746, %v2750
    %v2753 = vrot.slane %v2751, 2
    %v2755 = vpack.c.bf16 %v2751, %v2751
    %v2756 = vpack.c.bf16 %v2753, %v2753
    %2757 = vmatprep.subr.bf16.mxu0 %v1308
    %2758 = vmatpush1.bf16.msra.mxu0 %v1307
    %2759 = vmatprep.subr.bf16.mxu0 %v1316
    %2760 = vmatpush1.bf16.msra.mxu0 %v1315
    %2761 = vmatprep.subr.bf16.mxu0 %v1324
    %2762 = vmatpush1.bf16.msra.mxu0 %v1323
    %2763 = vmatprep.subr.bf16.mxu0 %v1332
    %2764 = vmatpush1.bf16.msra.mxu0 %v1331
    %2765 = vmatprep.subr.bf16.mxu0 %v1340
    %2766 = vmatpush1.bf16.msra.mxu0 %v1339
    %2767 = vmatprep.subr.bf16.mxu0 %v1348
    %2768 = vmatpush1.bf16.msra.mxu0 %v1347
    %2769 = vmatprep.subr.bf16.mxu0 %v1356
    %2770 = vmatpush1.bf16.msra.mxu0 %v1355
    %2771 = vmatprep.subr.bf16.mxu0 %v1364
    %2772 = vmatpush1.bf16.msra.mxu0 %v1363
    %2773 = vmatprep.subr.bf16.mxu0 %v1372
    %2774 = vmatpush1.bf16.msra.mxu0 %v1371
    %2775 = vmatprep.subr.bf16.mxu0 %v1380
    %2776 = vmatpush1.bf16.msra.mxu0 %v1379
    %2777 = vmatprep.subr.bf16.mxu0 %v1388
    %2778 = vmatpush1.bf16.msra.mxu0 %v1387
    %2779 = vmatprep.subr.bf16.mxu0 %v1396
    %2780 = vmatpush1.bf16.msra.mxu0 %v1395
    %2781 = vmatprep.subr.bf16.mxu0 %v1404
    %2782 = vmatpush1.bf16.msra.mxu0 %v1403
    %2783 = vmatprep.subr.bf16.mxu0 %v1412
    %2784 = vmatpush1.bf16.msra.mxu0 %v1411
    %2785 = vmatprep.subr.bf16.mxu0 %v1420
    %2786 = vmatpush1.bf16.msra.mxu0 %v1419
    %2787 = vmatprep.subr.bf16.mxu0 %v1428
    %2788 = vmatpush1.bf16.msra.mxu0 %v1427
    %2789 = vmatprep.mubr.bf16.mxu0 %v2756
    %2790 = vmatmul.mubr.bf16.gmra.mrb[0].mxu0 %v2755
    %v2791 = vpop.f32.mrb[0].mxu0
    %v2792 = vadd.f32 0.0, %v2791
    %v2793 = vpop.f32.mrb[0].mxu0
    %v2794 = vadd.f32 0.0, %v2793
    %v2795 = vpop.f32.mrb[0].mxu0
    %v2796 = vpop.f32.mrb[0].mxu0
    %2797 = vdwg.mxu0
    %2798 = vmatprep.subr.bf16.mxu0 %v1310
    %2799 = vmatpush1.bf16.msra.mxu0 %v1309
    %2800 = vmatprep.subr.bf16.mxu0 %v1318
    %2801 = vmatpush1.bf16.msra.mxu0 %v1317
    %2802 = vmatprep.subr.bf16.mxu0 %v1326
    %2803 = vmatpush1.bf16.msra.mxu0 %v1325
    %2804 = vmatprep.subr.bf16.mxu0 %v1334
    %2805 = vmatpush1.bf16.msra.mxu0 %v1333
    %2806 = vmatprep.subr.bf16.mxu0 %v1342
    %2807 = vmatpush1.bf16.msra.mxu0 %v1341
    %2808 = vmatprep.subr.bf16.mxu0 %v1350
    %2809 = vmatpush1.bf16.msra.mxu0 %v1349
    %2810 = vmatprep.subr.bf16.mxu0 %v1358
    %2811 = vmatpush1.bf16.msra.mxu0 %v1357
    %2812 = vmatprep.subr.bf16.mxu0 %v1366
    %2813 = vmatpush1.bf16.msra.mxu0 %v1365
    %2814 = vmatprep.subr.bf16.mxu0 %v1374
    %2815 = vmatpush1.bf16.msra.mxu0 %v1373
    %2816 = vmatprep.subr.bf16.mxu0 %v1382
    %2817 = vmatpush1.bf16.msra.mxu0 %v1381
    %2818 = vmatprep.subr.bf16.mxu0 %v1390
    %2819 = vmatpush1.bf16.msra.mxu0 %v1389
    %2820 = vmatprep.subr.bf16.mxu0 %v1398
    %2821 = vmatpush1.bf16.msra.mxu0 %v1397
    %2822 = vmatprep.subr.bf16.mxu0 %v1406
    %2823 = vmatpush1.bf16.msra.mxu0 %v1405
    %2824 = vmatprep.subr.bf16.mxu0 %v1414
    %2825 = vmatpush1.bf16.msra.mxu0 %v1413
    %2826 = vmatprep.subr.bf16.mxu0 %v1422
    %2827 = vmatpush1.bf16.msra.mxu0 %v1421
    %2828 = vmatprep.subr.bf16.mxu0 %v1430
    %2829 = vmatpush1.bf16.msra.mxu0 %v1429
    %2830 = vmatprep.mubr.bf16.mxu0 %v2756
    %2831 = vmatmul.mubr.bf16.gmra.mrb[0].mxu0 %v2755
    %v2832 = vpop.f32.mrb[0].mxu0
    %v2833 = vadd.f32 0.0, %v2832
    %v2834 = vpop.f32.mrb[0].mxu0
    %v2835 = vadd.f32 0.0, %v2834
    %v2836 = vpop.f32.mrb[0].mxu0
    %v2837 = vpop.f32.mrb[0].mxu0
    %2838 = vdwg.mxu0
    %2839 = vmatprep.subr.bf16.mxu0 %v1312
    %2840 = vmatpush1.bf16.msra.mxu0 %v1311
    %2841 = vmatprep.subr.bf16.mxu0 %v1320
    %2842 = vmatpush1.bf16.msra.mxu0 %v1319
    %2843 = vmatprep.subr.bf16.mxu0 %v1328
    %2844 = vmatpush1.bf16.msra.mxu0 %v1327
    %2845 = vmatprep.subr.bf16.mxu0 %v1336
    %2846 = vmatpush1.bf16.msra.mxu0 %v1335
    %2847 = vmatprep.subr.bf16.mxu0 %v1344
    %2848 = vmatpush1.bf16.msra.mxu0 %v1343
    %2849 = vmatprep.subr.bf16.mxu0 %v1352
    %2850 = vmatpush1.bf16.msra.mxu0 %v1351
    %2851 = vmatprep.subr.bf16.mxu0 %v1360
    %2852 = vmatpush1.bf16.msra.mxu0 %v1359
    %2853 = vmatprep.subr.bf16.mxu0 %v1368
    %2854 = vmatpush1.bf16.msra.mxu0 %v1367
    %2855 = vmatprep.subr.bf16.mxu0 %v1376
    %2856 = vmatpush1.bf16.msra.mxu0 %v1375
    %2857 = vmatprep.subr.bf16.mxu0 %v1384
    %2858 = vmatpush1.bf16.msra.mxu0 %v1383
    %2859 = vmatprep.subr.bf16.mxu0 %v1392
    %2860 = vmatpush1.bf16.msra.mxu0 %v1391
    %2861 = vmatprep.subr.bf16.mxu0 %v1400
    %2862 = vmatpush1.bf16.msra.mxu0 %v1399
    %2863 = vmatprep.subr.bf16.mxu0 %v1408
    %2864 = vmatpush1.bf16.msra.mxu0 %v1407
    %2865 = vmatprep.subr.bf16.mxu0 %v1416
    %2866 = vmatpush1.bf16.msra.mxu0 %v1415
    %2867 = vmatprep.subr.bf16.mxu0 %v1424
    %2868 = vmatpush1.bf16.msra.mxu0 %v1423
    %2869 = vmatprep.subr.bf16.mxu0 %v1432
    %2870 = vmatpush1.bf16.msra.mxu0 %v1431
    %2871 = vmatprep.mubr.bf16.mxu0 %v2756
    %2872 = vmatmul.mubr.bf16.gmra.mrb[0].mxu0 %v2755
    %v2873 = vpop.f32.mrb[0].mxu0
    %v2874 = vadd.f32 0.0, %v2873
    %v2875 = vpop.f32.mrb[0].mxu0
    %v2876 = vadd.f32 0.0, %v2875
    %v2877 = vpop.f32.mrb[0].mxu0
    %v2878 = vpop.f32.mrb[0].mxu0
    %2879 = vdwg.mxu0
    %2880 = vmatprep.subr.bf16.mxu0 %v1314
    %2881 = vmatpush1.bf16.msra.mxu0 %v1313
    %2882 = vmatprep.subr.bf16.mxu0 %v1322
    %2883 = vmatpush1.bf16.msra.mxu0 %v1321
    %2884 = vmatprep.subr.bf16.mxu0 %v1330
    %2885 = vmatpush1.bf16.msra.mxu0 %v1329
    %2886 = vmatprep.subr.bf16.mxu0 %v1338
    %2887 = vmatpush1.bf16.msra.mxu0 %v1337
    %2888 = vmatprep.subr.bf16.mxu0 %v1346
    %2889 = vmatpush1.bf16.msra.mxu0 %v1345
    %2890 = vmatprep.subr.bf16.mxu0 %v1354
    %2891 = vmatpush1.bf16.msra.mxu0 %v1353
    %2892 = vmatprep.subr.bf16.mxu0 %v1362
    %2893 = vmatpush1.bf16.msra.mxu0 %v1361
    %2894 = vmatprep.subr.bf16.mxu0 %v1370
    %2895 = vmatpush1.bf16.msra.mxu0 %v1369
    %2896 = vmatprep.subr.bf16.mxu0 %v1378
    %2897 = vmatpush1.bf16.msra.mxu0 %v1377
    %2898 = vmatprep.subr.bf16.mxu0 %v1386
    %2899 = vmatpush1.bf16.msra.mxu0 %v1385
    %2900 = vmatprep.subr.bf16.mxu0 %v1394
    %2901 = vmatpush1.bf16.msra.mxu0 %v1393
    %2902 = vmatprep.subr.bf16.mxu0 %v1402
    %2903 = vmatpush1.bf16.msra.mxu0 %v1401
    %2904 = vmatprep.subr.bf16.mxu0 %v1410
    %2905 = vmatpush1.bf16.msra.mxu0 %v1409
    %2906 = vmatprep.subr.bf16.mxu0 %v1418
    %2907 = vmatpush1.bf16.msra.mxu0 %v1417
    %2908 = vmatprep.subr.bf16.mxu0 %v1426
    %2909 = vmatpush1.bf16.msra.mxu0 %v1425
    %2910 = vmatprep.subr.bf16.mxu0 %v1434
    %2911 = vmatpush1.bf16.msra.mxu0 %v1433
    %2912 = vmatprep.mubr.bf16.mxu0 %v2756
    %2913 = vmatmul.mubr.bf16.gmra.mrb[0].mxu0 %v2755
    %v2914 = vpop.f32.mrb[0].mxu0
    %v2915 = vadd.f32 0.0, %v2914
    %v2916 = vpop.f32.mrb[0].mxu0
    %v2917 = vadd.f32 0.0, %v2916
    %v2918 = vpop.f32.mrb[0].mxu0
    %v2919 = vpop.f32.mrb[0].mxu0
    %2920 = vdwg.mxu0
    %v2925 = vrot.slane %v2792, 6
    %v2926 = vrot.slane %v2794, 6
    %v2927 = vrot.slane %v2833, 6
    %v2928 = vrot.slane %v2835, 6
    %v2933 = vadd.f32 %v662, %v2925
    %v2934 = vadd.f32 %v664, %v2926
    %v2935 = vadd.f32 %v705, %v2927
    %v2936 = vadd.f32 %v707, %v2928
    %v2941 = vrot.slane %v2874, 4
    %v2942 = vrot.slane %v2876, 4
    %v2943 = vrot.slane %v2915, 4
    %v2944 = vrot.slane %v2917, 4
    %v2949 = vadd.f32 %v744, %v2941
    %v2950 = vadd.f32 %v746, %v2942
    %v2951 = vadd.f32 %v787, %v2943
    %v2952 = vadd.f32 %v789, %v2944
    %v2957 = vrot.slane %v2933, 2
    %v2958 = vrot.slane %v2934, 2
    %v2959 = vrot.slane %v2935, 2
    %v2960 = vrot.slane %v2936, 2
    %v2969 = vrot.slane %v2949, 2
    %v2970 = vrot.slane %v2950, 2
    %v2971 = vrot.slane %v2951, 2
    %v2972 = vrot.slane %v2952, 2
    %v2977 = vsel %vm1759, %v2957, %v2969
    %v2978 = vsel %vm1759, %v2958, %v2970
    %v2979 = vsel %vm1759, %v2959, %v2971
    %v2980 = vsel %vm1759, %v2960, %v2972
    %v2981 = vxor.u32 %v2977, 2147483648
    %v2982 = vmul.f32 %v2981, 1.442695
    %v2983 = vpow.pop %v2982
    %v2984 = vadd.f32 %v2983, 1.0
    %v2985 = vrcp.pop %v2984
    %v2986 = vmul.f32 1.0, %v2985
    %v2987 = vxor.u32 %v2978, 2147483648
    %v2988 = vmul.f32 %v2987, 1.442695
    %v2989 = vpow.pop %v2988
    %v2990 = vadd.f32 %v2989, 1.0
    %v2991 = vrcp.pop %v2990
    %v2992 = vmul.f32 1.0, %v2991
    %v2993 = vtanh.pop %v2979
    %v2994 = vxor.u32 %v2980, 2147483648
    %v2995 = vmul.f32 %v2994, 1.442695
    %v2996 = vpow.pop %v2995
    %v2997 = vadd.f32 %v2996, 1.0
    %v2998 = vrcp.pop %v2997
    %v2999 = vmul.f32 1.0, %v2998
    %v3000 = vmul.f32 %v2992, %v2749
    %v3001 = vmul.f32 %v2986, %v2993
    %v3002 = vadd.f32 %v3000, %v3001
    %v3003 = vtanh.pop %v3002
    %v3004 = vmul.f32 %v2999, %v3003
    %v3006 = vrot.slane %v3004, 2
    %v3008 = vpack.c.bf16 %v3004, %v3004
    %v3009 = vpack.c.bf16 %v3006, %v3006
    %3010 = vmatprep.subr.bf16.mxu0 %v1308
    %3011 = vmatpush1.bf16.msra.mxu0 %v1307
    %3012 = vmatprep.subr.bf16.mxu0 %v1316
    %3013 = vmatpush1.bf16.msra.mxu0 %v1315
    %3014 = vmatprep.subr.bf16.mxu0 %v1324
    %3015 = vmatpush1.bf16.msra.mxu0 %v1323
    %3016 = vmatprep.subr.bf16.mxu0 %v1332
    %3017 = vmatpush1.bf16.msra.mxu0 %v1331
    %3018 = vmatprep.subr.bf16.mxu0 %v1340
    %3019 = vmatpush1.bf16.msra.mxu0 %v1339
    %3020 = vmatprep.subr.bf16.mxu0 %v1348
    %3021 = vmatpush1.bf16.msra.mxu0 %v1347
    %3022 = vmatprep.subr.bf16.mxu0 %v1356
    %3023 = vmatpush1.bf16.msra.mxu0 %v1355
    %3024 = vmatprep.subr.bf16.mxu0 %v1364
    %3025 = vmatpush1.bf16.msra.mxu0 %v1363
    %3026 = vmatprep.subr.bf16.mxu0 %v1372
    %3027 = vmatpush1.bf16.msra.mxu0 %v1371
    %3028 = vmatprep.subr.bf16.mxu0 %v1380
    %3029 = vmatpush1.bf16.msra.mxu0 %v1379
    %3030 = vmatprep.subr.bf16.mxu0 %v1388
    %3031 = vmatpush1.bf16.msra.mxu0 %v1387
    %3032 = vmatprep.subr.bf16.mxu0 %v1396
    %3033 = vmatpush1.bf16.msra.mxu0 %v1395
    %3034 = vmatprep.subr.bf16.mxu0 %v1404
    %3035 = vmatpush1.bf16.msra.mxu0 %v1403
    %3036 = vmatprep.subr.bf16.mxu0 %v1412
    %3037 = vmatpush1.bf16.msra.mxu0 %v1411
    %3038 = vmatprep.subr.bf16.mxu0 %v1420
    %3039 = vmatpush1.bf16.msra.mxu0 %v1419
    %3040 = vmatprep.subr.bf16.mxu0 %v1428
    %3041 = vmatpush1.bf16.msra.mxu0 %v1427
    %3042 = vmatprep.mubr.bf16.mxu0 %v3009
    %3043 = vmatmul.mubr.bf16.gmra.mrb[0].mxu0 %v3008
    %v3044 = vpop.f32.mrb[0].mxu0
    %v3045 = vadd.f32 0.0, %v3044
    %v3046 = vpop.f32.mrb[0].mxu0
    %v3047 = vadd.f32 0.0, %v3046
    %v3048 = vpop.f32.mrb[0].mxu0
    %v3049 = vpop.f32.mrb[0].mxu0
    %3050 = vdwg.mxu0
    %3051 = vmatprep.subr.bf16.mxu0 %v1310
    %3052 = vmatpush1.bf16.msra.mxu0 %v1309
    %3053 = vmatprep.subr.bf16.mxu0 %v1318
    %3054 = vmatpush1.bf16.msra.mxu0 %v1317
    %3055 = vmatprep.subr.bf16.mxu0 %v1326
    %3056 = vmatpush1.bf16.msra.mxu0 %v1325
    %3057 = vmatprep.subr.bf16.mxu0 %v1334
    %3058 = vmatpush1.bf16.msra.mxu0 %v1333
    %3059 = vmatprep.subr.bf16.mxu0 %v1342
    %3060 = vmatpush1.bf16.msra.mxu0 %v1341
    %3061 = vmatprep.subr.bf16.mxu0 %v1350
    %3062 = vmatpush1.bf16.msra.mxu0 %v1349
    %3063 = vmatprep.subr.bf16.mxu0 %v1358
    %3064 = vmatpush1.bf16.msra.mxu0 %v1357
    %3065 = vmatprep.subr.bf16.mxu0 %v1366
    %3066 = vmatpush1.bf16.msra.mxu0 %v1365
    %3067 = vmatprep.subr.bf16.mxu0 %v1374
    %3068 = vmatpush1.bf16.msra.mxu0 %v1373
    %3069 = vmatprep.subr.bf16.mxu0 %v1382
    %3070 = vmatpush1.bf16.msra.mxu0 %v1381
    %3071 = vmatprep.subr.bf16.mxu0 %v1390
    %3072 = vmatpush1.bf16.msra.mxu0 %v1389
    %3073 = vmatprep.subr.bf16.mxu0 %v1398
    %3074 = vmatpush1.bf16.msra.mxu0 %v1397
    %3075 = vmatprep.subr.bf16.mxu0 %v1406
    %3076 = vmatpush1.bf16.msra.mxu0 %v1405
    %3077 = vmatprep.subr.bf16.mxu0 %v1414
    %3078 = vmatpush1.bf16.msra.mxu0 %v1413
    %3079 = vmatprep.subr.bf16.mxu0 %v1422
    %3080 = vmatpush1.bf16.msra.mxu0 %v1421
    %3081 = vmatprep.subr.bf16.mxu0 %v1430
    %3082 = vmatpush1.bf16.msra.mxu0 %v1429
    %3083 = vmatprep.mubr.bf16.mxu0 %v3009
    %3084 = vmatmul.mubr.bf16.gmra.mrb[0].mxu0 %v3008
    %v3085 = vpop.f32.mrb[0].mxu0
    %v3086 = vadd.f32 0.0, %v3085
    %v3087 = vpop.f32.mrb[0].mxu0
    %v3088 = vadd.f32 0.0, %v3087
    %v3089 = vpop.f32.mrb[0].mxu0
    %v3090 = vpop.f32.mrb[0].mxu0
    %3091 = vdwg.mxu0
    %3092 = vmatprep.subr.bf16.mxu0 %v1312
    %3093 = vmatpush1.bf16.msra.mxu0 %v1311
    %3094 = vmatprep.subr.bf16.mxu0 %v1320
    %3095 = vmatpush1.bf16.msra.mxu0 %v1319
    %3096 = vmatprep.subr.bf16.mxu0 %v1328
    %3097 = vmatpush1.bf16.msra.mxu0 %v1327
    %3098 = vmatprep.subr.bf16.mxu0 %v1336
    %3099 = vmatpush1.bf16.msra.mxu0 %v1335
    %3100 = vmatprep.subr.bf16.mxu0 %v1344
    %3101 = vmatpush1.bf16.msra.mxu0 %v1343
    %3102 = vmatprep.subr.bf16.mxu0 %v1352
    %3103 = vmatpush1.bf16.msra.mxu0 %v1351
    %3104 = vmatprep.subr.bf16.mxu0 %v1360
    %3105 = vmatpush1.bf16.msra.mxu0 %v1359
    %3106 = vmatprep.subr.bf16.mxu0 %v1368
    %3107 = vmatpush1.bf16.msra.mxu0 %v1367
    %3108 = vmatprep.subr.bf16.mxu0 %v1376
    %3109 = vmatpush1.bf16.msra.mxu0 %v1375
    %3110 = vmatprep.subr.bf16.mxu0 %v1384
    %3111 = vmatpush1.bf16.msra.mxu0 %v1383
    %3112 = vmatprep.subr.bf16.mxu0 %v1392
    %3113 = vmatpush1.bf16.msra.mxu0 %v1391
    %3114 = vmatprep.subr.bf16.mxu0 %v1400
    %3115 = vmatpush1.bf16.msra.mxu0 %v1399
    %3116 = vmatprep.subr.bf16.mxu0 %v1408
    %3117 = vmatpush1.bf16.msra.mxu0 %v1407
    %3118 = vmatprep.subr.bf16.mxu0 %v1416
    %3119 = vmatpush1.bf16.msra.mxu0 %v1415
    %3120 = vmatprep.subr.bf16.mxu0 %v1424
    %3121 = vmatpush1.bf16.msra.mxu0 %v1423
    %3122 = vmatprep.subr.bf16.mxu0 %v1432
    %3123 = vmatpush1.bf16.msra.mxu0 %v1431
    %3124 = vmatprep.mubr.bf16.mxu0 %v3009
    %3125 = vmatmul.mubr.bf16.gmra.mrb[0].mxu0 %v3008
    %v3126 = vpop.f32.mrb[0].mxu0
    %v3127 = vadd.f32 0.0, %v3126
    %v3128 = vpop.f32.mrb[0].mxu0
    %v3129 = vadd.f32 0.0, %v3128
    %v3130 = vpop.f32.mrb[0].mxu0
    %v3131 = vpop.f32.mrb[0].mxu0
    %3132 = vdwg.mxu0
    %3133 = vmatprep.subr.bf16.mxu0 %v1314
    %3134 = vmatpush1.bf16.msra.mxu0 %v1313
    %3135 = vmatprep.subr.bf16.mxu0 %v1322
    %3136 = vmatpush1.bf16.msra.mxu0 %v1321
    %3137 = vmatprep.subr.bf16.mxu0 %v1330
    %3138 = vmatpush1.bf16.msra.mxu0 %v1329
    %3139 = vmatprep.subr.bf16.mxu0 %v1338
    %3140 = vmatpush1.bf16.msra.mxu0 %v1337
    %3141 = vmatprep.subr.bf16.mxu0 %v1346
    %3142 = vmatpush1.bf16.msra.mxu0 %v1345
    %3143 = vmatprep.subr.bf16.mxu0 %v1354
    %3144 = vmatpush1.bf16.msra.mxu0 %v1353
    %3145 = vmatprep.subr.bf16.mxu0 %v1362
    %3146 = vmatpush1.bf16.msra.mxu0 %v1361
    %3147 = vmatprep.subr.bf16.mxu0 %v1370
    %3148 = vmatpush1.bf16.msra.mxu0 %v1369
    %3149 = vmatprep.subr.bf16.mxu0 %v1378
    %3150 = vmatpush1.bf16.msra.mxu0 %v1377
    %3151 = vmatprep.subr.bf16.mxu0 %v1386
    %3152 = vmatpush1.bf16.msra.mxu0 %v1385
    %3153 = vmatprep.subr.bf16.mxu0 %v1394
    %3154 = vmatpush1.bf16.msra.mxu0 %v1393
    %3155 = vmatprep.subr.bf16.mxu0 %v1402
    %3156 = vmatpush1.bf16.msra.mxu0 %v1401
    %3157 = vmatprep.subr.bf16.mxu0 %v1410
    %3158 = vmatpush1.bf16.msra.mxu0 %v1409
    %3159 = vmatprep.subr.bf16.mxu0 %v1418
    %3160 = vmatpush1.bf16.msra.mxu0 %v1417
    %3161 = vmatprep.subr.bf16.mxu0 %v1426
    %3162 = vmatpush1.bf16.msra.mxu0 %v1425
    %3163 = vmatprep.subr.bf16.mxu0 %v1434
    %3164 = vmatpush1.bf16.msra.mxu0 %v1433
    %3165 = vmatprep.mubr.bf16.mxu0 %v3009
    %3166 = vmatmul.mubr.bf16.gmra.mrb[0].mxu0 %v3008
    %v3167 = vpop.f32.mrb[0].mxu0
    %v3168 = vadd.f32 0.0, %v3167
    %v3169 = vpop.f32.mrb[0].mxu0
    %v3170 = vadd.f32 0.0, %v3169
    %v3171 = vpop.f32.mrb[0].mxu0
    %v3172 = vpop.f32.mrb[0].mxu0
    %3173 = vdwg.mxu0
    %v3178 = vrot.slane %v3045, 4
    %v3179 = vrot.slane %v3047, 4
    %v3180 = vrot.slane %v3086, 4
    %v3181 = vrot.slane %v3088, 4
    %v3186 = vadd.f32 %v662, %v3178
    %v3187 = vadd.f32 %v664, %v3179
    %v3188 = vadd.f32 %v705, %v3180
    %v3189 = vadd.f32 %v707, %v3181
    %v3194 = vrot.slane %v3127, 6
    %v3195 = vrot.slane %v3129, 6
    %v3196 = vrot.slane %v3168, 6
    %v3197 = vrot.slane %v3170, 6
    %v3202 = vadd.f32 %v744, %v3194
    %v3203 = vadd.f32 %v746, %v3195
    %v3204 = vadd.f32 %v787, %v3196
    %v3205 = vadd.f32 %v789, %v3197
    %v3210 = vrot.slane %v3186, 4
    %v3211 = vrot.slane %v3187, 4
    %v3212 = vrot.slane %v3188, 4
    %v3213 = vrot.slane %v3189, 4
    %v3218 = vsel %vm1759, %v3210, %v3202
    %v3219 = vsel %vm1759, %v3211, %v3203
    %v3220 = vsel %vm1759, %v3212, %v3204
    %v3221 = vsel %vm1759, %v3213, %v3205
    %v3222 = vxor.u32 %v3218, 2147483648
    %v3223 = vmul.f32 %v3222, 1.442695
    %v3224 = vpow.pop %v3223
    %v3225 = vadd.f32 %v3224, 1.0
    %v3226 = vrcp.pop %v3225
    %v3227 = vmul.f32 1.0, %v3226
    %v3228 = vxor.u32 %v3219, 2147483648
    %v3229 = vmul.f32 %v3228, 1.442695
    %v3230 = vpow.pop %v3229
    %v3231 = vadd.f32 %v3230, 1.0
    %v3232 = vrcp.pop %v3231
    %v3233 = vmul.f32 1.0, %v3232
    %v3234 = vtanh.pop %v3220
    %v3235 = vxor.u32 %v3221, 2147483648
    %v3236 = vmul.f32 %v3235, 1.442695
    %v3237 = vpow.pop %v3236
    %v3238 = vadd.f32 %v3237, 1.0
    %v3239 = vrcp.pop %v3238
    %v3240 = vmul.f32 1.0, %v3239
    %v3241 = vmul.f32 %v3233, %v3002
    %v3242 = vmul.f32 %v3227, %v3234
    %v3243 = vadd.f32 %v3241, %v3242
    %v3244 = vtanh.pop %v3243
    %v3245 = vmul.f32 %v3240, %v3244
    %v3247 = vrot.slane %v3245, 2
    %v3249 = vpack.c.bf16 %v3245, %v3245
    %v3250 = vpack.c.bf16 %v3247, %v3247
    %3251 = vmatprep.subr.bf16.mxu0 %v1308
    %3252 = vmatpush1.bf16.msra.mxu0 %v1307
    %3253 = vmatprep.subr.bf16.mxu0 %v1316
    %3254 = vmatpush1.bf16.msra.mxu0 %v1315
    %3255 = vmatprep.subr.bf16.mxu0 %v1324
    %3256 = vmatpush1.bf16.msra.mxu0 %v1323
    %3257 = vmatprep.subr.bf16.mxu0 %v1332
    %3258 = vmatpush1.bf16.msra.mxu0 %v1331
    %3259 = vmatprep.subr.bf16.mxu0 %v1340
    %3260 = vmatpush1.bf16.msra.mxu0 %v1339
    %3261 = vmatprep.subr.bf16.mxu0 %v1348
    %3262 = vmatpush1.bf16.msra.mxu0 %v1347
    %3263 = vmatprep.subr.bf16.mxu0 %v1356
    %3264 = vmatpush1.bf16.msra.mxu0 %v1355
    %3265 = vmatprep.subr.bf16.mxu0 %v1364
    %3266 = vmatpush1.bf16.msra.mxu0 %v1363
    %3267 = vmatprep.subr.bf16.mxu0 %v1372
    %3268 = vmatpush1.bf16.msra.mxu0 %v1371
    %3269 = vmatprep.subr.bf16.mxu0 %v1380
    %3270 = vmatpush1.bf16.msra.mxu0 %v1379
    %3271 = vmatprep.subr.bf16.mxu0 %v1388
    %3272 = vmatpush1.bf16.msra.mxu0 %v1387
    %3273 = vmatprep.subr.bf16.mxu0 %v1396
    %3274 = vmatpush1.bf16.msra.mxu0 %v1395
    %3275 = vmatprep.subr.bf16.mxu0 %v1404
    %3276 = vmatpush1.bf16.msra.mxu0 %v1403
    %3277 = vmatprep.subr.bf16.mxu0 %v1412
    %3278 = vmatpush1.bf16.msra.mxu0 %v1411
    %3279 = vmatprep.subr.bf16.mxu0 %v1420
    %3280 = vmatpush1.bf16.msra.mxu0 %v1419
    %3281 = vmatprep.subr.bf16.mxu0 %v1428
    %3282 = vmatpush1.bf16.msra.mxu0 %v1427
    %3283 = vmatprep.mubr.bf16.mxu0 %v3250
    %3284 = vmatmul.mubr.bf16.gmra.mrb[0].mxu0 %v3249
    %v3285 = vpop.f32.mrb[0].mxu0
    %v3286 = vadd.f32 0.0, %v3285
    %v3287 = vpop.f32.mrb[0].mxu0
    %v3288 = vadd.f32 0.0, %v3287
    %v3289 = vpop.f32.mrb[0].mxu0
    %v3290 = vpop.f32.mrb[0].mxu0
    %3291 = vdwg.mxu0
    %3292 = vmatprep.subr.bf16.mxu0 %v1310
    %3293 = vmatpush1.bf16.msra.mxu0 %v1309
    %3294 = vmatprep.subr.bf16.mxu0 %v1318
    %3295 = vmatpush1.bf16.msra.mxu0 %v1317
    %3296 = vmatprep.subr.bf16.mxu0 %v1326
    %3297 = vmatpush1.bf16.msra.mxu0 %v1325
    %3298 = vmatprep.subr.bf16.mxu0 %v1334
    %3299 = vmatpush1.bf16.msra.mxu0 %v1333
    %3300 = vmatprep.subr.bf16.mxu0 %v1342
    %3301 = vmatpush1.bf16.msra.mxu0 %v1341
    %3302 = vmatprep.subr.bf16.mxu0 %v1350
    %3303 = vmatpush1.bf16.msra.mxu0 %v1349
    %3304 = vmatprep.subr.bf16.mxu0 %v1358
    %3305 = vmatpush1.bf16.msra.mxu0 %v1357
    %3306 = vmatprep.subr.bf16.mxu0 %v1366
    %3307 = vmatpush1.bf16.msra.mxu0 %v1365
    %3308 = vmatprep.subr.bf16.mxu0 %v1374
    %3309 = vmatpush1.bf16.msra.mxu0 %v1373
    %3310 = vmatprep.subr.bf16.mxu0 %v1382
    %3311 = vmatpush1.bf16.msra.mxu0 %v1381
    %3312 = vmatprep.subr.bf16.mxu0 %v1390
    %3313 = vmatpush1.bf16.msra.mxu0 %v1389
    %3314 = vmatprep.subr.bf16.mxu0 %v1398
    %3315 = vmatpush1.bf16.msra.mxu0 %v1397
    %3316 = vmatprep.subr.bf16.mxu0 %v1406
    %3317 = vmatpush1.bf16.msra.mxu0 %v1405
    %3318 = vmatprep.subr.bf16.mxu0 %v1414
    %3319 = vmatpush1.bf16.msra.mxu0 %v1413
    %3320 = vmatprep.subr.bf16.mxu0 %v1422
    %3321 = vmatpush1.bf16.msra.mxu0 %v1421
    %3322 = vmatprep.subr.bf16.mxu0 %v1430
    %3323 = vmatpush1.bf16.msra.mxu0 %v1429
    %3324 = vmatprep.mubr.bf16.mxu0 %v3250
    %3325 = vmatmul.mubr.bf16.gmra.mrb[0].mxu0 %v3249
    %v3326 = vpop.f32.mrb[0].mxu0
    %v3327 = vadd.f32 0.0, %v3326
    %v3328 = vpop.f32.mrb[0].mxu0
    %v3329 = vadd.f32 0.0, %v3328
    %v3330 = vpop.f32.mrb[0].mxu0
    %v3331 = vpop.f32.mrb[0].mxu0
    %3332 = vdwg.mxu0
    %3333 = vmatprep.subr.bf16.mxu0 %v1312
    %3334 = vmatpush1.bf16.msra.mxu0 %v1311
    %3335 = vmatprep.subr.bf16.mxu0 %v1320
    %3336 = vmatpush1.bf16.msra.mxu0 %v1319
    %3337 = vmatprep.subr.bf16.mxu0 %v1328
    %3338 = vmatpush1.bf16.msra.mxu0 %v1327
    %3339 = vmatprep.subr.bf16.mxu0 %v1336
    %3340 = vmatpush1.bf16.msra.mxu0 %v1335
    %3341 = vmatprep.subr.bf16.mxu0 %v1344
    %3342 = vmatpush1.bf16.msra.mxu0 %v1343
    %3343 = vmatprep.subr.bf16.mxu0 %v1352
    %3344 = vmatpush1.bf16.msra.mxu0 %v1351
    %3345 = vmatprep.subr.bf16.mxu0 %v1360
    %3346 = vmatpush1.bf16.msra.mxu0 %v1359
    %3347 = vmatprep.subr.bf16.mxu0 %v1368
    %3348 = vmatpush1.bf16.msra.mxu0 %v1367
    %3349 = vmatprep.subr.bf16.mxu0 %v1376
    %3350 = vmatpush1.bf16.msra.mxu0 %v1375
    %3351 = vmatprep.subr.bf16.mxu0 %v1384
    %3352 = vmatpush1.bf16.msra.mxu0 %v1383
    %3353 = vmatprep.subr.bf16.mxu0 %v1392
    %3354 = vmatpush1.bf16.msra.mxu0 %v1391
    %3355 = vmatprep.subr.bf16.mxu0 %v1400
    %3356 = vmatpush1.bf16.msra.mxu0 %v1399
    %3357 = vmatprep.subr.bf16.mxu0 %v1408
    %3358 = vmatpush1.bf16.msra.mxu0 %v1407
    %3359 = vmatprep.subr.bf16.mxu0 %v1416
    %3360 = vmatpush1.bf16.msra.mxu0 %v1415
    %3361 = vmatprep.subr.bf16.mxu0 %v1424
    %3362 = vmatpush1.bf16.msra.mxu0 %v1423
    %3363 = vmatprep.subr.bf16.mxu0 %v1432
    %3364 = vmatpush1.bf16.msra.mxu0 %v1431
    %3365 = vmatprep.mubr.bf16.mxu0 %v3250
    %3366 = vmatmul.mubr.bf16.gmra.mrb[0].mxu0 %v3249
    %v3367 = vpop.f32.mrb[0].mxu0
    %v3368 = vadd.f32 0.0, %v3367
    %v3369 = vpop.f32.mrb[0].mxu0
    %v3370 = vadd.f32 0.0, %v3369
    %v3371 = vpop.f32.mrb[0].mxu0
    %v3372 = vpop.f32.mrb[0].mxu0
    %3373 = vdwg.mxu0
    %3374 = vmatprep.subr.bf16.mxu0 %v1314
    %3375 = vmatpush1.bf16.msra.mxu0 %v1313
    %3376 = vmatprep.subr.bf16.mxu0 %v1322
    %3377 = vmatpush1.bf16.msra.mxu0 %v1321
    %3378 = vmatprep.subr.bf16.mxu0 %v1330
    %3379 = vmatpush1.bf16.msra.mxu0 %v1329
    %3380 = vmatprep.subr.bf16.mxu0 %v1338
    %3381 = vmatpush1.bf16.msra.mxu0 %v1337
    %3382 = vmatprep.subr.bf16.mxu0 %v1346
    %3383 = vmatpush1.bf16.msra.mxu0 %v1345
    %3384 = vmatprep.subr.bf16.mxu0 %v1354
    %3385 = vmatpush1.bf16.msra.mxu0 %v1353
    %3386 = vmatprep.subr.bf16.mxu0 %v1362
    %3387 = vmatpush1.bf16.msra.mxu0 %v1361
    %3388 = vmatprep.subr.bf16.mxu0 %v1370
    %3389 = vmatpush1.bf16.msra.mxu0 %v1369
    %3390 = vmatprep.subr.bf16.mxu0 %v1378
    %3391 = vmatpush1.bf16.msra.mxu0 %v1377
    %3392 = vmatprep.subr.bf16.mxu0 %v1386
    %3393 = vmatpush1.bf16.msra.mxu0 %v1385
    %3394 = vmatprep.subr.bf16.mxu0 %v1394
    %3395 = vmatpush1.bf16.msra.mxu0 %v1393
    %3396 = vmatprep.subr.bf16.mxu0 %v1402
    %3397 = vmatpush1.bf16.msra.mxu0 %v1401
    %3398 = vmatprep.subr.bf16.mxu0 %v1410
    %3399 = vmatpush1.bf16.msra.mxu0 %v1409
    %3400 = vmatprep.subr.bf16.mxu0 %v1418
    %3401 = vmatpush1.bf16.msra.mxu0 %v1417
    %3402 = vmatprep.subr.bf16.mxu0 %v1426
    %3403 = vmatpush1.bf16.msra.mxu0 %v1425
    %3404 = vmatprep.subr.bf16.mxu0 %v1434
    %3405 = vmatpush1.bf16.msra.mxu0 %v1433
    %3406 = vmatprep.mubr.bf16.mxu0 %v3250
    %3407 = vmatmul.mubr.bf16.gmra.mrb[0].mxu0 %v3249
    %v3408 = vpop.f32.mrb[0].mxu0
    %v3409 = vadd.f32 0.0, %v3408
    %v3410 = vpop.f32.mrb[0].mxu0
    %v3411 = vadd.f32 0.0, %v3410
    %v3412 = vpop.f32.mrb[0].mxu0
    %v3413 = vpop.f32.mrb[0].mxu0
    %3414 = vdwg.mxu0
    %v3419 = vrot.slane %v3286, 2
    %v3420 = vrot.slane %v3288, 2
    %v3421 = vrot.slane %v3327, 2
    %v3422 = vrot.slane %v3329, 2
    %v3427 = vadd.f32 %v662, %v3419
    %v3428 = vadd.f32 %v664, %v3420
    %v3429 = vadd.f32 %v705, %v3421
    %v3430 = vadd.f32 %v707, %v3422
    %v3431 = vadd.f32 %v744, %v3368
    %v3432 = vadd.f32 %v746, %v3370
    %v3433 = vadd.f32 %v787, %v3409
    %v3434 = vadd.f32 %v789, %v3411
    %v3439 = vrot.slane %v3427, 6
    %v3440 = vrot.slane %v3428, 6
    %v3441 = vrot.slane %v3429, 6
    %v3442 = vrot.slane %v3430, 6
    %v3451 = vrot.slane %v3431, 6
    %v3452 = vrot.slane %v3432, 6
    %v3453 = vrot.slane %v3433, 6
    %v3454 = vrot.slane %v3434, 6
    %v3459 = vsel %vm1759, %v3439, %v3451
    %v3460 = vsel %vm1759, %v3440, %v3452
    %v3461 = vsel %vm1759, %v3441, %v3453
    %v3462 = vsel %vm1759, %v3442, %v3454
    %v3463 = vxor.u32 %v3459, 2147483648
    %v3464 = vmul.f32 %v3463, 1.442695
    %v3465 = vpow.pop %v3464
    %v3466 = vadd.f32 %v3465, 1.0
    %v3467 = vrcp.pop %v3466
    %v3468 = vmul.f32 1.0, %v3467
    %v3469 = vxor.u32 %v3460, 2147483648
    %v3470 = vmul.f32 %v3469, 1.442695
    %v3471 = vpow.pop %v3470
    %v3472 = vadd.f32 %v3471, 1.0
    %v3473 = vrcp.pop %v3472
    %v3474 = vmul.f32 1.0, %v3473
    %v3475 = vtanh.pop %v3461
    %v3476 = vxor.u32 %v3462, 2147483648
    %v3477 = vmul.f32 %v3476, 1.442695
    %v3478 = vpow.pop %v3477
    %v3479 = vadd.f32 %v3478, 1.0
    %v3480 = vrcp.pop %v3479
    %v3481 = vmul.f32 1.0, %v3480
    %v3482 = vmul.f32 %v3474, %v3243
    %v3483 = vmul.f32 %v3468, %v3475
    %v3484 = vadd.f32 %v3482, %v3483
    %v3485 = vtanh.pop %v3484
    %v3486 = vmul.f32 %v3481, %v3485
    %v3488 = vrot.slane %v3486, 2
    %v3490 = vrot.slane %v2040, 6
    %v3491 = vrot.slane %v3247, 6
    %v3494 = vrot.slane %v2281, 4
    %v3495 = vrot.slane %v3006, 4
    %v3498 = vrot.slane %v2753, 2
    %v3500 = vrot.slane %v3004, 6
    %v3501 = vrot.slane %v2283, 6
    %v3504 = vrot.slane %v3245, 4
    %v3505 = vrot.slane %v2042, 4
    %v3508 = vrot.slane %v1789, 2
    %v3510 = vsel %vm1759, %v1787, %v3490
    %v3511 = vsel %vm1759, %v3488, %v3491
    %vm3512 = vcmask 1043456
    %v3513 = vsel %vm3512, %v3510, %v3494
    %v3514 = vsel %vm3512, %v3511, %v3495
    %vm3515 = vcmask 1045504
    %v3516 = vsel %vm3515, %v3513, %v2524
    %v3517 = vsel %vm3515, %v3514, %v3498
    %v3518 = vsel %vm1759, %v2751, %v3500
    %v3519 = vsel %vm1759, %v2524, %v3501
    %v3520 = vsel %vm3512, %v3518, %v3504
    %v3521 = vsel %vm3512, %v3519, %v3505
    %v3522 = vsel %vm3515, %v3520, %v3488
    %v3523 = vsel %vm3515, %v3521, %v3508
    %v3524 = vpack.c.bf16 %v3522, %v3516
    %v3525 = vpack.c.bf16 %v3523, %v3517
    %v3526 = vld [vmem:[#allocation7] sm:$0xf]
    %v3527 = vld [vmem:[#allocation7 + $0x4] sm:$0xf]
    %v3528 = vld [vmem:[#allocation7 + $0x8] sm:$0xf]
    %v3529 = vld [vmem:[#allocation7 + $0xc] sm:$0xf]
    %v3530 = vld [vmem:[#allocation7 + $0x10] sm:$0xf]
    %v3531 = vld [vmem:[#allocation7 + $0x14] sm:$0xf]
    %v3532 = vld [vmem:[#allocation7 + $0x18] sm:$0xf]
    %v3533 = vld [vmem:[#allocation7 + $0x1c] sm:$0xf]
    %v3534 = vld [vmem:[#allocation7 + $0x20] sm:$0xf]
    %v3535 = vld [vmem:[#allocation7 + $0x24] sm:$0xf]
    %v3536 = vld [vmem:[#allocation7 + $0x28] sm:$0xf]
    %v3537 = vld [vmem:[#allocation7 + $0x2c] sm:$0xf]
    %v3538 = vld [vmem:[#allocation7 + $0x30] sm:$0xf]
    %v3539 = vld [vmem:[#allocation7 + $0x34] sm:$0xf]
    %v3540 = vld [vmem:[#allocation7 + $0x38] sm:$0xf]
    %v3541 = vld [vmem:[#allocation7 + $0x3c] sm:$0xf]
    %v3542 = vld [vmem:[#allocation7 + $0x40] sm:$0xf]
    %v3543 = vld [vmem:[#allocation7 + $0x44] sm:$0xf]
    %v3544 = vld [vmem:[#allocation7 + $0x48] sm:$0xf]
    %v3545 = vld [vmem:[#allocation7 + $0x4c] sm:$0xf]
    %v3546 = vld [vmem:[#allocation7 + $0x50] sm:$0xf]
    %v3547 = vld [vmem:[#allocation7 + $0x54] sm:$0xf]
    %v3548 = vld [vmem:[#allocation7 + $0x58] sm:$0xf]
    %v3549 = vld [vmem:[#allocation7 + $0x5c] sm:$0xf]
    %v3550 = vld [vmem:[#allocation7 + $0x60] sm:$0xf]
    %v3551 = vld [vmem:[#allocation7 + $0x64] sm:$0xf]
    %v3552 = vld [vmem:[#allocation7 + $0x68] sm:$0xf]
    %v3553 = vld [vmem:[#allocation7 + $0x6c] sm:$0xf]
    %v3554 = vld [vmem:[#allocation7 + $0x70] sm:$0xf]
    %v3555 = vld [vmem:[#allocation7 + $0x74] sm:$0xf]
    %v3556 = vld [vmem:[#allocation7 + $0x78] sm:$0xf]
    %v3557 = vld [vmem:[#allocation7 + $0x7c] sm:$0xf]
    %v3558 = vld [vmem:[%s7] sm:$0x1]
    %v3560 = vlaneseq
    %v3561 = vshrl.u32 %v3560, 7
    %v3562 = vsub.s32 0, %v3561
    %v3563 = vrot.slane %v3558, %v3562
    %v3597 = vunpack.c.l.b16 %v3526
    %v3598 = vunpack.c.l.b16 %v3527
    %v3599 = vunpack.c.l.b16 %v3528
    %v3600 = vunpack.c.l.b16 %v3529
    %v3601 = vunpack.c.l.b16 %v3530
    %v3602 = vunpack.c.l.b16 %v3531
    %v3603 = vunpack.c.l.b16 %v3532
    %v3604 = vunpack.c.l.b16 %v3533
    %v3605 = vunpack.c.l.b16 %v3534
    %v3606 = vunpack.c.l.b16 %v3535
    %v3607 = vunpack.c.l.b16 %v3536
    %v3608 = vunpack.c.l.b16 %v3537
    %v3609 = vunpack.c.l.b16 %v3538
    %v3610 = vunpack.c.l.b16 %v3539
    %v3611 = vunpack.c.l.b16 %v3540
    %v3612 = vunpack.c.l.b16 %v3541
    %v3613 = vunpack.c.l.b16 %v3542
    %v3614 = vunpack.c.l.b16 %v3543
    %v3615 = vunpack.c.l.b16 %v3544
    %v3616 = vunpack.c.l.b16 %v3545
    %v3617 = vunpack.c.l.b16 %v3546
    %v3618 = vunpack.c.l.b16 %v3547
    %v3619 = vunpack.c.l.b16 %v3548
    %v3620 = vunpack.c.l.b16 %v3549
    %v3621 = vunpack.c.l.b16 %v3550
    %v3622 = vunpack.c.l.b16 %v3551
    %v3623 = vunpack.c.l.b16 %v3552
    %v3624 = vunpack.c.l.b16 %v3553
    %v3625 = vunpack.c.l.b16 %v3554
    %v3626 = vunpack.c.l.b16 %v3555
    %v3627 = vunpack.c.l.b16 %v3556
    %v3628 = vunpack.c.l.b16 %v3557
    %v3629 = vpack.c.b16 %v3598, %v3597
    %v3630 = vpack.c.b16 %v3600, %v3599
    %v3631 = vpack.c.b16 %v3602, %v3601
    %v3632 = vpack.c.b16 %v3604, %v3603
    %v3633 = vpack.c.b16 %v3606, %v3605
    %v3634 = vpack.c.b16 %v3608, %v3607
    %v3635 = vpack.c.b16 %v3610, %v3609
    %v3636 = vpack.c.b16 %v3612, %v3611
    %v3637 = vpack.c.b16 %v3614, %v3613
    %v3638 = vpack.c.b16 %v3616, %v3615
    %v3639 = vpack.c.b16 %v3618, %v3617
    %v3640 = vpack.c.b16 %v3620, %v3619
    %v3641 = vpack.c.b16 %v3622, %v3621
    %v3642 = vpack.c.b16 %v3624, %v3623
    %v3643 = vpack.c.b16 %v3626, %v3625
    %v3644 = vpack.c.b16 %v3628, %v3627
    %3661 = vmatprep.subr.bf16.mxu0 0
    %3662 = vmatpush1.bf16.msra.mxu0 %v3629
    %3663 = vmatprep.subr.bf16.mxu0 0
    %3664 = vmatpush1.bf16.msra.mxu0 %v3630
    %3665 = vmatprep.subr.bf16.mxu0 0
    %3666 = vmatpush1.bf16.msra.mxu0 %v3631
    %3667 = vmatprep.subr.bf16.mxu0 0
    %3668 = vmatpush1.bf16.msra.mxu0 %v3632
    %3669 = vmatprep.subr.bf16.mxu0 0
    %3670 = vmatpush1.bf16.msra.mxu0 %v3633
    %3671 = vmatprep.subr.bf16.mxu0 0
    %3672 = vmatpush1.bf16.msra.mxu0 %v3634
    %3673 = vmatprep.subr.bf16.mxu0 0
    %3674 = vmatpush1.bf16.msra.mxu0 %v3635
    %3675 = vmatprep.subr.bf16.mxu0 0
    %3676 = vmatpush1.bf16.msra.mxu0 %v3636
    %3677 = vmatprep.subr.bf16.mxu0 0
    %3678 = vmatpush1.bf16.msra.mxu0 %v3637
    %3679 = vmatprep.subr.bf16.mxu0 0
    %3680 = vmatpush1.bf16.msra.mxu0 %v3638
    %3681 = vmatprep.subr.bf16.mxu0 0
    %3682 = vmatpush1.bf16.msra.mxu0 %v3639
    %3683 = vmatprep.subr.bf16.mxu0 0
    %3684 = vmatpush1.bf16.msra.mxu0 %v3640
    %3685 = vmatprep.subr.bf16.mxu0 0
    %3686 = vmatpush1.bf16.msra.mxu0 %v3641
    %3687 = vmatprep.subr.bf16.mxu0 0
    %3688 = vmatpush1.bf16.msra.mxu0 %v3642
    %3689 = vmatprep.subr.bf16.mxu0 0
    %3690 = vmatpush1.bf16.msra.mxu0 %v3643
    %3691 = vmatprep.subr.bf16.mxu0 0
    %3692 = vmatpush1.bf16.msra.mxu0 %v3644
    %3693 = vmatprep.mubr.bf16.mxu0 %v3525
    %3694 = vmatmul.mubr.bf16.gmra.mrb[0].mxu0 %v3524
    %v3695 = vpop.f32.mrb[0].mxu0
    %v3696 = vadd.f32 %v3563, %v3695
    %v3697 = vpop.f32.mrb[0].mxu0
    %v3698 = vpop.f32.mrb[0].mxu0
    %v3699 = vadd.f32 %v3563, %v3698
    %v3700 = vpop.f32.mrb[0].mxu0
    %3701 = vdwg.mxu0
    %3702 = vst [vmem:[%s8] sm:$0xff] %v3696
    %3703 = vst [vmem:[%s8 + $0x8] sm:$0xff] %v3699
    %vm3704 = vcmp.lt.s32.totalorder %v77, 5
    %v3705 = vsel %vm3704, %v3696, -1e+30
    %v3706 = vsel %vm3704, %v3699, -1e+30
    %3707 = vmax.xlane.f32.xlu0 %v3705
    %v3708 = vpop.xlane.xlu0 %3707
    %3709 = vmax.xlane.f32.xlu0 %v3706
    %v3710 = vpop.xlane.xlu0 %3709
    %v3711 = vsub.f32 %v3705, %v3708
    %v3712 = vsub.f32 %v3706, %v3710
    %v3713 = vmul.f32 %v3711, 1.442695
    %v3714 = vpow.pop %v3713
    %v3715 = vmul.f32 %v3712, 1.442695
    %v3716 = vpow.pop %v3715
    %3717 = vadd.xlane.f32.xlu0 %v3714
    %v3718 = vpop.xlane.xlu0 %3717
    %3719 = vadd.xlane.f32.xlu0 %v3716
    %v3720 = vpop.xlane.xlu0 %3719
    %v3721 = vlog2.pop %v3718
    %v3722 = vmul.f32 %v3721, 0.6931472
    %v3723 = vlog2.pop %v3720
    %v3724 = vmul.f32 %v3723, 0.6931472
    %v3725 = vadd.f32 %v3708, %v3722
    %v3726 = vadd.f32 %v3710, %v3724
    %v3727 = vld [vmem:[%s1] sm:$0xff]
    %v3728 = vld [vmem:[%s1 + $0x8] sm:$0xff]
    %3729 = vset.pattern.permute.xlu0 0
    %3730 = vperm.xlu0 %3729, %v3727
    %v3731 = vpop.permute.xlu0 %3730
    %3732 = vset.pattern.permute.xlu0 0
    %3733 = vperm.xlu0 %3732, %v3728
    %v3734 = vpop.permute.xlu0 %3733
    %vm3735 = vcmp.eq.s32.totalorder %v77, %v3731
    %vm3736 = vcmp.eq.s32.totalorder %v77, %v3734
    %v3737 = vsel %vm3735, 1, 0
    %v3738 = vsel %vm3736, 1, 0
    %v3739 = vcvt.s32.f32 %v3737
    %v3740 = vcvt.s32.f32 %v3738
    %v3741 = vmul.f32 %v3739, %v3696
    %v3742 = vmul.f32 %v3740, %v3699
    %3743 = vadd.xlane.f32.xlu0 %v3741
    %v3744 = vpop.xlane.xlu0 %3743
    %3745 = vadd.xlane.f32.xlu0 %v3742
    %v3746 = vpop.xlane.xlu0 %3745
    %vm3747 = vcmp.ne.s32.totalorder %v3727, 4294967196
    %vm3748 = vcmp.ne.s32.totalorder %v3728, 4294967196
    %v3749 = vsel %vm3747, 1, 0
    %v3750 = vsel %vm3748, 1, 0
    %v3751 = vcvt.s32.f32 %v3749
    %v3752 = vcvt.s32.f32 %v3750
    %v3753 = vsub.f32 %v3725, %v3744
    %v3754 = vsub.f32 %v3726, %v3746
    %v3755 = vmul.f32 %v3751, %v3753
    %v3756 = vmul.f32 %v3752, %v3754
    %vm3757 = vcmask 7168
    %v3758 = vsel %vm3757, %v3755, 0.0
    %v3759 = vsel %vm3757, %v3756, 0.0
    %v3760 = vadd.f32 %v3758, %v3759
    %3761 = vadd.xlane.f32.xlu0 %v3760
    %v3762 = vpop.xlane.xlu0 %3761
    %v3763 = vrot.slane %v3762, 4
    %v3764 = vadd.f32 %v3762, %v3763
    %v3765 = vrot.slane %v3764, 2
    %v3766 = vadd.f32 %v3764, %v3765
    %v3767 = vrot.slane %v3766, 1
    %v3768 = vadd.f32 %v3766, %v3767
    %s3769 = vtos %v3768
    %v3770 = vsel %vm3757, %v3751, 0.0
    %v3771 = vsel %vm3757, %v3752, 0.0
    %v3772 = vadd.f32 %v3770, %v3771
    %3773 = vadd.xlane.f32.xlu0 %v3772
    %v3774 = vpop.xlane.xlu0 %3773
    %v3775 = vrot.slane %v3774, 4
    %v3776 = vadd.f32 %v3774, %v3775
    %v3777 = vrot.slane %v3776, 2
    %v3778 = vadd.f32 %v3776, %v3777
    %v3779 = vrot.slane %v3778, 1
    %v3780 = vadd.f32 %v3778, %v3779
    %s3781 = vtos %v3780
    %v3782 = vstv %s3781
    %v3783 = vrcp.pop %v3782
    %s3784 = vtos %v3783
    %s3785 = smul.f32 %s3769, %s3784
    %v3786 = vstv %s3785
    %vm3787 = vcmask 0
    %3788 = vst.msk [vmem:[#allocation8] sm:$0x1] %vm3787, %v3786
    // Predicated region
    $region46: #{lstm_tagger_forward.1} parent=1 // pred_check
      _
    $region47: #{lstm_tagger_forward.1} parent=1 // pred_check_branch
      %3790 = sbr.rel (0) target = $region49
    $region48: #{lstm_tagger_forward.1} parent=1 // pred_region
      _
    $region49: #{lstm_tagger_forward.1} parent=1 // pred_fallthru
      _
    // Predicated region
    $region50: #{lstm_tagger_forward.1} parent=1 // pred_check
      _
    $region51: #{lstm_tagger_forward.1} parent=1 // pred_check_branch
      %3792 = sbr.rel (0) target = $region53
    $region52: #{lstm_tagger_forward.1} parent=1 // pred_region
      %s3794 = ssub.s32 16, 16
      %3795 = vsyncadd [#allocation4], %s3794
      %s3797 = sshll.u32 [#allocation8], 4
      %s3798 = int_to_ptr.vmem [resolvable:$true] %s3797
      %3800 = dma.vmem_to_hbm [thread:$0]  %s3798, 16, %s9, [#allocation4]
    $region53: #{lstm_tagger_forward.1} parent=1 // pred_fallthru
      _
    // Predicated region
    $region54: #{lstm_tagger_forward.1} parent=1 // pred_check
      _
    $region55: #{lstm_tagger_forward.1} parent=1 // pred_check_branch
      %3802 = sbr.rel (0) target = $region57
    $region56: #{lstm_tagger_forward.1} parent=1 // pred_region
      _
    $region57: #{lstm_tagger_forward.1} parent=1 // pred_fallthru
      _
    // Predicated region
    $region58: #{lstm_tagger_forward.1} parent=1 // pred_check
      _
    $region59: #{lstm_tagger_forward.1} parent=1 // pred_check_branch
      %3804 = sbr.rel (0) target = $region61
    $region60: #{lstm_tagger_forward.1} parent=1 // pred_region
      %3805 = dma.done [#allocation4], 16
    $region61: #{lstm_tagger_forward.1} parent=1 // pred_fallthru
      _
    %3806 = vsyncpa [#allocation3], 1
    %3807 = vsyncpa [#allocation6], 1
    %3808 = vsyncpa [#allocation4], 1

</llo_original>
